<compile_context>
chip_gen: v5e
topology: v5e:2x2
jax: 0.10.0
libtpu: 0.0.40
codegen_flags: <defaults>
</compile_context>

<pallas_src>
import functools

import jax
import jax.numpy as jnp
from jax.experimental import pallas as pl
from jax.experimental.pallas import tpu as pltpu

GATE_PAD = 128   # per-gate lane block; gates [i | f | o | g] each padded H -> 128
HID_PAD = 128    # padded hidden/cell width (and hidden-weight K dim)


def seq_model_kernel(
    x_ref,      # (T*B, D)          bf16  time-major flattened input
    win_ref,    # (D, 2*4*GP)       bf16  fused input weights [fwd i|f|o|g | bwd i|f|o|g]
    bin_ref,    # (1, 2*4*GP)       f32   fused biases (b_ih + b_hh), zero-padded
    whf_ref,    # (HP, 4*GP)        bf16  fwd hidden weights
    whb_ref,    # (HP, 4*GP)        bf16  bwd hidden weights
    w1f_ref,    # (HP, C)           bf16  fc1 weight, forward-half rows (zero-padded)
    w1b_ref,    # (HP, C)           bf16  fc1 weight, backward-half rows (zero-padded)
    b1_ref,     # (1, C)            f32
    w2_ref,     # (C, C)            bf16  fc2 weight
    b2_ref,     # (1, C)            f32
    out_ref,    # (T, B, C)         f32   softmax over T (axis 0)
    xp_ref,     # scratch (T*B, 2*4*GP) f32  hoisted input projections (fwd | bwd)
    hf_ref,     # scratch (T*B, HP) f32  fwd hidden sequence (padded lanes = 0)
    hb_ref,     # scratch (T*B, HP) f32  bwd hidden sequence
):
    T, B, C = out_ref.shape
    HP, G4 = whf_ref.shape          # (128, 512)
    GP = G4 // 4                    # 128
    f32 = jnp.float32
    bf16 = jnp.bfloat16

    # ---- hoisted input projection: ONE (T*B, D) @ (D, 2*4GP) matmul ----------
    xp_ref[...] = (jnp.dot(x_ref[...], win_ref[...], preferred_element_type=f32)
                   + bin_ref[...])

    wh_f = whf_ref[...]             # (HP, 4*GP) bf16
    wh_b = whb_ref[...]

    def cell(gates, c):
        # gates: (B, 4*GP) f32, 128-lane-aligned blocks [i | f | o | g].
        sig = jax.nn.sigmoid(gates[:, :3 * GP])          # one EUP slab: i, f, o
        i_g = sig[:, 0 * GP:1 * GP]
        f_g = sig[:, 1 * GP:2 * GP]
        o_g = sig[:, 2 * GP:3 * GP]
        g_g = jnp.tanh(gates[:, 3 * GP:4 * GP])          # one tanh
        c_new = f_g * c + i_g * g_g                      # padded lanes stay 0
        return o_g * jnp.tanh(c_new), c_new

    hf = jnp.zeros((B, HP), f32)
    cf = jnp.zeros((B, HP), f32)
    hb = jnp.zeros((B, HP), f32)
    cb = jnp.zeros((B, HP), f32)

    # ---- fused fwd/bwd recurrence, fully unrolled (T static & small) ---------
    for t in range(T):
        tb = T - 1 - t
        gf = xp_ref[t * B:(t + 1) * B, :G4] + jnp.dot(
            hf.astype(bf16), wh_f, preferred_element_type=f32)
        gb = xp_ref[tb * B:(tb + 1) * B, G4:] + jnp.dot(
            hb.astype(bf16), wh_b, preferred_element_type=f32)
        hf, cf = cell(gf, cf)
        hb, cb = cell(gb, cb)
        hf_ref[t * B:(t + 1) * B, :] = hf        # stored at original time index
        hb_ref[tb * B:(tb + 1) * B, :] = hb

    # ---- fc1 (Linear + ReLU) and fc2 (Linear), batched over the sequence -----
    z1 = (jnp.dot(hf_ref[...].astype(bf16), w1f_ref[...],
                  preferred_element_type=f32)
          + jnp.dot(hb_ref[...].astype(bf16), w1b_ref[...],
                    preferred_element_type=f32)
          + b1_ref[...])
    z1 = jnp.maximum(z1, 0.0)                                      # ReLU
    logits = (jnp.dot(z1.astype(bf16), w2_ref[...],
                      preferred_element_type=f32)
              + b2_ref[...]).reshape(T, B, C)

    # ---- Softmax over the sequence axis (nn.Softmax(dim=1) on (B, T, C)) -----
    m = jnp.max(logits, axis=0, keepdims=True)
    e = jnp.exp(logits - m)
    s = jnp.sum(e, axis=0, keepdims=True)
    out_ref[...] = e / s          # exact divide (off critical path): sums == 1


def seq_model_forward(x, params):
    """x: (B, T, D) float32. Returns (B, T, C) float32."""
    B, T, D = x.shape
    HP, G4 = params["whf"].shape
    C = params["w2"].shape[-1]

    bf16 = jnp.bfloat16
    # Time-major flatten done host-side (fuses into the XLA transpose; avoids
    # an in-kernel 3-D -> 2-D relayout copy).
    x2d = jnp.transpose(x, (1, 0, 2)).reshape(T * B, D).astype(bf16)
    # Fused input weights / biases: [forward 4*GP | backward 4*GP].
    win = jnp.concatenate([params["wif"], params["wib"]], axis=1).astype(bf16)
    b_in = jnp.concatenate([params["bf"], params["bb"]], axis=1)

    args = (
        x2d, win, b_in,
        params["whf"].astype(bf16), params["whb"].astype(bf16),
        params["w1f"].astype(bf16), params["w1b"].astype(bf16), params["b1"],
        params["w2"].astype(bf16), params["b2"],
    )

    vmem = pl.BlockSpec(memory_space=pltpu.MemorySpace.VMEM)
    out_tm = pl.pallas_call(
        seq_model_kernel,
        out_shape=jax.ShapeDtypeStruct((T, B, C), jnp.float32),
        in_specs=[vmem] * len(args),
        out_specs=vmem,
        scratch_shapes=[
            pltpu.VMEM((T * B, 2 * G4), jnp.float32),   # hoisted projections
            pltpu.VMEM((T * B, HP), jnp.float32),       # fwd hidden sequence
            pltpu.VMEM((T * B, HP), jnp.float32),       # bwd hidden sequence
        ],
    )(*args)
    return jnp.transpose(out_tm, (1, 0, 2))             # back to (B, T, C)


def init_params(key, input_size=50, hidden_size=50, num_class=32):
    """Deterministic synthetic params, PyTorch-style uniform(-1/sqrt(H), 1/sqrt(H)).

    LSTM weights are stored pre-fused and pre-padded for the kernel layout:
    columns are [i | f | o | g] (sigmoid gates contiguous; note PyTorch's
    native order is [i | f | g | o] — a real checkpoint would be re-ordered the
    same way), each gate zero-padded to a 128-lane block, input-dim first.
    Hidden weights / fc1 have their K dimension zero-padded to 128 rows.
    """
    D, H, C = input_size, hidden_size, num_class
    GP, HP = GATE_PAD, HID_PAD
    k = 1.0 / jnp.sqrt(jnp.float32(H))
    keys = jax.random.split(key, 13)

    def u(kk, shape):
        return jax.random.uniform(kk, shape, jnp.float32, -k, k)

    def pack_in(kk):                       # (D, 4*GP), gates [i|f|o|g]
        gk = jax.random.split(kk, 4)
        return jnp.concatenate(
            [jnp.pad(u(g, (D, H)), ((0, 0), (0, GP - H))) for g in gk], axis=1)

    def pack_hid(kk):                      # (HP, 4*GP), K padded H -> HP
        gk = jax.random.split(kk, 4)
        w = jnp.concatenate(
            [jnp.pad(u(g, (H, H)), ((0, 0), (0, GP - H))) for g in gk], axis=1)
        return jnp.pad(w, ((0, HP - H), (0, 0)))

    def pack_bias(k1, k2):                 # (1, 4*GP) = b_ih + b_hh, padded
        g1 = jax.random.split(k1, 4)
        g2 = jax.random.split(k2, 4)
        return jnp.concatenate(
            [jnp.pad(u(a, (1, H)) + u(b, (1, H)), ((0, 0), (0, GP - H)))
             for a, b in zip(g1, g2)], axis=1)

    return {
        "wif": pack_in(keys[0]),
        "whf": pack_hid(keys[1]),
        "bf":  pack_bias(keys[2], keys[3]),
        "wib": pack_in(keys[4]),
        "whb": pack_hid(keys[5]),
        "bb":  pack_bias(keys[6], keys[7]),
        # fc1: Linear(2H, C) split into forward/backward halves, K padded to HP.
        "w1f": jnp.pad(u(keys[8], (H, C)), ((0, HP - H), (0, 0))),
        "w1b": jnp.pad(u(keys[9], (H, C)), ((0, HP - H), (0, 0))),
        "b1":  u(keys[10], (1, C)),
        # fc2: Linear(C, C)
        "w2":  u(keys[11], (C, C)),
        "b2":  u(keys[12], (1, C)),
    }


if __name__ == "__main__":
    B, T = 2, 8
    INPUT_SIZE, HIDDEN, NUM_CLASS = 50, 50, 32

    key = jax.random.PRNGKey(0)
    pkey, xkey = jax.random.split(key)
    params = init_params(pkey, INPUT_SIZE, HIDDEN, NUM_CLASS)
    x = jax.random.normal(xkey, (B, T, INPUT_SIZE), jnp.float32)

    fwd = jax.jit(functools.partial(seq_model_forward, params=params))
    out = jax.block_until_ready(fwd(x))

    assert out.shape == (B, T, NUM_CLASS), out.shape
    assert bool(jnp.all(jnp.isfinite(out)))
    # nn.Softmax(dim=1) on (B, T, C) => sums over the sequence axis must be ~1.
    # Exact divide in the kernel -> only f32 rounding error remains.
    seq_sums = jnp.sum(out, axis=1)
    assert bool(jnp.allclose(seq_sums, 1.0, atol=1e-4)), seq_sums

    print("KERNEL_OK")
</pallas_src>

<mosaic_0001>
module attributes {stable_mosaic.version = 11 : i64} {
  func.func @seq_model_kernel(%arg0: memref<16x50xbf16, #tpu.memory_space<vmem>>, %arg1: memref<50x1024xbf16, #tpu.memory_space<vmem>>, %arg2: memref<1x1024xf32, #tpu.memory_space<vmem>>, %arg3: memref<128x512xbf16, #tpu.memory_space<vmem>>, %arg4: memref<128x512xbf16, #tpu.memory_space<vmem>>, %arg5: memref<128x32xbf16, #tpu.memory_space<vmem>>, %arg6: memref<128x32xbf16, #tpu.memory_space<vmem>>, %arg7: memref<1x32xf32, #tpu.memory_space<vmem>>, %arg8: memref<32x32xbf16, #tpu.memory_space<vmem>>, %arg9: memref<1x32xf32, #tpu.memory_space<vmem>>, %arg10: memref<8x2x32xf32, #tpu.memory_space<vmem>>, %arg11: memref<16x1024xf32, #tpu.memory_space<vmem>>, %arg12: memref<16x128xf32, #tpu.memory_space<vmem>>, %arg13: memref<16x128xf32, #tpu.memory_space<vmem>>) attributes {dimension_semantics = [], scalar_prefetch = 0 : i64, scratch_operands = 3 : i64, tpu.core_type = #tpu.core_type<tc>} {
    %c0 = arith.constant 0 : index
    %c0_0 = arith.constant 0 : index
    %0 = vector.load %arg0[%c0, %c0_0] : memref<16x50xbf16, #tpu.memory_space<vmem>>, vector<16x50xbf16>
    %c0_1 = arith.constant 0 : index
    %c0_2 = arith.constant 0 : index
    %1 = vector.load %arg1[%c0_1, %c0_2] : memref<50x1024xbf16, #tpu.memory_space<vmem>>, vector<50x1024xbf16>
    %cst = arith.constant dense<0.000000e+00> : vector<16x1024xf32>
    %2 = tpu.matmul %0, %1, %cst {dimension_numbers = #tpu.dot_dimension_numbers<[1], [0], [0], [1], [0, 0, 1, 1], [], []>} : vector<16x50xbf16>, vector<50x1024xbf16>, vector<16x1024xf32> -> vector<16x1024xf32>
    %c0_3 = arith.constant 0 : index
    %c0_4 = arith.constant 0 : index
    %3 = vector.load %arg2[%c0_3, %c0_4] : memref<1x1024xf32, #tpu.memory_space<vmem>>, vector<1x1024xf32>
    %4 = vector.broadcast %3 : vector<1x1024xf32> to vector<16x1024xf32>
    %5 = arith.addf %2, %4 : vector<16x1024xf32>
    %c0_5 = arith.constant 0 : index
    %c0_6 = arith.constant 0 : index
    %6 = vector.load %arg11[%c0_5, %c0_6] : memref<16x1024xf32, #tpu.memory_space<vmem>>, vector<16x1024xf32>
    tpu.vector_store %arg11[%c0_5, %c0_6], %5 {strides = array<i32>} : memref<16x1024xf32, #tpu.memory_space<vmem>>, vector<16x1024xf32>,
    %c0_7 = arith.constant 0 : index
    %c0_8 = arith.constant 0 : index
    %7 = vector.load %arg3[%c0_7, %c0_8] : memref<128x512xbf16, #tpu.memory_space<vmem>>, vector<128x512xbf16>
    %c0_9 = arith.constant 0 : index
    %c0_10 = arith.constant 0 : index
    %8 = vector.load %arg4[%c0_9, %c0_10] : memref<128x512xbf16, #tpu.memory_space<vmem>>, vector<128x512xbf16>
    %cst_11 = arith.constant 0.000000e+00 : f32
    %9 = vector.broadcast %cst_11 : f32 to vector<2x128xf32>
    %cst_12 = arith.constant 0.000000e+00 : f32
    %10 = vector.broadcast %cst_12 : f32 to vector<2x128xf32>
    %cst_13 = arith.constant 0.000000e+00 : f32
    %11 = vector.broadcast %cst_13 : f32 to vector<2x128xf32>
    %cst_14 = arith.constant 0.000000e+00 : f32
    %12 = vector.broadcast %cst_14 : f32 to vector<2x128xf32>
    %c0_15 = arith.constant 0 : index
    %c0_16 = arith.constant 0 : index
    %13 = vector.load %arg11[%c0_15, %c0_16] : memref<16x1024xf32, #tpu.memory_space<vmem>>, vector<2x512xf32>
    %14 = arith.truncf %9 : vector<2x128xf32> to vector<2x128xbf16>
    %cst_17 = arith.constant dense<0.000000e+00> : vector<2x512xf32>
    %15 = tpu.matmul %14, %7, %cst_17 {dimension_numbers = #tpu.dot_dimension_numbers<[1], [0], [0], [1], [0, 0, 1, 1], [], []>} : vector<2x128xbf16>, vector<128x512xbf16>, vector<2x512xf32> -> vector<2x512xf32>
    %16 = arith.addf %13, %15 : vector<2x512xf32>
    %c14 = arith.constant 14 : index
    %c512 = arith.constant 512 : index
    %17 = vector.load %arg11[%c14, %c512] : memref<16x1024xf32, #tpu.memory_space<vmem>>, vector<2x512xf32>
    %18 = arith.truncf %11 : vector<2x128xf32> to vector<2x128xbf16>
    %cst_18 = arith.constant dense<0.000000e+00> : vector<2x512xf32>
    %19 = tpu.matmul %18, %8, %cst_18 {dimension_numbers = #tpu.dot_dimension_numbers<[1], [0], [0], [1], [0, 0, 1, 1], [], []>} : vector<2x128xbf16>, vector<128x512xbf16>, vector<2x512xf32> -> vector<2x512xf32>
    %20 = arith.addf %17, %19 : vector<2x512xf32>
    %21 = vector.extract_strided_slice %16 {offsets = [0, 0], sizes = [2, 384], strides = [1, 1]} : vector<2x512xf32> to vector<2x384xf32>
    %22 = arith.negf %21 : vector<2x384xf32>
    %23 = math.exp %22 : vector<2x384xf32>
    %cst_19 = arith.constant 1.000000e+00 : f32
    %24 = vector.broadcast %cst_19 : f32 to vector<2x384xf32>
    %25 = arith.addf %24, %23 : vector<2x384xf32>
    %26 = arith.divf %24, %25 : vector<2x384xf32>
    %27 = vector.extract_strided_slice %26 {offsets = [0, 0], sizes = [2, 128], strides = [1, 1]} : vector<2x384xf32> to vector<2x128xf32>
    %28 = vector.extract_strided_slice %26 {offsets = [0, 128], sizes = [2, 128], strides = [1, 1]} : vector<2x384xf32> to vector<2x128xf32>
    %29 = vector.extract_strided_slice %26 {offsets = [0, 256], sizes = [2, 128], strides = [1, 1]} : vector<2x384xf32> to vector<2x128xf32>
    %30 = vector.extract_strided_slice %16 {offsets = [0, 384], sizes = [2, 128], strides = [1, 1]} : vector<2x512xf32> to vector<2x128xf32>
    %31 = math.tanh %30 : vector<2x128xf32>
    %32 = arith.mulf %28, %10 : vector<2x128xf32>
    %33 = arith.mulf %27, %31 : vector<2x128xf32>
    %34 = arith.addf %32, %33 : vector<2x128xf32>
    %35 = math.tanh %34 : vector<2x128xf32>
    %36 = arith.mulf %29, %35 : vector<2x128xf32>
    %37 = vector.extract_strided_slice %20 {offsets = [0, 0], sizes = [2, 384], strides = [1, 1]} : vector<2x512xf32> to vector<2x384xf32>
    %38 = arith.negf %37 : vector<2x384xf32>
    %39 = math.exp %38 : vector<2x384xf32>
    %cst_20 = arith.constant 1.000000e+00 : f32
    %40 = vector.broadcast %cst_20 : f32 to vector<2x384xf32>
    %41 = arith.addf %40, %39 : vector<2x384xf32>
    %42 = arith.divf %40, %41 : vector<2x384xf32>
    %43 = vector.extract_strided_slice %42 {offsets = [0, 0], sizes = [2, 128], strides = [1, 1]} : vector<2x384xf32> to vector<2x128xf32>
    %44 = vector.extract_strided_slice %42 {offsets = [0, 128], sizes = [2, 128], strides = [1, 1]} : vector<2x384xf32> to vector<2x128xf32>
    %45 = vector.extract_strided_slice %42 {offsets = [0, 256], sizes = [2, 128], strides = [1, 1]} : vector<2x384xf32> to vector<2x128xf32>
    %46 = vector.extract_strided_slice %20 {offsets = [0, 384], sizes = [2, 128], strides = [1, 1]} : vector<2x512xf32> to vector<2x128xf32>
    %47 = math.tanh %46 : vector<2x128xf32>
    %48 = arith.mulf %44, %12 : vector<2x128xf32>
    %49 = arith.mulf %43, %47 : vector<2x128xf32>
    %50 = arith.addf %48, %49 : vector<2x128xf32>
    %51 = math.tanh %50 : vector<2x128xf32>
    %52 = arith.mulf %45, %51 : vector<2x128xf32>
    %c0_21 = arith.constant 0 : index
    %c0_22 = arith.constant 0 : index
    %53 = vector.load %arg12[%c0_21, %c0_22] : memref<16x128xf32, #tpu.memory_space<vmem>>, vector<2x128xf32>
    tpu.vector_store %arg12[%c0_21, %c0_22], %36 {strides = array<i32>} : memref<16x128xf32, #tpu.memory_space<vmem>>, vector<2x128xf32>,
    %c14_23 = arith.constant 14 : index
    %c0_24 = arith.constant 0 : index
    %54 = vector.load %arg13[%c14_23, %c0_24] : memref<16x128xf32, #tpu.memory_space<vmem>>, vector<2x128xf32>
    tpu.vector_store %arg13[%c14_23, %c0_24], %52 {strides = array<i32>} : memref<16x128xf32, #tpu.memory_space<vmem>>, vector<2x128xf32>,
    %c2 = arith.constant 2 : index
    %c0_25 = arith.constant 0 : index
    %55 = vector.load %arg11[%c2, %c0_25] : memref<16x1024xf32, #tpu.memory_space<vmem>>, vector<2x512xf32>
    %56 = arith.truncf %36 : vector<2x128xf32> to vector<2x128xbf16>
    %cst_26 = arith.constant dense<0.000000e+00> : vector<2x512xf32>
    %57 = tpu.matmul %56, %7, %cst_26 {dimension_numbers = #tpu.dot_dimension_numbers<[1], [0], [0], [1], [0, 0, 1, 1], [], []>} : vector<2x128xbf16>, vector<128x512xbf16>, vector<2x512xf32> -> vector<2x512xf32>
    %58 = arith.addf %55, %57 : vector<2x512xf32>
    %c12 = arith.constant 12 : index
    %c512_27 = arith.constant 512 : index
    %59 = vector.load %arg11[%c12, %c512_27] : memref<16x1024xf32, #tpu.memory_space<vmem>>, vector<2x512xf32>
    %60 = arith.truncf %52 : vector<2x128xf32> to vector<2x128xbf16>
    %cst_28 = arith.constant dense<0.000000e+00> : vector<2x512xf32>
    %61 = tpu.matmul %60, %8, %cst_28 {dimension_numbers = #tpu.dot_dimension_numbers<[1], [0], [0], [1], [0, 0, 1, 1], [], []>} : vector<2x128xbf16>, vector<128x512xbf16>, vector<2x512xf32> -> vector<2x512xf32>
    %62 = arith.addf %59, %61 : vector<2x512xf32>
    %63 = vector.extract_strided_slice %58 {offsets = [0, 0], sizes = [2, 384], strides = [1, 1]} : vector<2x512xf32> to vector<2x384xf32>
    %64 = arith.negf %63 : vector<2x384xf32>
    %65 = math.exp %64 : vector<2x384xf32>
    %cst_29 = arith.constant 1.000000e+00 : f32
    %66 = vector.broadcast %cst_29 : f32 to vector<2x384xf32>
    %67 = arith.addf %66, %65 : vector<2x384xf32>
    %68 = arith.divf %66, %67 : vector<2x384xf32>
    %69 = vector.extract_strided_slice %68 {offsets = [0, 0], sizes = [2, 128], strides = [1, 1]} : vector<2x384xf32> to vector<2x128xf32>
    %70 = vector.extract_strided_slice %68 {offsets = [0, 128], sizes = [2, 128], strides = [1, 1]} : vector<2x384xf32> to vector<2x128xf32>
    %71 = vector.extract_strided_slice %68 {offsets = [0, 256], sizes = [2, 128], strides = [1, 1]} : vector<2x384xf32> to vector<2x128xf32>
    %72 = vector.extract_strided_slice %58 {offsets = [0, 384], sizes = [2, 128], strides = [1, 1]} : vector<2x512xf32> to vector<2x128xf32>
    %73 = math.tanh %72 : vector<2x128xf32>
    %74 = arith.mulf %70, %34 : vector<2x128xf32>
    %75 = arith.mulf %69, %73 : vector<2x128xf32>
    %76 = arith.addf %74, %75 : vector<2x128xf32>
    %77 = math.tanh %76 : vector<2x128xf32>
    %78 = arith.mulf %71, %77 : vector<2x128xf32>
    %79 = vector.extract_strided_slice %62 {offsets = [0, 0], sizes = [2, 384], strides = [1, 1]} : vector<2x512xf32> to vector<2x384xf32>
    %80 = arith.negf %79 : vector<2x384xf32>
    %81 = math.exp %80 : vector<2x384xf32>
    %cst_30 = arith.constant 1.000000e+00 : f32
    %82 = vector.broadcast %cst_30 : f32 to vector<2x384xf32>
    %83 = arith.addf %82, %81 : vector<2x384xf32>
    %84 = arith.divf %82, %83 : vector<2x384xf32>
    %85 = vector.extract_strided_slice %84 {offsets = [0, 0], sizes = [2, 128], strides = [1, 1]} : vector<2x384xf32> to vector<2x128xf32>
    %86 = vector.extract_strided_slice %84 {offsets = [0, 128], sizes = [2, 128], strides = [1, 1]} : vector<2x384xf32> to vector<2x128xf32>
    %87 = vector.extract_strided_slice %84 {offsets = [0, 256], sizes = [2, 128], strides = [1, 1]} : vector<2x384xf32> to vector<2x128xf32>
    %88 = vector.extract_strided_slice %62 {offsets = [0, 384], sizes = [2, 128], strides = [1, 1]} : vector<2x512xf32> to vector<2x128xf32>
    %89 = math.tanh %88 : vector<2x128xf32>
    %90 = arith.mulf %86, %50 : vector<2x128xf32>
    %91 = arith.mulf %85, %89 : vector<2x128xf32>
    %92 = arith.addf %90, %91 : vector<2x128xf32>
    %93 = math.tanh %92 : vector<2x128xf32>
    %94 = arith.mulf %87, %93 : vector<2x128xf32>
    %c2_31 = arith.constant 2 : index
    %c0_32 = arith.constant 0 : index
    %95 = vector.load %arg12[%c2_31, %c0_32] : memref<16x128xf32, #tpu.memory_space<vmem>>, vector<2x128xf32>
    tpu.vector_store %arg12[%c2_31, %c0_32], %78 {strides = array<i32>} : memref<16x128xf32, #tpu.memory_space<vmem>>, vector<2x128xf32>,
    %c12_33 = arith.constant 12 : index
    %c0_34 = arith.constant 0 : index
    %96 = vector.load %arg13[%c12_33, %c0_34] : memref<16x128xf32, #tpu.memory_space<vmem>>, vector<2x128xf32>
    tpu.vector_store %arg13[%c12_33, %c0_34], %94 {strides = array<i32>} : memref<16x128xf32, #tpu.memory_space<vmem>>, vector<2x128xf32>,
    %c4 = arith.constant 4 : index
    %c0_35 = arith.constant 0 : index
    %97 = vector.load %arg11[%c4, %c0_35] : memref<16x1024xf32, #tpu.memory_space<vmem>>, vector<2x512xf32>
    %98 = arith.truncf %78 : vector<2x128xf32> to vector<2x128xbf16>
    %cst_36 = arith.constant dense<0.000000e+00> : vector<2x512xf32>
    %99 = tpu.matmul %98, %7, %cst_36 {dimension_numbers = #tpu.dot_dimension_numbers<[1], [0], [0], [1], [0, 0, 1, 1], [], []>} : vector<2x128xbf16>, vector<128x512xbf16>, vector<2x512xf32> -> vector<2x512xf32>
    %100 = arith.addf %97, %99 : vector<2x512xf32>
    %c10 = arith.constant 10 : index
    %c512_37 = arith.constant 512 : index
    %101 = vector.load %arg11[%c10, %c512_37] : memref<16x1024xf32, #tpu.memory_space<vmem>>, vector<2x512xf32>
    %102 = arith.truncf %94 : vector<2x128xf32> to vector<2x128xbf16>
    %cst_38 = arith.constant dense<0.000000e+00> : vector<2x512xf32>
    %103 = tpu.matmul %102, %8, %cst_38 {dimension_numbers = #tpu.dot_dimension_numbers<[1], [0], [0], [1], [0, 0, 1, 1], [], []>} : vector<2x128xbf16>, vector<128x512xbf16>, vector<2x512xf32> -> vector<2x512xf32>
    %104 = arith.addf %101, %103 : vector<2x512xf32>
    %105 = vector.extract_strided_slice %100 {offsets = [0, 0], sizes = [2, 384], strides = [1, 1]} : vector<2x512xf32> to vector<2x384xf32>
    %106 = arith.negf %105 : vector<2x384xf32>
    %107 = math.exp %106 : vector<2x384xf32>
    %cst_39 = arith.constant 1.000000e+00 : f32
    %108 = vector.broadcast %cst_39 : f32 to vector<2x384xf32>
    %109 = arith.addf %108, %107 : vector<2x384xf32>
    %110 = arith.divf %108, %109 : vector<2x384xf32>
    %111 = vector.extract_strided_slice %110 {offsets = [0, 0], sizes = [2, 128], strides = [1, 1]} : vector<2x384xf32> to vector<2x128xf32>
    %112 = vector.extract_strided_slice %110 {offsets = [0, 128], sizes = [2, 128], strides = [1, 1]} : vector<2x384xf32> to vector<2x128xf32>
    %113 = vector.extract_strided_slice %110 {offsets = [0, 256], sizes = [2, 128], strides = [1, 1]} : vector<2x384xf32> to vector<2x128xf32>
    %114 = vector.extract_strided_slice %100 {offsets = [0, 384], sizes = [2, 128], strides = [1, 1]} : vector<2x512xf32> to vector<2x128xf32>
    %115 = math.tanh %114 : vector<2x128xf32>
    %116 = arith.mulf %112, %76 : vector<2x128xf32>
    %117 = arith.mulf %111, %115 : vector<2x128xf32>
    %118 = arith.addf %116, %117 : vector<2x128xf32>
    %119 = math.tanh %118 : vector<2x128xf32>
    %120 = arith.mulf %113, %119 : vector<2x128xf32>
    %121 = vector.extract_strided_slice %104 {offsets = [0, 0], sizes = [2, 384], strides = [1, 1]} : vector<2x512xf32> to vector<2x384xf32>
    %122 = arith.negf %121 : vector<2x384xf32>
    %123 = math.exp %122 : vector<2x384xf32>
    %cst_40 = arith.constant 1.000000e+00 : f32
    %124 = vector.broadcast %cst_40 : f32 to vector<2x384xf32>
    %125 = arith.addf %124, %123 : vector<2x384xf32>
    %126 = arith.divf %124, %125 : vector<2x384xf32>
    %127 = vector.extract_strided_slice %126 {offsets = [0, 0], sizes = [2, 128], strides = [1, 1]} : vector<2x384xf32> to vector<2x128xf32>
    %128 = vector.extract_strided_slice %126 {offsets = [0, 128], sizes = [2, 128], strides = [1, 1]} : vector<2x384xf32> to vector<2x128xf32>
    %129 = vector.extract_strided_slice %126 {offsets = [0, 256], sizes = [2, 128], strides = [1, 1]} : vector<2x384xf32> to vector<2x128xf32>
    %130 = vector.extract_strided_slice %104 {offsets = [0, 384], sizes = [2, 128], strides = [1, 1]} : vector<2x512xf32> to vector<2x128xf32>
    %131 = math.tanh %130 : vector<2x128xf32>
    %132 = arith.mulf %128, %92 : vector<2x128xf32>
    %133 = arith.mulf %127, %131 : vector<2x128xf32>
    %134 = arith.addf %132, %133 : vector<2x128xf32>
    %135 = math.tanh %134 : vector<2x128xf32>
    %136 = arith.mulf %129, %135 : vector<2x128xf32>
    %c4_41 = arith.constant 4 : index
    %c0_42 = arith.constant 0 : index
    %137 = vector.load %arg12[%c4_41, %c0_42] : memref<16x128xf32, #tpu.memory_space<vmem>>, vector<2x128xf32>
    tpu.vector_store %arg12[%c4_41, %c0_42], %120 {strides = array<i32>} : memref<16x128xf32, #tpu.memory_space<vmem>>, vector<2x128xf32>,
    %c10_43 = arith.constant 10 : index
    %c0_44 = arith.constant 0 : index
    %138 = vector.load %arg13[%c10_43, %c0_44] : memref<16x128xf32, #tpu.memory_space<vmem>>, vector<2x128xf32>
    tpu.vector_store %arg13[%c10_43, %c0_44], %136 {strides = array<i32>} : memref<16x128xf32, #tpu.memory_space<vmem>>, vector<2x128xf32>,
    %c6 = arith.constant 6 : index
    %c0_45 = arith.constant 0 : index
    %139 = vector.load %arg11[%c6, %c0_45] : memref<16x1024xf32, #tpu.memory_space<vmem>>, vector<2x512xf32>
    %140 = arith.truncf %120 : vector<2x128xf32> to vector<2x128xbf16>
    %cst_46 = arith.constant dense<0.000000e+00> : vector<2x512xf32>
    %141 = tpu.matmul %140, %7, %cst_46 {dimension_numbers = #tpu.dot_dimension_numbers<[1], [0], [0], [1], [0, 0, 1, 1], [], []>} : vector<2x128xbf16>, vector<128x512xbf16>, vector<2x512xf32> -> vector<2x512xf32>
    %142 = arith.addf %139, %141 : vector<2x512xf32>
    %c8 = arith.constant 8 : index
    %c512_47 = arith.constant 512 : index
    %143 = vector.load %arg11[%c8, %c512_47] : memref<16x1024xf32, #tpu.memory_space<vmem>>, vector<2x512xf32>
    %144 = arith.truncf %136 : vector<2x128xf32> to vector<2x128xbf16>
    %cst_48 = arith.constant dense<0.000000e+00> : vector<2x512xf32>
    %145 = tpu.matmul %144, %8, %cst_48 {dimension_numbers = #tpu.dot_dimension_numbers<[1], [0], [0], [1], [0, 0, 1, 1], [], []>} : vector<2x128xbf16>, vector<128x512xbf16>, vector<2x512xf32> -> vector<2x512xf32>
    %146 = arith.addf %143, %145 : vector<2x512xf32>
    %147 = vector.extract_strided_slice %142 {offsets = [0, 0], sizes = [2, 384], strides = [1, 1]} : vector<2x512xf32> to vector<2x384xf32>
    %148 = arith.negf %147 : vector<2x384xf32>
    %149 = math.exp %148 : vector<2x384xf32>
    %cst_49 = arith.constant 1.000000e+00 : f32
    %150 = vector.broadcast %cst_49 : f32 to vector<2x384xf32>
    %151 = arith.addf %150, %149 : vector<2x384xf32>
    %152 = arith.divf %150, %151 : vector<2x384xf32>
    %153 = vector.extract_strided_slice %152 {offsets = [0, 0], sizes = [2, 128], strides = [1, 1]} : vector<2x384xf32> to vector<2x128xf32>
    %154 = vector.extract_strided_slice %152 {offsets = [0, 128], sizes = [2, 128], strides = [1, 1]} : vector<2x384xf32> to vector<2x128xf32>
    %155 = vector.extract_strided_slice %152 {offsets = [0, 256], sizes = [2, 128], strides = [1, 1]} : vector<2x384xf32> to vector<2x128xf32>
    %156 = vector.extract_strided_slice %142 {offsets = [0, 384], sizes = [2, 128], strides = [1, 1]} : vector<2x512xf32> to vector<2x128xf32>
    %157 = math.tanh %156 : vector<2x128xf32>
    %158 = arith.mulf %154, %118 : vector<2x128xf32>
    %159 = arith.mulf %153, %157 : vector<2x128xf32>
    %160 = arith.addf %158, %159 : vector<2x128xf32>
    %161 = math.tanh %160 : vector<2x128xf32>
    %162 = arith.mulf %155, %161 : vector<2x128xf32>
    %163 = vector.extract_strided_slice %146 {offsets = [0, 0], sizes = [2, 384], strides = [1, 1]} : vector<2x512xf32> to vector<2x384xf32>
    %164 = arith.negf %163 : vector<2x384xf32>
    %165 = math.exp %164 : vector<2x384xf32>
    %cst_50 = arith.constant 1.000000e+00 : f32
    %166 = vector.broadcast %cst_50 : f32 to vector<2x384xf32>
    %167 = arith.addf %166, %165 : vector<2x384xf32>
    %168 = arith.divf %166, %167 : vector<2x384xf32>
    %169 = vector.extract_strided_slice %168 {offsets = [0, 0], sizes = [2, 128], strides = [1, 1]} : vector<2x384xf32> to vector<2x128xf32>
    %170 = vector.extract_strided_slice %168 {offsets = [0, 128], sizes = [2, 128], strides = [1, 1]} : vector<2x384xf32> to vector<2x128xf32>
    %171 = vector.extract_strided_slice %168 {offsets = [0, 256], sizes = [2, 128], strides = [1, 1]} : vector<2x384xf32> to vector<2x128xf32>
    %172 = vector.extract_strided_slice %146 {offsets = [0, 384], sizes = [2, 128], strides = [1, 1]} : vector<2x512xf32> to vector<2x128xf32>
    %173 = math.tanh %172 : vector<2x128xf32>
    %174 = arith.mulf %170, %134 : vector<2x128xf32>
    %175 = arith.mulf %169, %173 : vector<2x128xf32>
    %176 = arith.addf %174, %175 : vector<2x128xf32>
    %177 = math.tanh %176 : vector<2x128xf32>
    %178 = arith.mulf %171, %177 : vector<2x128xf32>
    %c6_51 = arith.constant 6 : index
    %c0_52 = arith.constant 0 : index
    %179 = vector.load %arg12[%c6_51, %c0_52] : memref<16x128xf32, #tpu.memory_space<vmem>>, vector<2x128xf32>
    tpu.vector_store %arg12[%c6_51, %c0_52], %162 {strides = array<i32>} : memref<16x128xf32, #tpu.memory_space<vmem>>, vector<2x128xf32>,
    %c8_53 = arith.constant 8 : index
    %c0_54 = arith.constant 0 : index
    %180 = vector.load %arg13[%c8_53, %c0_54] : memref<16x128xf32, #tpu.memory_space<vmem>>, vector<2x128xf32>
    tpu.vector_store %arg13[%c8_53, %c0_54], %178 {strides = array<i32>} : memref<16x128xf32, #tpu.memory_space<vmem>>, vector<2x128xf32>,
    %c8_55 = arith.constant 8 : index
    %c0_56 = arith.constant 0 : index
    %181 = vector.load %arg11[%c8_55, %c0_56] : memref<16x1024xf32, #tpu.memory_space<vmem>>, vector<2x512xf32>
    %182 = arith.truncf %162 : vector<2x128xf32> to vector<2x128xbf16>
    %cst_57 = arith.constant dense<0.000000e+00> : vector<2x512xf32>
    %183 = tpu.matmul %182, %7, %cst_57 {dimension_numbers = #tpu.dot_dimension_numbers<[1], [0], [0], [1], [0, 0, 1, 1], [], []>} : vector<2x128xbf16>, vector<128x512xbf16>, vector<2x512xf32> -> vector<2x512xf32>
    %184 = arith.addf %181, %183 : vector<2x512xf32>
    %c6_58 = arith.constant 6 : index
    %c512_59 = arith.constant 512 : index
    %185 = vector.load %arg11[%c6_58, %c512_59] : memref<16x1024xf32, #tpu.memory_space<vmem>>, vector<2x512xf32>
    %186 = arith.truncf %178 : vector<2x128xf32> to vector<2x128xbf16>
    %cst_60 = arith.constant dense<0.000000e+00> : vector<2x512xf32>
    %187 = tpu.matmul %186, %8, %cst_60 {dimension_numbers = #tpu.dot_dimension_numbers<[1], [0], [0], [1], [0, 0, 1, 1], [], []>} : vector<2x128xbf16>, vector<128x512xbf16>, vector<2x512xf32> -> vector<2x512xf32>
    %188 = arith.addf %185, %187 : vector<2x512xf32>
    %189 = vector.extract_strided_slice %184 {offsets = [0, 0], sizes = [2, 384], strides = [1, 1]} : vector<2x512xf32> to vector<2x384xf32>
    %190 = arith.negf %189 : vector<2x384xf32>
    %191 = math.exp %190 : vector<2x384xf32>
    %cst_61 = arith.constant 1.000000e+00 : f32
    %192 = vector.broadcast %cst_61 : f32 to vector<2x384xf32>
    %193 = arith.addf %192, %191 : vector<2x384xf32>
    %194 = arith.divf %192, %193 : vector<2x384xf32>
    %195 = vector.extract_strided_slice %194 {offsets = [0, 0], sizes = [2, 128], strides = [1, 1]} : vector<2x384xf32> to vector<2x128xf32>
    %196 = vector.extract_strided_slice %194 {offsets = [0, 128], sizes = [2, 128], strides = [1, 1]} : vector<2x384xf32> to vector<2x128xf32>
    %197 = vector.extract_strided_slice %194 {offsets = [0, 256], sizes = [2, 128], strides = [1, 1]} : vector<2x384xf32> to vector<2x128xf32>
    %198 = vector.extract_strided_slice %184 {offsets = [0, 384], sizes = [2, 128], strides = [1, 1]} : vector<2x512xf32> to vector<2x128xf32>
    %199 = math.tanh %198 : vector<2x128xf32>
    %200 = arith.mulf %196, %160 : vector<2x128xf32>
    %201 = arith.mulf %195, %199 : vector<2x128xf32>
    %202 = arith.addf %200, %201 : vector<2x128xf32>
    %203 = math.tanh %202 : vector<2x128xf32>
    %204 = arith.mulf %197, %203 : vector<2x128xf32>
    %205 = vector.extract_strided_slice %188 {offsets = [0, 0], sizes = [2, 384], strides = [1, 1]} : vector<2x512xf32> to vector<2x384xf32>
    %206 = arith.negf %205 : vector<2x384xf32>
    %207 = math.exp %206 : vector<2x384xf32>
    %cst_62 = arith.constant 1.000000e+00 : f32
    %208 = vector.broadcast %cst_62 : f32 to vector<2x384xf32>
    %209 = arith.addf %208, %207 : vector<2x384xf32>
    %210 = arith.divf %208, %209 : vector<2x384xf32>
    %211 = vector.extract_strided_slice %210 {offsets = [0, 0], sizes = [2, 128], strides = [1, 1]} : vector<2x384xf32> to vector<2x128xf32>
    %212 = vector.extract_strided_slice %210 {offsets = [0, 128], sizes = [2, 128], strides = [1, 1]} : vector<2x384xf32> to vector<2x128xf32>
    %213 = vector.extract_strided_slice %210 {offsets = [0, 256], sizes = [2, 128], strides = [1, 1]} : vector<2x384xf32> to vector<2x128xf32>
    %214 = vector.extract_strided_slice %188 {offsets = [0, 384], sizes = [2, 128], strides = [1, 1]} : vector<2x512xf32> to vector<2x128xf32>
    %215 = math.tanh %214 : vector<2x128xf32>
    %216 = arith.mulf %212, %176 : vector<2x128xf32>
    %217 = arith.mulf %211, %215 : vector<2x128xf32>
    %218 = arith.addf %216, %217 : vector<2x128xf32>
    %219 = math.tanh %218 : vector<2x128xf32>
    %220 = arith.mulf %213, %219 : vector<2x128xf32>
    %c8_63 = arith.constant 8 : index
    %c0_64 = arith.constant 0 : index
    %221 = vector.load %arg12[%c8_63, %c0_64] : memref<16x128xf32, #tpu.memory_space<vmem>>, vector<2x128xf32>
    tpu.vector_store %arg12[%c8_63, %c0_64], %204 {strides = array<i32>} : memref<16x128xf32, #tpu.memory_space<vmem>>, vector<2x128xf32>,
    %c6_65 = arith.constant 6 : index
    %c0_66 = arith.constant 0 : index
    %222 = vector.load %arg13[%c6_65, %c0_66] : memref<16x128xf32, #tpu.memory_space<vmem>>, vector<2x128xf32>
    tpu.vector_store %arg13[%c6_65, %c0_66], %220 {strides = array<i32>} : memref<16x128xf32, #tpu.memory_space<vmem>>, vector<2x128xf32>,
    %c10_67 = arith.constant 10 : index
    %c0_68 = arith.constant 0 : index
    %223 = vector.load %arg11[%c10_67, %c0_68] : memref<16x1024xf32, #tpu.memory_space<vmem>>, vector<2x512xf32>
    %224 = arith.truncf %204 : vector<2x128xf32> to vector<2x128xbf16>
    %cst_69 = arith.constant dense<0.000000e+00> : vector<2x512xf32>
    %225 = tpu.matmul %224, %7, %cst_69 {dimension_numbers = #tpu.dot_dimension_numbers<[1], [0], [0], [1], [0, 0, 1, 1], [], []>} : vector<2x128xbf16>, vector<128x512xbf16>, vector<2x512xf32> -> vector<2x512xf32>
    %226 = arith.addf %223, %225 : vector<2x512xf32>
    %c4_70 = arith.constant 4 : index
    %c512_71 = arith.constant 512 : index
    %227 = vector.load %arg11[%c4_70, %c512_71] : memref<16x1024xf32, #tpu.memory_space<vmem>>, vector<2x512xf32>
    %228 = arith.truncf %220 : vector<2x128xf32> to vector<2x128xbf16>
    %cst_72 = arith.constant dense<0.000000e+00> : vector<2x512xf32>
    %229 = tpu.matmul %228, %8, %cst_72 {dimension_numbers = #tpu.dot_dimension_numbers<[1], [0], [0], [1], [0, 0, 1, 1], [], []>} : vector<2x128xbf16>, vector<128x512xbf16>, vector<2x512xf32> -> vector<2x512xf32>
    %230 = arith.addf %227, %229 : vector<2x512xf32>
    %231 = vector.extract_strided_slice %226 {offsets = [0, 0], sizes = [2, 384], strides = [1, 1]} : vector<2x512xf32> to vector<2x384xf32>
    %232 = arith.negf %231 : vector<2x384xf32>
    %233 = math.exp %232 : vector<2x384xf32>
    %cst_73 = arith.constant 1.000000e+00 : f32
    %234 = vector.broadcast %cst_73 : f32 to vector<2x384xf32>
    %235 = arith.addf %234, %233 : vector<2x384xf32>
    %236 = arith.divf %234, %235 : vector<2x384xf32>
    %237 = vector.extract_strided_slice %236 {offsets = [0, 0], sizes = [2, 128], strides = [1, 1]} : vector<2x384xf32> to vector<2x128xf32>
    %238 = vector.extract_strided_slice %236 {offsets = [0, 128], sizes = [2, 128], strides = [1, 1]} : vector<2x384xf32> to vector<2x128xf32>
    %239 = vector.extract_strided_slice %236 {offsets = [0, 256], sizes = [2, 128], strides = [1, 1]} : vector<2x384xf32> to vector<2x128xf32>
    %240 = vector.extract_strided_slice %226 {offsets = [0, 384], sizes = [2, 128], strides = [1, 1]} : vector<2x512xf32> to vector<2x128xf32>
    %241 = math.tanh %240 : vector<2x128xf32>
    %242 = arith.mulf %238, %202 : vector<2x128xf32>
    %243 = arith.mulf %237, %241 : vector<2x128xf32>
    %244 = arith.addf %242, %243 : vector<2x128xf32>
    %245 = math.tanh %244 : vector<2x128xf32>
    %246 = arith.mulf %239, %245 : vector<2x128xf32>
    %247 = vector.extract_strided_slice %230 {offsets = [0, 0], sizes = [2, 384], strides = [1, 1]} : vector<2x512xf32> to vector<2x384xf32>
    %248 = arith.negf %247 : vector<2x384xf32>
    %249 = math.exp %248 : vector<2x384xf32>
    %cst_74 = arith.constant 1.000000e+00 : f32
    %250 = vector.broadcast %cst_74 : f32 to vector<2x384xf32>
    %251 = arith.addf %250, %249 : vector<2x384xf32>
    %252 = arith.divf %250, %251 : vector<2x384xf32>
    %253 = vector.extract_strided_slice %252 {offsets = [0, 0], sizes = [2, 128], strides = [1, 1]} : vector<2x384xf32> to vector<2x128xf32>
    %254 = vector.extract_strided_slice %252 {offsets = [0, 128], sizes = [2, 128], strides = [1, 1]} : vector<2x384xf32> to vector<2x128xf32>
    %255 = vector.extract_strided_slice %252 {offsets = [0, 256], sizes = [2, 128], strides = [1, 1]} : vector<2x384xf32> to vector<2x128xf32>
    %256 = vector.extract_strided_slice %230 {offsets = [0, 384], sizes = [2, 128], strides = [1, 1]} : vector<2x512xf32> to vector<2x128xf32>
    %257 = math.tanh %256 : vector<2x128xf32>
    %258 = arith.mulf %254, %218 : vector<2x128xf32>
    %259 = arith.mulf %253, %257 : vector<2x128xf32>
    %260 = arith.addf %258, %259 : vector<2x128xf32>
    %261 = math.tanh %260 : vector<2x128xf32>
    %262 = arith.mulf %255, %261 : vector<2x128xf32>
    %c10_75 = arith.constant 10 : index
    %c0_76 = arith.constant 0 : index
    %263 = vector.load %arg12[%c10_75, %c0_76] : memref<16x128xf32, #tpu.memory_space<vmem>>, vector<2x128xf32>
    tpu.vector_store %arg12[%c10_75, %c0_76], %246 {strides = array<i32>} : memref<16x128xf32, #tpu.memory_space<vmem>>, vector<2x128xf32>,
    %c4_77 = arith.constant 4 : index
    %c0_78 = arith.constant 0 : index
    %264 = vector.load %arg13[%c4_77, %c0_78] : memref<16x128xf32, #tpu.memory_space<vmem>>, vector<2x128xf32>
    tpu.vector_store %arg13[%c4_77, %c0_78], %262 {strides = array<i32>} : memref<16x128xf32, #tpu.memory_space<vmem>>, vector<2x128xf32>,
    %c12_79 = arith.constant 12 : index
    %c0_80 = arith.constant 0 : index
    %265 = vector.load %arg11[%c12_79, %c0_80] : memref<16x1024xf32, #tpu.memory_space<vmem>>, vector<2x512xf32>
    %266 = arith.truncf %246 : vector<2x128xf32> to vector<2x128xbf16>
    %cst_81 = arith.constant dense<0.000000e+00> : vector<2x512xf32>
    %267 = tpu.matmul %266, %7, %cst_81 {dimension_numbers = #tpu.dot_dimension_numbers<[1], [0], [0], [1], [0, 0, 1, 1], [], []>} : vector<2x128xbf16>, vector<128x512xbf16>, vector<2x512xf32> -> vector<2x512xf32>
    %268 = arith.addf %265, %267 : vector<2x512xf32>
    %c2_82 = arith.constant 2 : index
    %c512_83 = arith.constant 512 : index
    %269 = vector.load %arg11[%c2_82, %c512_83] : memref<16x1024xf32, #tpu.memory_space<vmem>>, vector<2x512xf32>
    %270 = arith.truncf %262 : vector<2x128xf32> to vector<2x128xbf16>
    %cst_84 = arith.constant dense<0.000000e+00> : vector<2x512xf32>
    %271 = tpu.matmul %270, %8, %cst_84 {dimension_numbers = #tpu.dot_dimension_numbers<[1], [0], [0], [1], [0, 0, 1, 1], [], []>} : vector<2x128xbf16>, vector<128x512xbf16>, vector<2x512xf32> -> vector<2x512xf32>
    %272 = arith.addf %269, %271 : vector<2x512xf32>
    %273 = vector.extract_strided_slice %268 {offsets = [0, 0], sizes = [2, 384], strides = [1, 1]} : vector<2x512xf32> to vector<2x384xf32>
    %274 = arith.negf %273 : vector<2x384xf32>
    %275 = math.exp %274 : vector<2x384xf32>
    %cst_85 = arith.constant 1.000000e+00 : f32
    %276 = vector.broadcast %cst_85 : f32 to vector<2x384xf32>
    %277 = arith.addf %276, %275 : vector<2x384xf32>
    %278 = arith.divf %276, %277 : vector<2x384xf32>
    %279 = vector.extract_strided_slice %278 {offsets = [0, 0], sizes = [2, 128], strides = [1, 1]} : vector<2x384xf32> to vector<2x128xf32>
    %280 = vector.extract_strided_slice %278 {offsets = [0, 128], sizes = [2, 128], strides = [1, 1]} : vector<2x384xf32> to vector<2x128xf32>
    %281 = vector.extract_strided_slice %278 {offsets = [0, 256], sizes = [2, 128], strides = [1, 1]} : vector<2x384xf32> to vector<2x128xf32>
    %282 = vector.extract_strided_slice %268 {offsets = [0, 384], sizes = [2, 128], strides = [1, 1]} : vector<2x512xf32> to vector<2x128xf32>
    %283 = math.tanh %282 : vector<2x128xf32>
    %284 = arith.mulf %280, %244 : vector<2x128xf32>
    %285 = arith.mulf %279, %283 : vector<2x128xf32>
    %286 = arith.addf %284, %285 : vector<2x128xf32>
    %287 = math.tanh %286 : vector<2x128xf32>
    %288 = arith.mulf %281, %287 : vector<2x128xf32>
    %289 = vector.extract_strided_slice %272 {offsets = [0, 0], sizes = [2, 384], strides = [1, 1]} : vector<2x512xf32> to vector<2x384xf32>
    %290 = arith.negf %289 : vector<2x384xf32>
    %291 = math.exp %290 : vector<2x384xf32>
    %cst_86 = arith.constant 1.000000e+00 : f32
    %292 = vector.broadcast %cst_86 : f32 to vector<2x384xf32>
    %293 = arith.addf %292, %291 : vector<2x384xf32>
    %294 = arith.divf %292, %293 : vector<2x384xf32>
    %295 = vector.extract_strided_slice %294 {offsets = [0, 0], sizes = [2, 128], strides = [1, 1]} : vector<2x384xf32> to vector<2x128xf32>
    %296 = vector.extract_strided_slice %294 {offsets = [0, 128], sizes = [2, 128], strides = [1, 1]} : vector<2x384xf32> to vector<2x128xf32>
    %297 = vector.extract_strided_slice %294 {offsets = [0, 256], sizes = [2, 128], strides = [1, 1]} : vector<2x384xf32> to vector<2x128xf32>
    %298 = vector.extract_strided_slice %272 {offsets = [0, 384], sizes = [2, 128], strides = [1, 1]} : vector<2x512xf32> to vector<2x128xf32>
    %299 = math.tanh %298 : vector<2x128xf32>
    %300 = arith.mulf %296, %260 : vector<2x128xf32>
    %301 = arith.mulf %295, %299 : vector<2x128xf32>
    %302 = arith.addf %300, %301 : vector<2x128xf32>
    %303 = math.tanh %302 : vector<2x128xf32>
    %304 = arith.mulf %297, %303 : vector<2x128xf32>
    %c12_87 = arith.constant 12 : index
    %c0_88 = arith.constant 0 : index
    %305 = vector.load %arg12[%c12_87, %c0_88] : memref<16x128xf32, #tpu.memory_space<vmem>>, vector<2x128xf32>
    tpu.vector_store %arg12[%c12_87, %c0_88], %288 {strides = array<i32>} : memref<16x128xf32, #tpu.memory_space<vmem>>, vector<2x128xf32>,
    %c2_89 = arith.constant 2 : index
    %c0_90 = arith.constant 0 : index
    %306 = vector.load %arg13[%c2_89, %c0_90] : memref<16x128xf32, #tpu.memory_space<vmem>>, vector<2x128xf32>
    tpu.vector_store %arg13[%c2_89, %c0_90], %304 {strides = array<i32>} : memref<16x128xf32, #tpu.memory_space<vmem>>, vector<2x128xf32>,
    %c14_91 = arith.constant 14 : index
    %c0_92 = arith.constant 0 : index
    %307 = vector.load %arg11[%c14_91, %c0_92] : memref<16x1024xf32, #tpu.memory_space<vmem>>, vector<2x512xf32>
    %308 = arith.truncf %288 : vector<2x128xf32> to vector<2x128xbf16>
    %cst_93 = arith.constant dense<0.000000e+00> : vector<2x512xf32>
    %309 = tpu.matmul %308, %7, %cst_93 {dimension_numbers = #tpu.dot_dimension_numbers<[1], [0], [0], [1], [0, 0, 1, 1], [], []>} : vector<2x128xbf16>, vector<128x512xbf16>, vector<2x512xf32> -> vector<2x512xf32>
    %310 = arith.addf %307, %309 : vector<2x512xf32>
    %c0_94 = arith.constant 0 : index
    %c512_95 = arith.constant 512 : index
    %311 = vector.load %arg11[%c0_94, %c512_95] : memref<16x1024xf32, #tpu.memory_space<vmem>>, vector<2x512xf32>
    %312 = arith.truncf %304 : vector<2x128xf32> to vector<2x128xbf16>
    %cst_96 = arith.constant dense<0.000000e+00> : vector<2x512xf32>
    %313 = tpu.matmul %312, %8, %cst_96 {dimension_numbers = #tpu.dot_dimension_numbers<[1], [0], [0], [1], [0, 0, 1, 1], [], []>} : vector<2x128xbf16>, vector<128x512xbf16>, vector<2x512xf32> -> vector<2x512xf32>
    %314 = arith.addf %311, %313 : vector<2x512xf32>
    %315 = vector.extract_strided_slice %310 {offsets = [0, 0], sizes = [2, 384], strides = [1, 1]} : vector<2x512xf32> to vector<2x384xf32>
    %316 = arith.negf %315 : vector<2x384xf32>
    %317 = math.exp %316 : vector<2x384xf32>
    %cst_97 = arith.constant 1.000000e+00 : f32
    %318 = vector.broadcast %cst_97 : f32 to vector<2x384xf32>
    %319 = arith.addf %318, %317 : vector<2x384xf32>
    %320 = arith.divf %318, %319 : vector<2x384xf32>
    %321 = vector.extract_strided_slice %320 {offsets = [0, 0], sizes = [2, 128], strides = [1, 1]} : vector<2x384xf32> to vector<2x128xf32>
    %322 = vector.extract_strided_slice %320 {offsets = [0, 128], sizes = [2, 128], strides = [1, 1]} : vector<2x384xf32> to vector<2x128xf32>
    %323 = vector.extract_strided_slice %320 {offsets = [0, 256], sizes = [2, 128], strides = [1, 1]} : vector<2x384xf32> to vector<2x128xf32>
    %324 = vector.extract_strided_slice %310 {offsets = [0, 384], sizes = [2, 128], strides = [1, 1]} : vector<2x512xf32> to vector<2x128xf32>
    %325 = math.tanh %324 : vector<2x128xf32>
    %326 = arith.mulf %322, %286 : vector<2x128xf32>
    %327 = arith.mulf %321, %325 : vector<2x128xf32>
    %328 = arith.addf %326, %327 : vector<2x128xf32>
    %329 = math.tanh %328 : vector<2x128xf32>
    %330 = arith.mulf %323, %329 : vector<2x128xf32>
    %331 = vector.extract_strided_slice %314 {offsets = [0, 0], sizes = [2, 384], strides = [1, 1]} : vector<2x512xf32> to vector<2x384xf32>
    %332 = arith.negf %331 : vector<2x384xf32>
    %333 = math.exp %332 : vector<2x384xf32>
    %cst_98 = arith.constant 1.000000e+00 : f32
    %334 = vector.broadcast %cst_98 : f32 to vector<2x384xf32>
    %335 = arith.addf %334, %333 : vector<2x384xf32>
    %336 = arith.divf %334, %335 : vector<2x384xf32>
    %337 = vector.extract_strided_slice %336 {offsets = [0, 0], sizes = [2, 128], strides = [1, 1]} : vector<2x384xf32> to vector<2x128xf32>
    %338 = vector.extract_strided_slice %336 {offsets = [0, 128], sizes = [2, 128], strides = [1, 1]} : vector<2x384xf32> to vector<2x128xf32>
    %339 = vector.extract_strided_slice %336 {offsets = [0, 256], sizes = [2, 128], strides = [1, 1]} : vector<2x384xf32> to vector<2x128xf32>
    %340 = vector.extract_strided_slice %314 {offsets = [0, 384], sizes = [2, 128], strides = [1, 1]} : vector<2x512xf32> to vector<2x128xf32>
    %341 = math.tanh %340 : vector<2x128xf32>
    %342 = arith.mulf %338, %302 : vector<2x128xf32>
    %343 = arith.mulf %337, %341 : vector<2x128xf32>
    %344 = arith.addf %342, %343 : vector<2x128xf32>
    %345 = math.tanh %344 : vector<2x128xf32>
    %346 = arith.mulf %339, %345 : vector<2x128xf32>
    %c14_99 = arith.constant 14 : index
    %c0_100 = arith.constant 0 : index
    %347 = vector.load %arg12[%c14_99, %c0_100] : memref<16x128xf32, #tpu.memory_space<vmem>>, vector<2x128xf32>
    tpu.vector_store %arg12[%c14_99, %c0_100], %330 {strides = array<i32>} : memref<16x128xf32, #tpu.memory_space<vmem>>, vector<2x128xf32>,
    %c0_101 = arith.constant 0 : index
    %c0_102 = arith.constant 0 : index
    %348 = vector.load %arg13[%c0_101, %c0_102] : memref<16x128xf32, #tpu.memory_space<vmem>>, vector<2x128xf32>
    tpu.vector_store %arg13[%c0_101, %c0_102], %346 {strides = array<i32>} : memref<16x128xf32, #tpu.memory_space<vmem>>, vector<2x128xf32>,
    %c0_103 = arith.constant 0 : index
    %c0_104 = arith.constant 0 : index
    %349 = vector.load %arg12[%c0_103, %c0_104] : memref<16x128xf32, #tpu.memory_space<vmem>>, vector<16x128xf32>
    %350 = arith.truncf %349 : vector<16x128xf32> to vector<16x128xbf16>
    %c0_105 = arith.constant 0 : index
    %c0_106 = arith.constant 0 : index
    %351 = vector.load %arg5[%c0_105, %c0_106] : memref<128x32xbf16, #tpu.memory_space<vmem>>, vector<128x32xbf16>
    %cst_107 = arith.constant dense<0.000000e+00> : vector<16x32xf32>
    %352 = tpu.matmul %350, %351, %cst_107 {dimension_numbers = #tpu.dot_dimension_numbers<[1], [0], [0], [1], [0, 0, 1, 1], [], []>} : vector<16x128xbf16>, vector<128x32xbf16>, vector<16x32xf32> -> vector<16x32xf32>
    %c0_108 = arith.constant 0 : index
    %c0_109 = arith.constant 0 : index
    %353 = vector.load %arg13[%c0_108, %c0_109] : memref<16x128xf32, #tpu.memory_space<vmem>>, vector<16x128xf32>
    %354 = arith.truncf %353 : vector<16x128xf32> to vector<16x128xbf16>
    %c0_110 = arith.constant 0 : index
    %c0_111 = arith.constant 0 : index
    %355 = vector.load %arg6[%c0_110, %c0_111] : memref<128x32xbf16, #tpu.memory_space<vmem>>, vector<128x32xbf16>
    %cst_112 = arith.constant dense<0.000000e+00> : vector<16x32xf32>
    %356 = tpu.matmul %354, %355, %cst_112 {dimension_numbers = #tpu.dot_dimension_numbers<[1], [0], [0], [1], [0, 0, 1, 1], [], []>} : vector<16x128xbf16>, vector<128x32xbf16>, vector<16x32xf32> -> vector<16x32xf32>
    %357 = arith.addf %352, %356 : vector<16x32xf32>
    %c0_113 = arith.constant 0 : index
    %c0_114 = arith.constant 0 : index
    %358 = vector.load %arg7[%c0_113, %c0_114] : memref<1x32xf32, #tpu.memory_space<vmem>>, vector<1x32xf32>
    %359 = vector.broadcast %358 : vector<1x32xf32> to vector<16x32xf32>
    %360 = arith.addf %357, %359 : vector<16x32xf32>
    %cst_115 = arith.constant 0.000000e+00 : f32
    %361 = vector.broadcast %cst_115 : f32 to vector<16x32xf32>
    %362 = arith.maximumf %360, %361 : vector<16x32xf32>
    %363 = arith.truncf %362 : vector<16x32xf32> to vector<16x32xbf16>
    %c0_116 = arith.constant 0 : index
    %c0_117 = arith.constant 0 : index
    %364 = vector.load %arg8[%c0_116, %c0_117] : memref<32x32xbf16, #tpu.memory_space<vmem>>, vector<32x32xbf16>
    %cst_118 = arith.constant dense<0.000000e+00> : vector<16x32xf32>
    %365 = tpu.matmul %363, %364, %cst_118 {dimension_numbers = #tpu.dot_dimension_numbers<[1], [0], [0], [1], [0, 0, 1, 1], [], []>} : vector<16x32xbf16>, vector<32x32xbf16>, vector<16x32xf32> -> vector<16x32xf32>
    %c0_119 = arith.constant 0 : index
    %c0_120 = arith.constant 0 : index
    %366 = vector.load %arg9[%c0_119, %c0_120] : memref<1x32xf32, #tpu.memory_space<vmem>>, vector<1x32xf32>
    %367 = vector.broadcast %366 : vector<1x32xf32> to vector<16x32xf32>
    %368 = arith.addf %365, %367 : vector<16x32xf32>
    %369 = vector.shape_cast %368 : vector<16x32xf32> to vector<8x2x32xf32>
    %cst_121 = arith.constant dense<0xFF800000> : vector<2x32xf32>
    %370 = vector.multi_reduction <maximumf>, %369, %cst_121 [0] : vector<8x2x32xf32> to vector<2x32xf32>
    %371 = vector.shape_cast %370 : vector<2x32xf32> to vector<1x2x32xf32>
    %372 = vector.broadcast %371 : vector<1x2x32xf32> to vector<8x2x32xf32>
    %373 = arith.subf %369, %372 : vector<8x2x32xf32>
    %374 = math.exp %373 : vector<8x2x32xf32>
    %cst_122 = arith.constant dense<0.000000e+00> : vector<2x32xf32>
    %375 = vector.multi_reduction <add>, %374, %cst_122 [0] : vector<8x2x32xf32> to vector<2x32xf32>
    %376 = vector.shape_cast %375 : vector<2x32xf32> to vector<1x2x32xf32>
    %377 = vector.broadcast %376 : vector<1x2x32xf32> to vector<8x2x32xf32>
    %378 = arith.divf %374, %377 : vector<8x2x32xf32>
    %c0_123 = arith.constant 0 : index
    %c0_124 = arith.constant 0 : index
    %c0_125 = arith.constant 0 : index
    %379 = vector.load %arg10[%c0_123, %c0_124, %c0_125] : memref<8x2x32xf32, #tpu.memory_space<vmem>>, vector<8x2x32xf32>
    tpu.vector_store %arg10[%c0_123, %c0_124, %c0_125], %378 {strides = array<i32>} : memref<8x2x32xf32, #tpu.memory_space<vmem>>, vector<8x2x32xf32>,
    return
  }
}

</mosaic_0001>

<llo_original>
// kernel: seq_model_forward.1
$region0: #{seq_model_forward.1}
  #allocation0 [shape = 'u32[]', space=smem, size = 0x4, offset = 0x4, fixed_abs, tag = 'smem constant byte address 0x4 - core index']
  #allocation1 [shape = 'u32[72,128]{1,0:T(1,128)}', space=vmem, size = 0x9000, scoped, tag = 'internal scratch']
  #allocation2 [shape = 'f32[16,1024]{1,0:T(8,128)}', space=vmem, size = 0x10000, scoped, tag = 'scratch operand']
  #allocation3 [shape = 'f32[16,128]{1,0:T(8,128)}', space=vmem, size = 0x2000, scoped, tag = 'scratch operand']
  #allocation4 [shape = 'f32[16,128]{1,0:T(8,128)}', space=vmem, size = 0x2000, scoped, tag = 'scratch operand']
  %s0 = inlined_call_operand.vmem [shape: bf16[16,50], index: 0, kind: input, shape index: {}]
  %s1 = inlined_call_operand.hbm [shape: bf16[50,1024], index: 1, kind: input, shape index: {}]
  %s2 = inlined_call_operand.vmem [shape: f32[1,1024], index: 2, kind: input, shape index: {}]
  %s3 = inlined_call_operand.hbm [shape: bf16[128,512], index: 3, kind: input, shape index: {}]
  %s4 = inlined_call_operand.hbm [shape: bf16[128,512], index: 4, kind: input, shape index: {}]
  %s5 = inlined_call_operand.hbm [shape: bf16[128,32], index: 5, kind: input, shape index: {}]
  %s6 = inlined_call_operand.hbm [shape: bf16[128,32], index: 6, kind: input, shape index: {}]
  %s7 = inlined_call_operand.vmem [shape: f32[1,32], index: 7, kind: input, shape index: {}]
  %s8 = inlined_call_operand.vmem [shape: bf16[32,32], index: 8, kind: input, shape index: {}]
  %s9 = inlined_call_operand.vmem [shape: f32[1,32], index: 9, kind: input, shape index: {}]
  %s10 = inlined_call_operand.vmem [shape: f32[8,2,32], index: 10, kind: output, shape index: {}]
  %s11 = sld [smem:[#allocation0]]
  $region70: #{seq_model_forward.1} parent=0
    _
  %s13 = ssub.s32 1, %s11
  %s14 = scalar_select 0, %s13, %s11
  $region1: #{seq_model_forward.1} parent=0
    #allocation5 [shape = 'u8[114688]{0}', space=vmem, size = 0x1c000, scoped, tag = 'input window, operand 1, single buffered']
    #allocation6 [shape = 's32[1]{0}', space=sflag, size = 0x4, scoped, tag = 'scoped memory for seq_model_forward.1']
    #allocation7 [shape = 'u8[131072]{0}', space=vmem, size = 0x20000, scoped, tag = 'input window, operand 3, single buffered']
    #allocation8 [shape = 's32[1]{0}', space=sflag, size = 0x4, scoped, tag = 'scoped memory for seq_model_forward.1']
    #allocation9 [shape = 'u8[131072]{0}', space=vmem, size = 0x20000, scoped, tag = 'input window, operand 4, single buffered']
    #allocation10 [shape = 'u8[32768]{0}', space=vmem, size = 0x8000, scoped, tag = 'input window, operand 5, single buffered']
    #allocation11 [shape = 's32[1]{0}', space=sflag, size = 0x4, scoped, tag = 'scoped memory for seq_model_forward.1']
    #allocation12 [shape = 'u8[32768]{0}', space=vmem, size = 0x8000, scoped, tag = 'input window, operand 6, single buffered']
    %15 = vsyncpa [#allocation6], 0
    %16 = vsyncpa [#allocation8], 0
    %17 = vsyncpa [#allocation11], 0
    // Predicated region
    $region2: #{seq_model_forward.1} parent=1 // pred_check
      _
    $region3: #{seq_model_forward.1} parent=1 // pred_check_branch
      %19 = sbr.rel (0) target = $region5
    $region4: #{seq_model_forward.1} parent=1 // pred_region
      _
    $region5: #{seq_model_forward.1} parent=1 // pred_fallthru
      _
    // Predicated region
    $region6: #{seq_model_forward.1} parent=1 // pred_check
      _
    $region7: #{seq_model_forward.1} parent=1 // pred_check_branch
      %21 = sbr.rel (0) target = $region9
    $region8: #{seq_model_forward.1} parent=1 // pred_region
      %23 = vsyncadd [#allocation6], 0
      %s24 = sshll.u32 %s1, 4
      %s25 = int_to_ptr.hbm [resolvable:$true] %s24
      %s26 = sshll.u32 [#allocation5], 4
      %s27 = int_to_ptr.vmem [resolvable:$true] %s26
      %32 = dma.hbm_to_vmem [thread:$0]  %s25, 3584, %s27, [#allocation6], 512, 512, 32
    $region9: #{seq_model_forward.1} parent=1 // pred_fallthru
      _
    // Predicated region
    $region10: #{seq_model_forward.1} parent=1 // pred_check
      _
    $region11: #{seq_model_forward.1} parent=1 // pred_check_branch
      %34 = sbr.rel (0) target = $region13
    $region12: #{seq_model_forward.1} parent=1 // pred_region
      _
    $region13: #{seq_model_forward.1} parent=1 // pred_fallthru
      _
    // Predicated region
    $region14: #{seq_model_forward.1} parent=1 // pred_check
      _
    $region15: #{seq_model_forward.1} parent=1 // pred_check_branch
      %36 = sbr.rel (0) target = $region17
    $region16: #{seq_model_forward.1} parent=1 // pred_region
      %38 = vsyncadd [#allocation8], 0
      %s39 = sshll.u32 %s3, 4
      %s40 = int_to_ptr.hbm [resolvable:$true] %s39
      %s41 = sshll.u32 [#allocation7], 4
      %s42 = int_to_ptr.vmem [resolvable:$true] %s41
      %47 = dma.hbm_to_vmem [thread:$0]  %s40, 4096, %s42, [#allocation8], 256, 256, 16
    $region17: #{seq_model_forward.1} parent=1 // pred_fallthru
      _
    // Predicated region
    $region18: #{seq_model_forward.1} parent=1 // pred_check
      _
    $region19: #{seq_model_forward.1} parent=1 // pred_check_branch
      %49 = sbr.rel (0) target = $region21
    $region20: #{seq_model_forward.1} parent=1 // pred_region
      %51 = vsyncadd [#allocation8], 0
      %s52 = sshll.u32 %s4, 4
      %s53 = int_to_ptr.hbm [resolvable:$true] %s52
      %s54 = sshll.u32 [#allocation9], 4
      %s55 = int_to_ptr.vmem [resolvable:$true] %s54
      %60 = dma.hbm_to_vmem [thread:$0]  %s53, 4096, %s55, [#allocation8], 256, 256, 16
    $region21: #{seq_model_forward.1} parent=1 // pred_fallthru
      _
    // Predicated region
    $region22: #{seq_model_forward.1} parent=1 // pred_check
      _
    $region23: #{seq_model_forward.1} parent=1 // pred_check_branch
      %62 = sbr.rel (0) target = $region25
    $region24: #{seq_model_forward.1} parent=1 // pred_region
      %64 = vsyncadd [#allocation11], 0
      %s65 = sshll.u32 %s5, 4
      %s66 = int_to_ptr.hbm [resolvable:$true] %s65
      %s67 = sshll.u32 [#allocation10], 4
      %s68 = int_to_ptr.vmem [resolvable:$true] %s67
      %73 = dma.hbm_to_vmem [thread:$0]  %s66, 1024, %s68, [#allocation11], 64, 64, 4
    $region25: #{seq_model_forward.1} parent=1 // pred_fallthru
      _
    // Predicated region
    $region26: #{seq_model_forward.1} parent=1 // pred_check
      _
    $region27: #{seq_model_forward.1} parent=1 // pred_check_branch
      %75 = sbr.rel (0) target = $region29
    $region28: #{seq_model_forward.1} parent=1 // pred_region
      %77 = vsyncadd [#allocation11], 0
      %s78 = sshll.u32 %s6, 4
      %s79 = int_to_ptr.hbm [resolvable:$true] %s78
      %s80 = sshll.u32 [#allocation12], 4
      %s81 = int_to_ptr.vmem [resolvable:$true] %s80
      %86 = dma.hbm_to_vmem [thread:$0]  %s79, 1024, %s81, [#allocation11], 64, 64, 4
    $region29: #{seq_model_forward.1} parent=1 // pred_fallthru
      _
    // Predicated region
    $region30: #{seq_model_forward.1} parent=1 // pred_check
      _
    $region31: #{seq_model_forward.1} parent=1 // pred_check_branch
      %88 = sbr.rel (0) target = $region33
    $region32: #{seq_model_forward.1} parent=1 // pred_region
      _
    $region33: #{seq_model_forward.1} parent=1 // pred_fallthru
      _
    // Predicated region
    $region34: #{seq_model_forward.1} parent=1 // pred_check
      _
    $region35: #{seq_model_forward.1} parent=1 // pred_check_branch
      %90 = sbr.rel (0) target = $region37
    $region36: #{seq_model_forward.1} parent=1 // pred_region
      _
    $region37: #{seq_model_forward.1} parent=1 // pred_fallthru
      _
    // Predicated region
    $region38: #{seq_model_forward.1} parent=1 // pred_check
      _
    $region39: #{seq_model_forward.1} parent=1 // pred_check_branch
      %92 = sbr.rel (0) target = $region41
    $region40: #{seq_model_forward.1} parent=1 // pred_region
      _
    $region41: #{seq_model_forward.1} parent=1 // pred_fallthru
      _
    // Predicated region
    $region42: #{seq_model_forward.1} parent=1 // pred_check
      _
    $region43: #{seq_model_forward.1} parent=1 // pred_check_branch
      %94 = sbr.rel (0) target = $region45
    $region44: #{seq_model_forward.1} parent=1 // pred_region
      %96 = dma.done [#allocation6], 3584
    $region45: #{seq_model_forward.1} parent=1 // pred_fallthru
      _
    // Predicated region
    $region46: #{seq_model_forward.1} parent=1 // pred_check
      _
    $region47: #{seq_model_forward.1} parent=1 // pred_check_branch
      %98 = sbr.rel (0) target = $region49
    $region48: #{seq_model_forward.1} parent=1 // pred_region
      %100 = dma.done [#allocation8], 4096
    $region49: #{seq_model_forward.1} parent=1 // pred_fallthru
      _
    // Predicated region
    $region50: #{seq_model_forward.1} parent=1 // pred_check
      _
    $region51: #{seq_model_forward.1} parent=1 // pred_check_branch
      %102 = sbr.rel (0) target = $region53
    $region52: #{seq_model_forward.1} parent=1 // pred_region
      %104 = dma.done [#allocation8], 4096
    $region53: #{seq_model_forward.1} parent=1 // pred_fallthru
      _
    // Predicated region
    $region54: #{seq_model_forward.1} parent=1 // pred_check
      _
    $region55: #{seq_model_forward.1} parent=1 // pred_check_branch
      %106 = sbr.rel (0) target = $region57
    $region56: #{seq_model_forward.1} parent=1 // pred_region
      %108 = dma.done [#allocation11], 1024
    $region57: #{seq_model_forward.1} parent=1 // pred_fallthru
      _
    // Predicated region
    $region58: #{seq_model_forward.1} parent=1 // pred_check
      _
    $region59: #{seq_model_forward.1} parent=1 // pred_check_branch
      %110 = sbr.rel (0) target = $region61
    $region60: #{seq_model_forward.1} parent=1 // pred_region
      %112 = dma.done [#allocation11], 1024
    $region61: #{seq_model_forward.1} parent=1 // pred_fallthru
      _
    %v114 = vld [vmem:[%s0] sm:$0xf]
    %v115 = vld [vmem:[%s0 + $0x4] sm:$0xf]
    %v116 = vld [vmem:[#allocation5] sm:$0xff]
    %v117 = vld [vmem:[#allocation5 + $0x8] sm:$0xff]
    %v118 = vld [vmem:[#allocation5 + $0x10] sm:$0xff]
    %v119 = vld [vmem:[#allocation5 + $0x18] sm:$0xff]
    %v120 = vld [vmem:[#allocation5 + $0x20] sm:$0xff]
    %v121 = vld [vmem:[#allocation5 + $0x28] sm:$0xff]
    %v122 = vld [vmem:[#allocation5 + $0x30] sm:$0xff]
    %v123 = vld [vmem:[#allocation5 + $0x38] sm:$0xff]
    %v124 = vld [vmem:[#allocation5 + $0x40] sm:$0xff]
    %v125 = vld [vmem:[#allocation5 + $0x48] sm:$0xff]
    %v126 = vld [vmem:[#allocation5 + $0x50] sm:$0xff]
    %v127 = vld [vmem:[#allocation5 + $0x58] sm:$0xff]
    %v128 = vld [vmem:[#allocation5 + $0x60] sm:$0xff]
    %v129 = vld [vmem:[#allocation5 + $0x68] sm:$0xff]
    %v130 = vld [vmem:[#allocation5 + $0x70] sm:$0xff]
    %v131 = vld [vmem:[#allocation5 + $0x78] sm:$0xff]
    %v132 = vld [vmem:[#allocation5 + $0x80] sm:$0xff]
    %v133 = vld [vmem:[#allocation5 + $0x88] sm:$0xff]
    %v134 = vld [vmem:[#allocation5 + $0x90] sm:$0xff]
    %v135 = vld [vmem:[#allocation5 + $0x98] sm:$0xff]
    %v136 = vld [vmem:[#allocation5 + $0xa0] sm:$0xff]
    %v137 = vld [vmem:[#allocation5 + $0xa8] sm:$0xff]
    %v138 = vld [vmem:[#allocation5 + $0xb0] sm:$0xff]
    %v139 = vld [vmem:[#allocation5 + $0xb8] sm:$0xff]
    %v140 = vld [vmem:[#allocation5 + $0xc0] sm:$0x11]
    %v141 = vld [vmem:[#allocation5 + $0xc8] sm:$0x11]
    %v142 = vld [vmem:[#allocation5 + $0xd0] sm:$0x11]
    %v143 = vld [vmem:[#allocation5 + $0xd8] sm:$0x11]
    %v144 = vld [vmem:[%s2] sm:$0xff]
    %v146 = vperm.slane %v144, 0
    %v147 = vperm.slane %v144, 1
    %v148 = vperm.slane %v144, 2
    %v149 = vperm.slane %v144, 3
    %v150 = vperm.slane %v144, 4
    %v151 = vperm.slane %v144, 5
    %v152 = vperm.slane %v144, 6
    %v153 = vperm.slane %v144, 7
    %v164 = vunpack.c.l.b16 %v114
    %v165 = vunpack.c.l.b16 %v115
    %v166 = vpack.c.b16 %v165, %v164
    %v195 = vunpack.c.l.b16 %v116
    %v196 = vunpack.c.h.b16 %v116
    %v197 = vunpack.c.l.b16 %v117
    %v198 = vunpack.c.h.b16 %v117
    %v199 = vunpack.c.l.b16 %v118
    %v200 = vunpack.c.h.b16 %v118
    %v201 = vunpack.c.l.b16 %v119
    %v202 = vunpack.c.h.b16 %v119
    %v203 = vunpack.c.l.b16 %v120
    %v204 = vunpack.c.h.b16 %v120
    %v205 = vunpack.c.l.b16 %v121
    %v206 = vunpack.c.h.b16 %v121
    %v207 = vunpack.c.l.b16 %v122
    %v208 = vunpack.c.h.b16 %v122
    %v209 = vunpack.c.l.b16 %v123
    %v210 = vunpack.c.h.b16 %v123
    %v211 = vunpack.c.l.b16 %v124
    %v212 = vunpack.c.h.b16 %v124
    %v213 = vunpack.c.l.b16 %v125
    %v214 = vunpack.c.h.b16 %v125
    %v215 = vunpack.c.l.b16 %v126
    %v216 = vunpack.c.h.b16 %v126
    %v217 = vunpack.c.l.b16 %v127
    %v218 = vunpack.c.h.b16 %v127
    %v219 = vunpack.c.l.b16 %v128
    %v220 = vunpack.c.h.b16 %v128
    %v221 = vunpack.c.l.b16 %v129
    %v222 = vunpack.c.h.b16 %v129
    %v223 = vunpack.c.l.b16 %v130
    %v224 = vunpack.c.h.b16 %v130
    %v225 = vunpack.c.l.b16 %v131
    %v226 = vunpack.c.h.b16 %v131
    %v227 = vunpack.c.l.b16 %v132
    %v228 = vunpack.c.h.b16 %v132
    %v229 = vunpack.c.l.b16 %v133
    %v230 = vunpack.c.h.b16 %v133
    %v231 = vunpack.c.l.b16 %v134
    %v232 = vunpack.c.h.b16 %v134
    %v233 = vunpack.c.l.b16 %v135
    %v234 = vunpack.c.h.b16 %v135
    %v235 = vunpack.c.l.b16 %v136
    %v236 = vunpack.c.h.b16 %v136
    %v237 = vunpack.c.l.b16 %v137
    %v238 = vunpack.c.h.b16 %v137
    %v239 = vunpack.c.l.b16 %v138
    %v240 = vunpack.c.h.b16 %v138
    %v241 = vunpack.c.l.b16 %v139
    %v242 = vunpack.c.h.b16 %v139
    %v243 = vunpack.c.l.b16 %v140
    %v244 = vunpack.c.h.b16 %v140
    %v245 = vunpack.c.l.b16 %v141
    %v246 = vunpack.c.h.b16 %v141
    %v247 = vunpack.c.l.b16 %v142
    %v248 = vunpack.c.h.b16 %v142
    %v249 = vunpack.c.l.b16 %v143
    %v250 = vunpack.c.h.b16 %v143
    %v251 = vpack.c.b16 %v203, %v195
    %v252 = vpack.c.b16 %v204, %v196
    %v253 = vpack.c.b16 %v205, %v197
    %v254 = vpack.c.b16 %v206, %v198
    %v255 = vpack.c.b16 %v207, %v199
    %v256 = vpack.c.b16 %v208, %v200
    %v257 = vpack.c.b16 %v209, %v201
    %v258 = vpack.c.b16 %v210, %v202
    %v259 = vpack.c.b16 %v219, %v211
    %v260 = vpack.c.b16 %v220, %v212
    %v261 = vpack.c.b16 %v221, %v213
    %v262 = vpack.c.b16 %v222, %v214
    %v263 = vpack.c.b16 %v223, %v215
    %v264 = vpack.c.b16 %v224, %v216
    %v265 = vpack.c.b16 %v225, %v217
    %v266 = vpack.c.b16 %v226, %v218
    %v267 = vpack.c.b16 %v235, %v227
    %v268 = vpack.c.b16 %v236, %v228
    %v269 = vpack.c.b16 %v237, %v229
    %v270 = vpack.c.b16 %v238, %v230
    %v271 = vpack.c.b16 %v239, %v231
    %v272 = vpack.c.b16 %v240, %v232
    %v273 = vpack.c.b16 %v241, %v233
    %v274 = vpack.c.b16 %v242, %v234
    %v275 = vpack.c.b16 %v243, %v243
    %v276 = vpack.c.b16 %v244, %v244
    %v277 = vpack.c.b16 %v245, %v245
    %v278 = vpack.c.b16 %v246, %v246
    %v279 = vpack.c.b16 %v247, %v247
    %v280 = vpack.c.b16 %v248, %v248
    %v281 = vpack.c.b16 %v249, %v249
    %v282 = vpack.c.b16 %v250, %v250
    %vm307 = vcmask 408576
    %v309 = vsel %vm307, %v166, 0
    %vm311 = vcmask 1040384
    %v313 = vsel %vm311, %v275, 0
    %v316 = vsel %vm311, %v276, 0
    %v319 = vsel %vm311, %v277, 0
    %v322 = vsel %vm311, %v278, 0
    %v325 = vsel %vm311, %v279, 0
    %v328 = vsel %vm311, %v280, 0
    %v331 = vsel %vm311, %v281, 0
    %v334 = vsel %vm311, %v282, 0
    %336 = vmatpush.bf16.msra.mxu0 0
    %337 = vmatpush.bf16.msra.mxu0 0
    %338 = vmatpush.bf16.msra.mxu0 0
    %339 = vmatpush.bf16.msra.mxu0 0
    %340 = vmatpush.bf16.msra.mxu0 %v313
    %341 = vmatpush.bf16.msra.mxu0 %v267
    %342 = vmatpush.bf16.msra.mxu0 %v259
    %343 = vmatpush.bf16.msra.mxu0 %v251
    %344 = vmatmul.bf16.gmra.mxu0 %v309
    %v345 = vpop.f32.mrf.mxu0
    %v346 = vadd.f32 %v146, %v345
    %v347 = vpop.f32.mrf.mxu0
    %v348 = vadd.f32 %v146, %v347
    %349 = vdwg.mxu0
    %350 = vmatpush.bf16.msra.mxu0 0
    %351 = vmatpush.bf16.msra.mxu0 0
    %352 = vmatpush.bf16.msra.mxu0 0
    %353 = vmatpush.bf16.msra.mxu0 0
    %354 = vmatpush.bf16.msra.mxu0 %v316
    %355 = vmatpush.bf16.msra.mxu0 %v268
    %356 = vmatpush.bf16.msra.mxu0 %v260
    %357 = vmatpush.bf16.msra.mxu0 %v252
    %358 = vmatmul.bf16.gmra.mxu0 %v309
    %v359 = vpop.f32.mrf.mxu0
    %v360 = vadd.f32 %v147, %v359
    %v361 = vpop.f32.mrf.mxu0
    %v362 = vadd.f32 %v147, %v361
    %363 = vdwg.mxu0
    %364 = vmatpush.bf16.msra.mxu0 0
    %365 = vmatpush.bf16.msra.mxu0 0
    %366 = vmatpush.bf16.msra.mxu0 0
    %367 = vmatpush.bf16.msra.mxu0 0
    %368 = vmatpush.bf16.msra.mxu0 %v319
    %369 = vmatpush.bf16.msra.mxu0 %v269
    %370 = vmatpush.bf16.msra.mxu0 %v261
    %371 = vmatpush.bf16.msra.mxu0 %v253
    %372 = vmatmul.bf16.gmra.mxu0 %v309
    %v373 = vpop.f32.mrf.mxu0
    %v374 = vadd.f32 %v148, %v373
    %v375 = vpop.f32.mrf.mxu0
    %v376 = vadd.f32 %v148, %v375
    %377 = vdwg.mxu0
    %378 = vmatpush.bf16.msra.mxu0 0
    %379 = vmatpush.bf16.msra.mxu0 0
    %380 = vmatpush.bf16.msra.mxu0 0
    %381 = vmatpush.bf16.msra.mxu0 0
    %382 = vmatpush.bf16.msra.mxu0 %v322
    %383 = vmatpush.bf16.msra.mxu0 %v270
    %384 = vmatpush.bf16.msra.mxu0 %v262
    %385 = vmatpush.bf16.msra.mxu0 %v254
    %386 = vmatmul.bf16.gmra.mxu0 %v309
    %v387 = vpop.f32.mrf.mxu0
    %v388 = vadd.f32 %v149, %v387
    %v389 = vpop.f32.mrf.mxu0
    %v390 = vadd.f32 %v149, %v389
    %391 = vdwg.mxu0
    %392 = vmatpush.bf16.msra.mxu0 0
    %393 = vmatpush.bf16.msra.mxu0 0
    %394 = vmatpush.bf16.msra.mxu0 0
    %395 = vmatpush.bf16.msra.mxu0 0
    %396 = vmatpush.bf16.msra.mxu0 %v325
    %397 = vmatpush.bf16.msra.mxu0 %v271
    %398 = vmatpush.bf16.msra.mxu0 %v263
    %399 = vmatpush.bf16.msra.mxu0 %v255
    %400 = vmatmul.bf16.gmra.mxu0 %v309
    %v401 = vpop.f32.mrf.mxu0
    %v402 = vadd.f32 %v150, %v401
    %v403 = vpop.f32.mrf.mxu0
    %v404 = vadd.f32 %v150, %v403
    %405 = vdwg.mxu0
    %406 = vmatpush.bf16.msra.mxu0 0
    %407 = vmatpush.bf16.msra.mxu0 0
    %408 = vmatpush.bf16.msra.mxu0 0
    %409 = vmatpush.bf16.msra.mxu0 0
    %410 = vmatpush.bf16.msra.mxu0 %v328
    %411 = vmatpush.bf16.msra.mxu0 %v272
    %412 = vmatpush.bf16.msra.mxu0 %v264
    %413 = vmatpush.bf16.msra.mxu0 %v256
    %414 = vmatmul.bf16.gmra.mxu0 %v309
    %v415 = vpop.f32.mrf.mxu0
    %v416 = vadd.f32 %v151, %v415
    %v417 = vpop.f32.mrf.mxu0
    %v418 = vadd.f32 %v151, %v417
    %419 = vdwg.mxu0
    %420 = vmatpush.bf16.msra.mxu0 0
    %421 = vmatpush.bf16.msra.mxu0 0
    %422 = vmatpush.bf16.msra.mxu0 0
    %423 = vmatpush.bf16.msra.mxu0 0
    %424 = vmatpush.bf16.msra.mxu0 %v331
    %425 = vmatpush.bf16.msra.mxu0 %v273
    %426 = vmatpush.bf16.msra.mxu0 %v265
    %427 = vmatpush.bf16.msra.mxu0 %v257
    %428 = vmatmul.bf16.gmra.mxu0 %v309
    %v429 = vpop.f32.mrf.mxu0
    %v430 = vadd.f32 %v152, %v429
    %v431 = vpop.f32.mrf.mxu0
    %v432 = vadd.f32 %v152, %v431
    %433 = vdwg.mxu0
    %434 = vmatpush.bf16.msra.mxu0 0
    %435 = vmatpush.bf16.msra.mxu0 0
    %436 = vmatpush.bf16.msra.mxu0 0
    %437 = vmatpush.bf16.msra.mxu0 0
    %438 = vmatpush.bf16.msra.mxu0 %v334
    %439 = vmatpush.bf16.msra.mxu0 %v274
    %440 = vmatpush.bf16.msra.mxu0 %v266
    %441 = vmatpush.bf16.msra.mxu0 %v258
    %442 = vmatmul.bf16.gmra.mxu0 %v309
    %v443 = vpop.f32.mrf.mxu0
    %v444 = vadd.f32 %v153, %v443
    %v445 = vpop.f32.mrf.mxu0
    %v446 = vadd.f32 %v153, %v445
    %447 = vdwg.mxu0
    %448 = vst [vmem:[#allocation2] sm:$0xff] %v346
    %449 = vst [vmem:[#allocation2 + $0x8] sm:$0xff] %v360
    %450 = vst [vmem:[#allocation2 + $0x10] sm:$0xff] %v374
    %451 = vst [vmem:[#allocation2 + $0x18] sm:$0xff] %v388
    %452 = vst [vmem:[#allocation2 + $0x20] sm:$0xff] %v402
    %453 = vst [vmem:[#allocation2 + $0x28] sm:$0xff] %v416
    %454 = vst [vmem:[#allocation2 + $0x30] sm:$0xff] %v430
    %455 = vst [vmem:[#allocation2 + $0x38] sm:$0xff] %v444
    %456 = vst [vmem:[#allocation2 + $0x40] sm:$0xff] %v348
    %457 = vst [vmem:[#allocation2 + $0x48] sm:$0xff] %v362
    %458 = vst [vmem:[#allocation2 + $0x50] sm:$0xff] %v376
    %459 = vst [vmem:[#allocation2 + $0x58] sm:$0xff] %v390
    %460 = vst [vmem:[#allocation2 + $0x60] sm:$0xff] %v404
    %461 = vst [vmem:[#allocation2 + $0x68] sm:$0xff] %v418
    %462 = vst [vmem:[#allocation2 + $0x70] sm:$0xff] %v432
    %463 = vst [vmem:[#allocation2 + $0x78] sm:$0xff] %v446
    %v464 = vld [vmem:[#allocation7] sm:$0xff]
    %v465 = vld [vmem:[#allocation7 + $0x8] sm:$0xff]
    %v466 = vld [vmem:[#allocation7 + $0x10] sm:$0xff]
    %v467 = vld [vmem:[#allocation7 + $0x18] sm:$0xff]
    %v468 = vld [vmem:[#allocation7 + $0x20] sm:$0xff]
    %v469 = vld [vmem:[#allocation7 + $0x28] sm:$0xff]
    %v470 = vld [vmem:[#allocation7 + $0x30] sm:$0xff]
    %v471 = vld [vmem:[#allocation7 + $0x38] sm:$0xff]
    %v472 = vld [vmem:[#allocation7 + $0x40] sm:$0xff]
    %v473 = vld [vmem:[#allocation7 + $0x48] sm:$0xff]
    %v474 = vld [vmem:[#allocation7 + $0x50] sm:$0xff]
    %v475 = vld [vmem:[#allocation7 + $0x58] sm:$0xff]
    %v476 = vld [vmem:[#allocation7 + $0x60] sm:$0xff]
    %v477 = vld [vmem:[#allocation7 + $0x68] sm:$0xff]
    %v478 = vld [vmem:[#allocation7 + $0x70] sm:$0xff]
    %v479 = vld [vmem:[#allocation7 + $0x78] sm:$0xff]
    %v480 = vld [vmem:[#allocation7 + $0x80] sm:$0xff]
    %v481 = vld [vmem:[#allocation7 + $0x88] sm:$0xff]
    %v482 = vld [vmem:[#allocation7 + $0x90] sm:$0xff]
    %v483 = vld [vmem:[#allocation7 + $0x98] sm:$0xff]
    %v484 = vld [vmem:[#allocation7 + $0xa0] sm:$0xff]
    %v485 = vld [vmem:[#allocation7 + $0xa8] sm:$0xff]
    %v486 = vld [vmem:[#allocation7 + $0xb0] sm:$0xff]
    %v487 = vld [vmem:[#allocation7 + $0xb8] sm:$0xff]
    %v488 = vld [vmem:[#allocation7 + $0xc0] sm:$0xff]
    %v489 = vld [vmem:[#allocation7 + $0xc8] sm:$0xff]
    %v490 = vld [vmem:[#allocation7 + $0xd0] sm:$0xff]
    %v491 = vld [vmem:[#allocation7 + $0xd8] sm:$0xff]
    %v492 = vld [vmem:[#allocation7 + $0xe0] sm:$0xff]
    %v493 = vld [vmem:[#allocation7 + $0xe8] sm:$0xff]
    %v494 = vld [vmem:[#allocation7 + $0xf0] sm:$0xff]
    %v495 = vld [vmem:[#allocation7 + $0xf8] sm:$0xff]
    %v496 = vld [vmem:[#allocation9] sm:$0xff]
    %v497 = vld [vmem:[#allocation9 + $0x8] sm:$0xff]
    %v498 = vld [vmem:[#allocation9 + $0x10] sm:$0xff]
    %v499 = vld [vmem:[#allocation9 + $0x18] sm:$0xff]
    %v500 = vld [vmem:[#allocation9 + $0x20] sm:$0xff]
    %v501 = vld [vmem:[#allocation9 + $0x28] sm:$0xff]
    %v502 = vld [vmem:[#allocation9 + $0x30] sm:$0xff]
    %v503 = vld [vmem:[#allocation9 + $0x38] sm:$0xff]
    %v504 = vld [vmem:[#allocation9 + $0x40] sm:$0xff]
    %v505 = vld [vmem:[#allocation9 + $0x48] sm:$0xff]
    %v506 = vld [vmem:[#allocation9 + $0x50] sm:$0xff]
    %v507 = vld [vmem:[#allocation9 + $0x58] sm:$0xff]
    %v508 = vld [vmem:[#allocation9 + $0x60] sm:$0xff]
    %v509 = vld [vmem:[#allocation9 + $0x68] sm:$0xff]
    %v510 = vld [vmem:[#allocation9 + $0x70] sm:$0xff]
    %v511 = vld [vmem:[#allocation9 + $0x78] sm:$0xff]
    %v512 = vld [vmem:[#allocation9 + $0x80] sm:$0xff]
    %v513 = vld [vmem:[#allocation9 + $0x88] sm:$0xff]
    %v514 = vld [vmem:[#allocation9 + $0x90] sm:$0xff]
    %v515 = vld [vmem:[#allocation9 + $0x98] sm:$0xff]
    %v516 = vld [vmem:[#allocation9 + $0xa0] sm:$0xff]
    %v517 = vld [vmem:[#allocation9 + $0xa8] sm:$0xff]
    %v518 = vld [vmem:[#allocation9 + $0xb0] sm:$0xff]
    %v519 = vld [vmem:[#allocation9 + $0xb8] sm:$0xff]
    %v520 = vld [vmem:[#allocation9 + $0xc0] sm:$0xff]
    %v521 = vld [vmem:[#allocation9 + $0xc8] sm:$0xff]
    %v522 = vld [vmem:[#allocation9 + $0xd0] sm:$0xff]
    %v523 = vld [vmem:[#allocation9 + $0xd8] sm:$0xff]
    %v524 = vld [vmem:[#allocation9 + $0xe0] sm:$0xff]
    %v525 = vld [vmem:[#allocation9 + $0xe8] sm:$0xff]
    %v526 = vld [vmem:[#allocation9 + $0xf0] sm:$0xff]
    %v527 = vld [vmem:[#allocation9 + $0xf8] sm:$0xff]
    %v528 = vld [vmem:[#allocation2] sm:$0x3]
    %v529 = vld [vmem:[#allocation2 + $0x8] sm:$0x3]
    %v530 = vld [vmem:[#allocation2 + $0x10] sm:$0x3]
    %v531 = vld [vmem:[#allocation2 + $0x18] sm:$0x3]
    %v564 = vunpack.c.l.b16 %v464
    %v565 = vunpack.c.h.b16 %v464
    %v566 = vunpack.c.l.b16 %v465
    %v567 = vunpack.c.h.b16 %v465
    %v568 = vunpack.c.l.b16 %v466
    %v569 = vunpack.c.h.b16 %v466
    %v570 = vunpack.c.l.b16 %v467
    %v571 = vunpack.c.h.b16 %v467
    %v572 = vunpack.c.l.b16 %v468
    %v573 = vunpack.c.h.b16 %v468
    %v574 = vunpack.c.l.b16 %v469
    %v575 = vunpack.c.h.b16 %v469
    %v576 = vunpack.c.l.b16 %v470
    %v577 = vunpack.c.h.b16 %v470
    %v578 = vunpack.c.l.b16 %v471
    %v579 = vunpack.c.h.b16 %v471
    %v580 = vunpack.c.l.b16 %v472
    %v581 = vunpack.c.h.b16 %v472
    %v582 = vunpack.c.l.b16 %v473
    %v583 = vunpack.c.h.b16 %v473
    %v584 = vunpack.c.l.b16 %v474
    %v585 = vunpack.c.h.b16 %v474
    %v586 = vunpack.c.l.b16 %v475
    %v587 = vunpack.c.h.b16 %v475
    %v588 = vunpack.c.l.b16 %v476
    %v589 = vunpack.c.h.b16 %v476
    %v590 = vunpack.c.l.b16 %v477
    %v591 = vunpack.c.h.b16 %v477
    %v592 = vunpack.c.l.b16 %v478
    %v593 = vunpack.c.h.b16 %v478
    %v594 = vunpack.c.l.b16 %v479
    %v595 = vunpack.c.h.b16 %v479
    %v596 = vunpack.c.l.b16 %v480
    %v597 = vunpack.c.h.b16 %v480
    %v598 = vunpack.c.l.b16 %v481
    %v599 = vunpack.c.h.b16 %v481
    %v600 = vunpack.c.l.b16 %v482
    %v601 = vunpack.c.h.b16 %v482
    %v602 = vunpack.c.l.b16 %v483
    %v603 = vunpack.c.h.b16 %v483
    %v604 = vunpack.c.l.b16 %v484
    %v605 = vunpack.c.h.b16 %v484
    %v606 = vunpack.c.l.b16 %v485
    %v607 = vunpack.c.h.b16 %v485
    %v608 = vunpack.c.l.b16 %v486
    %v609 = vunpack.c.h.b16 %v486
    %v610 = vunpack.c.l.b16 %v487
    %v611 = vunpack.c.h.b16 %v487
    %v612 = vunpack.c.l.b16 %v488
    %v613 = vunpack.c.h.b16 %v488
    %v614 = vunpack.c.l.b16 %v489
    %v615 = vunpack.c.h.b16 %v489
    %v616 = vunpack.c.l.b16 %v490
    %v617 = vunpack.c.h.b16 %v490
    %v618 = vunpack.c.l.b16 %v491
    %v619 = vunpack.c.h.b16 %v491
    %v620 = vunpack.c.l.b16 %v492
    %v621 = vunpack.c.h.b16 %v492
    %v622 = vunpack.c.l.b16 %v493
    %v623 = vunpack.c.h.b16 %v493
    %v624 = vunpack.c.l.b16 %v494
    %v625 = vunpack.c.h.b16 %v494
    %v626 = vunpack.c.l.b16 %v495
    %v627 = vunpack.c.h.b16 %v495
    %v628 = vpack.c.b16 %v568, %v564
    %v629 = vpack.c.b16 %v569, %v565
    %v630 = vpack.c.b16 %v570, %v566
    %v631 = vpack.c.b16 %v571, %v567
    %v632 = vpack.c.b16 %v576, %v572
    %v633 = vpack.c.b16 %v577, %v573
    %v634 = vpack.c.b16 %v578, %v574
    %v635 = vpack.c.b16 %v579, %v575
    %v636 = vpack.c.b16 %v584, %v580
    %v637 = vpack.c.b16 %v585, %v581
    %v638 = vpack.c.b16 %v586, %v582
    %v639 = vpack.c.b16 %v587, %v583
    %v640 = vpack.c.b16 %v592, %v588
    %v641 = vpack.c.b16 %v593, %v589
    %v642 = vpack.c.b16 %v594, %v590
    %v643 = vpack.c.b16 %v595, %v591
    %v644 = vpack.c.b16 %v600, %v596
    %v645 = vpack.c.b16 %v601, %v597
    %v646 = vpack.c.b16 %v602, %v598
    %v647 = vpack.c.b16 %v603, %v599
    %v648 = vpack.c.b16 %v608, %v604
    %v649 = vpack.c.b16 %v609, %v605
    %v650 = vpack.c.b16 %v610, %v606
    %v651 = vpack.c.b16 %v611, %v607
    %v652 = vpack.c.b16 %v616, %v612
    %v653 = vpack.c.b16 %v617, %v613
    %v654 = vpack.c.b16 %v618, %v614
    %v655 = vpack.c.b16 %v619, %v615
    %v656 = vpack.c.b16 %v624, %v620
    %v657 = vpack.c.b16 %v625, %v621
    %v658 = vpack.c.b16 %v626, %v622
    %v659 = vpack.c.b16 %v627, %v623
    %692 = vmatpush.bf16.msra.mxu0 %v656
    %693 = vmatpush.bf16.msra.mxu0 %v652
    %694 = vmatpush.bf16.msra.mxu0 %v648
    %695 = vmatpush.bf16.msra.mxu0 %v644
    %696 = vmatpush.bf16.msra.mxu0 %v640
    %697 = vmatpush.bf16.msra.mxu0 %v636
    %698 = vmatpush.bf16.msra.mxu0 %v632
    %699 = vmatpush.bf16.msra.mxu0 %v628
    %700 = vmatmul.bf16.gmra.mxu0 0
    %v701 = vpop.f32.mrf.mxu0
    %v702 = vadd.f32 0.0, %v701
    %v703 = vpop.f32.mrf.mxu0
    %704 = vdwg.mxu0
    %705 = vmatpush.bf16.msra.mxu0 %v657
    %706 = vmatpush.bf16.msra.mxu0 %v653
    %707 = vmatpush.bf16.msra.mxu0 %v649
    %708 = vmatpush.bf16.msra.mxu0 %v645
    %709 = vmatpush.bf16.msra.mxu0 %v641
    %710 = vmatpush.bf16.msra.mxu0 %v637
    %711 = vmatpush.bf16.msra.mxu0 %v633
    %712 = vmatpush.bf16.msra.mxu0 %v629
    %713 = vmatmul.bf16.gmra.mxu0 0
    %v714 = vpop.f32.mrf.mxu0
    %v715 = vadd.f32 0.0, %v714
    %v716 = vpop.f32.mrf.mxu0
    %717 = vdwg.mxu0
    %718 = vmatpush.bf16.msra.mxu0 %v658
    %719 = vmatpush.bf16.msra.mxu0 %v654
    %720 = vmatpush.bf16.msra.mxu0 %v650
    %721 = vmatpush.bf16.msra.mxu0 %v646
    %722 = vmatpush.bf16.msra.mxu0 %v642
    %723 = vmatpush.bf16.msra.mxu0 %v638
    %724 = vmatpush.bf16.msra.mxu0 %v634
    %725 = vmatpush.bf16.msra.mxu0 %v630
    %726 = vmatmul.bf16.gmra.mxu0 0
    %v727 = vpop.f32.mrf.mxu0
    %v728 = vadd.f32 0.0, %v727
    %v729 = vpop.f32.mrf.mxu0
    %730 = vdwg.mxu0
    %731 = vmatpush.bf16.msra.mxu0 %v659
    %732 = vmatpush.bf16.msra.mxu0 %v655
    %733 = vmatpush.bf16.msra.mxu0 %v651
    %734 = vmatpush.bf16.msra.mxu0 %v647
    %735 = vmatpush.bf16.msra.mxu0 %v643
    %736 = vmatpush.bf16.msra.mxu0 %v639
    %737 = vmatpush.bf16.msra.mxu0 %v635
    %738 = vmatpush.bf16.msra.mxu0 %v631
    %739 = vmatmul.bf16.gmra.mxu0 0
    %v740 = vpop.f32.mrf.mxu0
    %v741 = vadd.f32 0.0, %v740
    %v742 = vpop.f32.mrf.mxu0
    %743 = vdwg.mxu0
    %v744 = vadd.f32 %v528, %v702
    %v745 = vadd.f32 %v529, %v715
    %v746 = vadd.f32 %v530, %v728
    %v747 = vadd.f32 %v531, %v741
    %v748 = vld [vmem:[#allocation2 + $0x60] sm:$0xc0]
    %v749 = vld [vmem:[#allocation2 + $0x68] sm:$0xc0]
    %v750 = vld [vmem:[#allocation2 + $0x70] sm:$0xc0]
    %v751 = vld [vmem:[#allocation2 + $0x78] sm:$0xc0]
    %v784 = vunpack.c.l.b16 %v496
    %v785 = vunpack.c.h.b16 %v496
    %v786 = vunpack.c.l.b16 %v497
    %v787 = vunpack.c.h.b16 %v497
    %v788 = vunpack.c.l.b16 %v498
    %v789 = vunpack.c.h.b16 %v498
    %v790 = vunpack.c.l.b16 %v499
    %v791 = vunpack.c.h.b16 %v499
    %v792 = vunpack.c.l.b16 %v500
    %v793 = vunpack.c.h.b16 %v500
    %v794 = vunpack.c.l.b16 %v501
    %v795 = vunpack.c.h.b16 %v501
    %v796 = vunpack.c.l.b16 %v502
    %v797 = vunpack.c.h.b16 %v502
    %v798 = vunpack.c.l.b16 %v503
    %v799 = vunpack.c.h.b16 %v503
    %v800 = vunpack.c.l.b16 %v504
    %v801 = vunpack.c.h.b16 %v504
    %v802 = vunpack.c.l.b16 %v505
    %v803 = vunpack.c.h.b16 %v505
    %v804 = vunpack.c.l.b16 %v506
    %v805 = vunpack.c.h.b16 %v506
    %v806 = vunpack.c.l.b16 %v507
    %v807 = vunpack.c.h.b16 %v507
    %v808 = vunpack.c.l.b16 %v508
    %v809 = vunpack.c.h.b16 %v508
    %v810 = vunpack.c.l.b16 %v509
    %v811 = vunpack.c.h.b16 %v509
    %v812 = vunpack.c.l.b16 %v510
    %v813 = vunpack.c.h.b16 %v510
    %v814 = vunpack.c.l.b16 %v511
    %v815 = vunpack.c.h.b16 %v511
    %v816 = vunpack.c.l.b16 %v512
    %v817 = vunpack.c.h.b16 %v512
    %v818 = vunpack.c.l.b16 %v513
    %v819 = vunpack.c.h.b16 %v513
    %v820 = vunpack.c.l.b16 %v514
    %v821 = vunpack.c.h.b16 %v514
    %v822 = vunpack.c.l.b16 %v515
    %v823 = vunpack.c.h.b16 %v515
    %v824 = vunpack.c.l.b16 %v516
    %v825 = vunpack.c.h.b16 %v516
    %v826 = vunpack.c.l.b16 %v517
    %v827 = vunpack.c.h.b16 %v517
    %v828 = vunpack.c.l.b16 %v518
    %v829 = vunpack.c.h.b16 %v518
    %v830 = vunpack.c.l.b16 %v519
    %v831 = vunpack.c.h.b16 %v519
    %v832 = vunpack.c.l.b16 %v520
    %v833 = vunpack.c.h.b16 %v520
    %v834 = vunpack.c.l.b16 %v521
    %v835 = vunpack.c.h.b16 %v521
    %v836 = vunpack.c.l.b16 %v522
    %v837 = vunpack.c.h.b16 %v522
    %v838 = vunpack.c.l.b16 %v523
    %v839 = vunpack.c.h.b16 %v523
    %v840 = vunpack.c.l.b16 %v524
    %v841 = vunpack.c.h.b16 %v524
    %v842 = vunpack.c.l.b16 %v525
    %v843 = vunpack.c.h.b16 %v525
    %v844 = vunpack.c.l.b16 %v526
    %v845 = vunpack.c.h.b16 %v526
    %v846 = vunpack.c.l.b16 %v527
    %v847 = vunpack.c.h.b16 %v527
    %v848 = vpack.c.b16 %v788, %v784
    %v849 = vpack.c.b16 %v789, %v785
    %v850 = vpack.c.b16 %v790, %v786
    %v851 = vpack.c.b16 %v791, %v787
    %v852 = vpack.c.b16 %v796, %v792
    %v853 = vpack.c.b16 %v797, %v793
    %v854 = vpack.c.b16 %v798, %v794
    %v855 = vpack.c.b16 %v799, %v795
    %v856 = vpack.c.b16 %v804, %v800
    %v857 = vpack.c.b16 %v805, %v801
    %v858 = vpack.c.b16 %v806, %v802
    %v859 = vpack.c.b16 %v807, %v803
    %v860 = vpack.c.b16 %v812, %v808
    %v861 = vpack.c.b16 %v813, %v809
    %v862 = vpack.c.b16 %v814, %v810
    %v863 = vpack.c.b16 %v815, %v811
    %v864 = vpack.c.b16 %v820, %v816
    %v865 = vpack.c.b16 %v821, %v817
    %v866 = vpack.c.b16 %v822, %v818
    %v867 = vpack.c.b16 %v823, %v819
    %v868 = vpack.c.b16 %v828, %v824
    %v869 = vpack.c.b16 %v829, %v825
    %v870 = vpack.c.b16 %v830, %v826
    %v871 = vpack.c.b16 %v831, %v827
    %v872 = vpack.c.b16 %v836, %v832
    %v873 = vpack.c.b16 %v837, %v833
    %v874 = vpack.c.b16 %v838, %v834
    %v875 = vpack.c.b16 %v839, %v835
    %v876 = vpack.c.b16 %v844, %v840
    %v877 = vpack.c.b16 %v845, %v841
    %v878 = vpack.c.b16 %v846, %v842
    %v879 = vpack.c.b16 %v847, %v843
    %912 = vmatpush.bf16.msra.mxu0 %v876
    %913 = vmatpush.bf16.msra.mxu0 %v872
    %914 = vmatpush.bf16.msra.mxu0 %v868
    %915 = vmatpush.bf16.msra.mxu0 %v864
    %916 = vmatpush.bf16.msra.mxu0 %v860
    %917 = vmatpush.bf16.msra.mxu0 %v856
    %918 = vmatpush.bf16.msra.mxu0 %v852
    %919 = vmatpush.bf16.msra.mxu0 %v848
    %920 = vmatmul.bf16.gmra.mxu0 0
    %v921 = vpop.f32.mrf.mxu0
    %v922 = vadd.f32 0.0, %v921
    %v923 = vpop.f32.mrf.mxu0
    %924 = vdwg.mxu0
    %925 = vmatpush.bf16.msra.mxu0 %v877
    %926 = vmatpush.bf16.msra.mxu0 %v873
    %927 = vmatpush.bf16.msra.mxu0 %v869
    %928 = vmatpush.bf16.msra.mxu0 %v865
    %929 = vmatpush.bf16.msra.mxu0 %v861
    %930 = vmatpush.bf16.msra.mxu0 %v857
    %931 = vmatpush.bf16.msra.mxu0 %v853
    %932 = vmatpush.bf16.msra.mxu0 %v849
    %933 = vmatmul.bf16.gmra.mxu0 0
    %v934 = vpop.f32.mrf.mxu0
    %v935 = vadd.f32 0.0, %v934
    %v936 = vpop.f32.mrf.mxu0
    %937 = vdwg.mxu0
    %938 = vmatpush.bf16.msra.mxu0 %v878
    %939 = vmatpush.bf16.msra.mxu0 %v874
    %940 = vmatpush.bf16.msra.mxu0 %v870
    %941 = vmatpush.bf16.msra.mxu0 %v866
    %942 = vmatpush.bf16.msra.mxu0 %v862
    %943 = vmatpush.bf16.msra.mxu0 %v858
    %944 = vmatpush.bf16.msra.mxu0 %v854
    %945 = vmatpush.bf16.msra.mxu0 %v850
    %946 = vmatmul.bf16.gmra.mxu0 0
    %v947 = vpop.f32.mrf.mxu0
    %v948 = vadd.f32 0.0, %v947
    %v949 = vpop.f32.mrf.mxu0
    %950 = vdwg.mxu0
    %951 = vmatpush.bf16.msra.mxu0 %v879
    %952 = vmatpush.bf16.msra.mxu0 %v875
    %953 = vmatpush.bf16.msra.mxu0 %v871
    %954 = vmatpush.bf16.msra.mxu0 %v867
    %955 = vmatpush.bf16.msra.mxu0 %v863
    %956 = vmatpush.bf16.msra.mxu0 %v859
    %957 = vmatpush.bf16.msra.mxu0 %v855
    %958 = vmatpush.bf16.msra.mxu0 %v851
    %959 = vmatmul.bf16.gmra.mxu0 0
    %v960 = vpop.f32.mrf.mxu0
    %v961 = vadd.f32 0.0, %v960
    %v962 = vpop.f32.mrf.mxu0
    %963 = vdwg.mxu0
    %v968 = vrot.slane %v922, 2
    %v969 = vrot.slane %v935, 2
    %v970 = vrot.slane %v948, 2
    %v971 = vrot.slane %v961, 2
    %v976 = vadd.f32 %v748, %v968
    %v977 = vadd.f32 %v749, %v969
    %v978 = vadd.f32 %v750, %v970
    %v979 = vadd.f32 %v751, %v971
    %v980 = vxor.u32 %v744, 2147483648
    %v981 = vxor.u32 %v745, 2147483648
    %v982 = vxor.u32 %v746, 2147483648
    %v983 = vmul.f32 %v980, 1.442695
    %v984 = vpow.pop %v983
    %v985 = vmul.f32 %v981, 1.442695
    %v986 = vpow.pop %v985
    %v987 = vmul.f32 %v982, 1.442695
    %v988 = vpow.pop %v987
    %v989 = vadd.f32 %v984, 1.0
    %v990 = vadd.f32 %v986, 1.0
    %v991 = vadd.f32 %v988, 1.0
    %v992 = vrcp.pop %v989
    %v993 = vmul.f32 %v989, %v992
    %v994 = vsub.f32 1.0, %v993
    %v995 = vmul.f32 %v992, %v994
    %v996 = vadd.f32 %v992, %v995
    %vm997 = vweird.f32 %v989
    %vm998 = vweird.f32 %v992
    %vm999 = vmor %vm997, %vm998
    %v1000 = vsel %vm999, %v992, %v996
    %v1001 = vand.u32 2147483647, %v989
    %vm1002 = vcmp.eq.f32.partialorder %v1001, 8.507059e+37
    %v1003 = vand.u32 %v989, 2147483648
    %v1004 = vor.u32 1.1754944e-38, %v1003
    %v1005 = vsel %vm1002, %v1004, %v1000
    %v1006 = vmul.f32 1.0, %v1005
    %v1007 = vrcp.pop %v990
    %v1008 = vmul.f32 %v990, %v1007
    %v1009 = vsub.f32 1.0, %v1008
    %v1010 = vmul.f32 %v1007, %v1009
    %v1011 = vadd.f32 %v1007, %v1010
    %vm1012 = vweird.f32 %v990
    %vm1013 = vweird.f32 %v1007
    %vm1014 = vmor %vm1012, %vm1013
    %v1015 = vsel %vm1014, %v1007, %v1011
    %v1016 = vand.u32 2147483647, %v990
    %vm1017 = vcmp.eq.f32.partialorder %v1016, 8.507059e+37
    %v1018 = vand.u32 %v990, 2147483648
    %v1019 = vor.u32 1.1754944e-38, %v1018
    %v1020 = vsel %vm1017, %v1019, %v1015
    %v1021 = vmul.f32 1.0, %v1020
    %v1022 = vrcp.pop %v991
    %v1023 = vmul.f32 %v991, %v1022
    %v1024 = vsub.f32 1.0, %v1023
    %v1025 = vmul.f32 %v1022, %v1024
    %v1026 = vadd.f32 %v1022, %v1025
    %vm1027 = vweird.f32 %v991
    %vm1028 = vweird.f32 %v1022
    %vm1029 = vmor %vm1027, %vm1028
    %v1030 = vsel %vm1029, %v1022, %v1026
    %v1031 = vand.u32 2147483647, %v991
    %vm1032 = vcmp.eq.f32.partialorder %v1031, 8.507059e+37
    %v1033 = vand.u32 %v991, 2147483648
    %v1034 = vor.u32 1.1754944e-38, %v1033
    %v1035 = vsel %vm1032, %v1034, %v1030
    %v1036 = vmul.f32 1.0, %v1035
    %v1037 = vtanh.pop %v747
    %v1038 = vmul.f32 %v1021, 0.0
    %v1039 = vmul.f32 %v1006, %v1037
    %v1040 = vadd.f32 %v1038, %v1039
    %v1041 = vtanh.pop %v1040
    %v1042 = vmul.f32 %v1036, %v1041
    %v1043 = vxor.u32 %v976, 2147483648
    %v1044 = vxor.u32 %v977, 2147483648
    %v1045 = vxor.u32 %v978, 2147483648
    %v1046 = vmul.f32 %v1043, 1.442695
    %v1047 = vpow.pop %v1046
    %v1048 = vmul.f32 %v1044, 1.442695
    %v1049 = vpow.pop %v1048
    %v1050 = vmul.f32 %v1045, 1.442695
    %v1051 = vpow.pop %v1050
    %v1052 = vadd.f32 %v1047, 1.0
    %v1053 = vadd.f32 %v1049, 1.0
    %v1054 = vadd.f32 %v1051, 1.0
    %v1055 = vrcp.pop %v1052
    %v1056 = vmul.f32 %v1052, %v1055
    %v1057 = vsub.f32 1.0, %v1056
    %v1058 = vmul.f32 %v1055, %v1057
    %v1059 = vadd.f32 %v1055, %v1058
    %vm1060 = vweird.f32 %v1052
    %vm1061 = vweird.f32 %v1055
    %vm1062 = vmor %vm1060, %vm1061
    %v1063 = vsel %vm1062, %v1055, %v1059
    %v1064 = vand.u32 2147483647, %v1052
    %vm1065 = vcmp.eq.f32.partialorder %v1064, 8.507059e+37
    %v1066 = vand.u32 %v1052, 2147483648
    %v1067 = vor.u32 1.1754944e-38, %v1066
    %v1068 = vsel %vm1065, %v1067, %v1063
    %v1069 = vmul.f32 1.0, %v1068
    %v1070 = vrcp.pop %v1053
    %v1071 = vmul.f32 %v1053, %v1070
    %v1072 = vsub.f32 1.0, %v1071
    %v1073 = vmul.f32 %v1070, %v1072
    %v1074 = vadd.f32 %v1070, %v1073
    %vm1075 = vweird.f32 %v1053
    %vm1076 = vweird.f32 %v1070
    %vm1077 = vmor %vm1075, %vm1076
    %v1078 = vsel %vm1077, %v1070, %v1074
    %v1079 = vand.u32 2147483647, %v1053
    %vm1080 = vcmp.eq.f32.partialorder %v1079, 8.507059e+37
    %v1081 = vand.u32 %v1053, 2147483648
    %v1082 = vor.u32 1.1754944e-38, %v1081
    %v1083 = vsel %vm1080, %v1082, %v1078
    %v1084 = vmul.f32 1.0, %v1083
    %v1085 = vrcp.pop %v1054
    %v1086 = vmul.f32 %v1054, %v1085
    %v1087 = vsub.f32 1.0, %v1086
    %v1088 = vmul.f32 %v1085, %v1087
    %v1089 = vadd.f32 %v1085, %v1088
    %vm1090 = vweird.f32 %v1054
    %vm1091 = vweird.f32 %v1085
    %vm1092 = vmor %vm1090, %vm1091
    %v1093 = vsel %vm1092, %v1085, %v1089
    %v1094 = vand.u32 2147483647, %v1054
    %vm1095 = vcmp.eq.f32.partialorder %v1094, 8.507059e+37
    %v1096 = vand.u32 %v1054, 2147483648
    %v1097 = vor.u32 1.1754944e-38, %v1096
    %v1098 = vsel %vm1095, %v1097, %v1093
    %v1099 = vmul.f32 1.0, %v1098
    %v1100 = vtanh.pop %v979
    %v1101 = vmul.f32 %v1084, 0.0
    %v1102 = vmul.f32 %v1069, %v1100
    %v1103 = vadd.f32 %v1101, %v1102
    %v1104 = vtanh.pop %v1103
    %v1105 = vmul.f32 %v1099, %v1104
    %1106 = vst [vmem:[#allocation3] sm:$0x3] %v1042
    %1107 = vst [vmem:[#allocation4 + $0x8] sm:$0xc0] %v1105
    %v1108 = vld [vmem:[#allocation2] sm:$0xc]
    %v1109 = vld [vmem:[#allocation2 + $0x8] sm:$0xc]
    %v1110 = vld [vmem:[#allocation2 + $0x10] sm:$0xc]
    %v1111 = vld [vmem:[#allocation2 + $0x18] sm:$0xc]
    %v1112 = vpack.c.bf16 %v1042, %v1042
    %1113 = vmatpush.bf16.msra.mxu0 %v656
    %1114 = vmatpush.bf16.msra.mxu0 %v652
    %1115 = vmatpush.bf16.msra.mxu0 %v648
    %1116 = vmatpush.bf16.msra.mxu0 %v644
    %1117 = vmatpush.bf16.msra.mxu0 %v640
    %1118 = vmatpush.bf16.msra.mxu0 %v636
    %1119 = vmatpush.bf16.msra.mxu0 %v632
    %1120 = vmatpush.bf16.msra.mxu0 %v628
    %1121 = vmatmul.bf16.gmra.mxu0 %v1112
    %v1122 = vpop.f32.mrf.mxu0
    %v1123 = vadd.f32 0.0, %v1122
    %v1124 = vpop.f32.mrf.mxu0
    %1125 = vdwg.mxu0
    %1126 = vmatpush.bf16.msra.mxu0 %v657
    %1127 = vmatpush.bf16.msra.mxu0 %v653
    %1128 = vmatpush.bf16.msra.mxu0 %v649
    %1129 = vmatpush.bf16.msra.mxu0 %v645
    %1130 = vmatpush.bf16.msra.mxu0 %v641
    %1131 = vmatpush.bf16.msra.mxu0 %v637
    %1132 = vmatpush.bf16.msra.mxu0 %v633
    %1133 = vmatpush.bf16.msra.mxu0 %v629
    %1134 = vmatmul.bf16.gmra.mxu0 %v1112
    %v1135 = vpop.f32.mrf.mxu0
    %v1136 = vadd.f32 0.0, %v1135
    %v1137 = vpop.f32.mrf.mxu0
    %1138 = vdwg.mxu0
    %1139 = vmatpush.bf16.msra.mxu0 %v658
    %1140 = vmatpush.bf16.msra.mxu0 %v654
    %1141 = vmatpush.bf16.msra.mxu0 %v650
    %1142 = vmatpush.bf16.msra.mxu0 %v646
    %1143 = vmatpush.bf16.msra.mxu0 %v642
    %1144 = vmatpush.bf16.msra.mxu0 %v638
    %1145 = vmatpush.bf16.msra.mxu0 %v634
    %1146 = vmatpush.bf16.msra.mxu0 %v630
    %1147 = vmatmul.bf16.gmra.mxu0 %v1112
    %v1148 = vpop.f32.mrf.mxu0
    %v1149 = vadd.f32 0.0, %v1148
    %v1150 = vpop.f32.mrf.mxu0
    %1151 = vdwg.mxu0
    %1152 = vmatpush.bf16.msra.mxu0 %v659
    %1153 = vmatpush.bf16.msra.mxu0 %v655
    %1154 = vmatpush.bf16.msra.mxu0 %v651
    %1155 = vmatpush.bf16.msra.mxu0 %v647
    %1156 = vmatpush.bf16.msra.mxu0 %v643
    %1157 = vmatpush.bf16.msra.mxu0 %v639
    %1158 = vmatpush.bf16.msra.mxu0 %v635
    %1159 = vmatpush.bf16.msra.mxu0 %v631
    %1160 = vmatmul.bf16.gmra.mxu0 %v1112
    %v1161 = vpop.f32.mrf.mxu0
    %v1162 = vadd.f32 0.0, %v1161
    %v1163 = vpop.f32.mrf.mxu0
    %1164 = vdwg.mxu0
    %v1169 = vrot.slane %v1123, 6
    %v1170 = vrot.slane %v1136, 6
    %v1171 = vrot.slane %v1149, 6
    %v1172 = vrot.slane %v1162, 6
    %v1177 = vadd.f32 %v1108, %v1169
    %v1178 = vadd.f32 %v1109, %v1170
    %v1179 = vadd.f32 %v1110, %v1171
    %v1180 = vadd.f32 %v1111, %v1172
    %v1181 = vld [vmem:[#allocation2 + $0x60] sm:$0x30]
    %v1182 = vld [vmem:[#allocation2 + $0x68] sm:$0x30]
    %v1183 = vld [vmem:[#allocation2 + $0x70] sm:$0x30]
    %v1184 = vld [vmem:[#allocation2 + $0x78] sm:$0x30]
    %v1185 = vpack.c.bf16 %v1105, %v1105
    %v1187 = vrot.slane %v1185, 3
    %1189 = vmatpush.bf16.msra.mxu0 %v876
    %1190 = vmatpush.bf16.msra.mxu0 %v872
    %1191 = vmatpush.bf16.msra.mxu0 %v868
    %1192 = vmatpush.bf16.msra.mxu0 %v864
    %1193 = vmatpush.bf16.msra.mxu0 %v860
    %1194 = vmatpush.bf16.msra.mxu0 %v856
    %1195 = vmatpush.bf16.msra.mxu0 %v852
    %1196 = vmatpush.bf16.msra.mxu0 %v848
    %1197 = vmatmul.bf16.gmra.mxu0 %v1187
    %v1198 = vpop.f32.mrf.mxu0
    %v1199 = vadd.f32 0.0, %v1198
    %v1200 = vpop.f32.mrf.mxu0
    %1201 = vdwg.mxu0
    %1202 = vmatpush.bf16.msra.mxu0 %v877
    %1203 = vmatpush.bf16.msra.mxu0 %v873
    %1204 = vmatpush.bf16.msra.mxu0 %v869
    %1205 = vmatpush.bf16.msra.mxu0 %v865
    %1206 = vmatpush.bf16.msra.mxu0 %v861
    %1207 = vmatpush.bf16.msra.mxu0 %v857
    %1208 = vmatpush.bf16.msra.mxu0 %v853
    %1209 = vmatpush.bf16.msra.mxu0 %v849
    %1210 = vmatmul.bf16.gmra.mxu0 %v1187
    %v1211 = vpop.f32.mrf.mxu0
    %v1212 = vadd.f32 0.0, %v1211
    %v1213 = vpop.f32.mrf.mxu0
    %1214 = vdwg.mxu0
    %1215 = vmatpush.bf16.msra.mxu0 %v878
    %1216 = vmatpush.bf16.msra.mxu0 %v874
    %1217 = vmatpush.bf16.msra.mxu0 %v870
    %1218 = vmatpush.bf16.msra.mxu0 %v866
    %1219 = vmatpush.bf16.msra.mxu0 %v862
    %1220 = vmatpush.bf16.msra.mxu0 %v858
    %1221 = vmatpush.bf16.msra.mxu0 %v854
    %1222 = vmatpush.bf16.msra.mxu0 %v850
    %1223 = vmatmul.bf16.gmra.mxu0 %v1187
    %v1224 = vpop.f32.mrf.mxu0
    %v1225 = vadd.f32 0.0, %v1224
    %v1226 = vpop.f32.mrf.mxu0
    %1227 = vdwg.mxu0
    %1228 = vmatpush.bf16.msra.mxu0 %v879
    %1229 = vmatpush.bf16.msra.mxu0 %v875
    %1230 = vmatpush.bf16.msra.mxu0 %v871
    %1231 = vmatpush.bf16.msra.mxu0 %v867
    %1232 = vmatpush.bf16.msra.mxu0 %v863
    %1233 = vmatpush.bf16.msra.mxu0 %v859
    %1234 = vmatpush.bf16.msra.mxu0 %v855
    %1235 = vmatpush.bf16.msra.mxu0 %v851
    %1236 = vmatmul.bf16.gmra.mxu0 %v1187
    %v1237 = vpop.f32.mrf.mxu0
    %v1238 = vadd.f32 0.0, %v1237
    %v1239 = vpop.f32.mrf.mxu0
    %1240 = vdwg.mxu0
    %v1245 = vrot.slane %v1199, 4
    %v1246 = vrot.slane %v1212, 4
    %v1247 = vrot.slane %v1225, 4
    %v1248 = vrot.slane %v1238, 4
    %v1253 = vadd.f32 %v1181, %v1245
    %v1254 = vadd.f32 %v1182, %v1246
    %v1255 = vadd.f32 %v1183, %v1247
    %v1256 = vadd.f32 %v1184, %v1248
    %v1257 = vxor.u32 %v1177, 2147483648
    %v1258 = vxor.u32 %v1178, 2147483648
    %v1259 = vxor.u32 %v1179, 2147483648
    %v1260 = vmul.f32 %v1257, 1.442695
    %v1261 = vpow.pop %v1260
    %v1262 = vmul.f32 %v1258, 1.442695
    %v1263 = vpow.pop %v1262
    %v1264 = vmul.f32 %v1259, 1.442695
    %v1265 = vpow.pop %v1264
    %v1266 = vadd.f32 %v1261, 1.0
    %v1267 = vadd.f32 %v1263, 1.0
    %v1268 = vadd.f32 %v1265, 1.0
    %v1269 = vrcp.pop %v1266
    %v1270 = vmul.f32 %v1266, %v1269
    %v1271 = vsub.f32 1.0, %v1270
    %v1272 = vmul.f32 %v1269, %v1271
    %v1273 = vadd.f32 %v1269, %v1272
    %vm1274 = vweird.f32 %v1266
    %vm1275 = vweird.f32 %v1269
    %vm1276 = vmor %vm1274, %vm1275
    %v1277 = vsel %vm1276, %v1269, %v1273
    %v1278 = vand.u32 2147483647, %v1266
    %vm1279 = vcmp.eq.f32.partialorder %v1278, 8.507059e+37
    %v1280 = vand.u32 %v1266, 2147483648
    %v1281 = vor.u32 1.1754944e-38, %v1280
    %v1282 = vsel %vm1279, %v1281, %v1277
    %v1283 = vmul.f32 1.0, %v1282
    %v1284 = vrcp.pop %v1267
    %v1285 = vmul.f32 %v1267, %v1284
    %v1286 = vsub.f32 1.0, %v1285
    %v1287 = vmul.f32 %v1284, %v1286
    %v1288 = vadd.f32 %v1284, %v1287
    %vm1289 = vweird.f32 %v1267
    %vm1290 = vweird.f32 %v1284
    %vm1291 = vmor %vm1289, %vm1290
    %v1292 = vsel %vm1291, %v1284, %v1288
    %v1293 = vand.u32 2147483647, %v1267
    %vm1294 = vcmp.eq.f32.partialorder %v1293, 8.507059e+37
    %v1295 = vand.u32 %v1267, 2147483648
    %v1296 = vor.u32 1.1754944e-38, %v1295
    %v1297 = vsel %vm1294, %v1296, %v1292
    %v1298 = vmul.f32 1.0, %v1297
    %v1299 = vrcp.pop %v1268
    %v1300 = vmul.f32 %v1268, %v1299
    %v1301 = vsub.f32 1.0, %v1300
    %v1302 = vmul.f32 %v1299, %v1301
    %v1303 = vadd.f32 %v1299, %v1302
    %vm1304 = vweird.f32 %v1268
    %vm1305 = vweird.f32 %v1299
    %vm1306 = vmor %vm1304, %vm1305
    %v1307 = vsel %vm1306, %v1299, %v1303
    %v1308 = vand.u32 2147483647, %v1268
    %vm1309 = vcmp.eq.f32.partialorder %v1308, 8.507059e+37
    %v1310 = vand.u32 %v1268, 2147483648
    %v1311 = vor.u32 1.1754944e-38, %v1310
    %v1312 = vsel %vm1309, %v1311, %v1307
    %v1313 = vmul.f32 1.0, %v1312
    %v1314 = vtanh.pop %v1180
    %v1316 = vrot.slane %v1040, 6
    %v1318 = vmul.f32 %v1298, %v1316
    %v1319 = vmul.f32 %v1283, %v1314
    %v1320 = vadd.f32 %v1318, %v1319
    %v1321 = vtanh.pop %v1320
    %v1322 = vmul.f32 %v1313, %v1321
    %v1323 = vxor.u32 %v1253, 2147483648
    %v1324 = vxor.u32 %v1254, 2147483648
    %v1325 = vxor.u32 %v1255, 2147483648
    %v1326 = vmul.f32 %v1323, 1.442695
    %v1327 = vpow.pop %v1326
    %v1328 = vmul.f32 %v1324, 1.442695
    %v1329 = vpow.pop %v1328
    %v1330 = vmul.f32 %v1325, 1.442695
    %v1331 = vpow.pop %v1330
    %v1332 = vadd.f32 %v1327, 1.0
    %v1333 = vadd.f32 %v1329, 1.0
    %v1334 = vadd.f32 %v1331, 1.0
    %v1335 = vrcp.pop %v1332
    %v1336 = vmul.f32 %v1332, %v1335
    %v1337 = vsub.f32 1.0, %v1336
    %v1338 = vmul.f32 %v1335, %v1337
    %v1339 = vadd.f32 %v1335, %v1338
    %vm1340 = vweird.f32 %v1332
    %vm1341 = vweird.f32 %v1335
    %vm1342 = vmor %vm1340, %vm1341
    %v1343 = vsel %vm1342, %v1335, %v1339
    %v1344 = vand.u32 2147483647, %v1332
    %vm1345 = vcmp.eq.f32.partialorder %v1344, 8.507059e+37
    %v1346 = vand.u32 %v1332, 2147483648
    %v1347 = vor.u32 1.1754944e-38, %v1346
    %v1348 = vsel %vm1345, %v1347, %v1343
    %v1349 = vmul.f32 1.0, %v1348
    %v1350 = vrcp.pop %v1333
    %v1351 = vmul.f32 %v1333, %v1350
    %v1352 = vsub.f32 1.0, %v1351
    %v1353 = vmul.f32 %v1350, %v1352
    %v1354 = vadd.f32 %v1350, %v1353
    %vm1355 = vweird.f32 %v1333
    %vm1356 = vweird.f32 %v1350
    %vm1357 = vmor %vm1355, %vm1356
    %v1358 = vsel %vm1357, %v1350, %v1354
    %v1359 = vand.u32 2147483647, %v1333
    %vm1360 = vcmp.eq.f32.partialorder %v1359, 8.507059e+37
    %v1361 = vand.u32 %v1333, 2147483648
    %v1362 = vor.u32 1.1754944e-38, %v1361
    %v1363 = vsel %vm1360, %v1362, %v1358
    %v1364 = vmul.f32 1.0, %v1363
    %v1365 = vrcp.pop %v1334
    %v1366 = vmul.f32 %v1334, %v1365
    %v1367 = vsub.f32 1.0, %v1366
    %v1368 = vmul.f32 %v1365, %v1367
    %v1369 = vadd.f32 %v1365, %v1368
    %vm1370 = vweird.f32 %v1334
    %vm1371 = vweird.f32 %v1365
    %vm1372 = vmor %vm1370, %vm1371
    %v1373 = vsel %vm1372, %v1365, %v1369
    %v1374 = vand.u32 2147483647, %v1334
    %vm1375 = vcmp.eq.f32.partialorder %v1374, 8.507059e+37
    %v1376 = vand.u32 %v1334, 2147483648
    %v1377 = vor.u32 1.1754944e-38, %v1376
    %v1378 = vsel %vm1375, %v1377, %v1373
    %v1379 = vmul.f32 1.0, %v1378
    %v1380 = vtanh.pop %v1256
    %v1382 = vrot.slane %v1103, 2
    %v1384 = vmul.f32 %v1364, %v1382
    %v1385 = vmul.f32 %v1349, %v1380
    %v1386 = vadd.f32 %v1384, %v1385
    %v1387 = vtanh.pop %v1386
    %v1388 = vmul.f32 %v1379, %v1387
    %1389 = vst [vmem:[#allocation3] sm:$0xc] %v1322
    %1390 = vst [vmem:[#allocation4 + $0x8] sm:$0x30] %v1388
    %v1391 = vld [vmem:[#allocation2] sm:$0x30]
    %v1392 = vld [vmem:[#allocation2 + $0x8] sm:$0x30]
    %v1393 = vld [vmem:[#allocation2 + $0x10] sm:$0x30]
    %v1394 = vld [vmem:[#allocation2 + $0x18] sm:$0x30]
    %v1395 = vpack.c.bf16 %v1322, %v1322
    %v1397 = vrot.slane %v1395, 1
    %1399 = vmatpush.bf16.msra.mxu0 %v656
    %1400 = vmatpush.bf16.msra.mxu0 %v652
    %1401 = vmatpush.bf16.msra.mxu0 %v648
    %1402 = vmatpush.bf16.msra.mxu0 %v644
    %1403 = vmatpush.bf16.msra.mxu0 %v640
    %1404 = vmatpush.bf16.msra.mxu0 %v636
    %1405 = vmatpush.bf16.msra.mxu0 %v632
    %1406 = vmatpush.bf16.msra.mxu0 %v628
    %1407 = vmatmul.bf16.gmra.mxu0 %v1397
    %v1408 = vpop.f32.mrf.mxu0
    %v1409 = vadd.f32 0.0, %v1408
    %v1410 = vpop.f32.mrf.mxu0
    %1411 = vdwg.mxu0
    %1412 = vmatpush.bf16.msra.mxu0 %v657
    %1413 = vmatpush.bf16.msra.mxu0 %v653
    %1414 = vmatpush.bf16.msra.mxu0 %v649
    %1415 = vmatpush.bf16.msra.mxu0 %v645
    %1416 = vmatpush.bf16.msra.mxu0 %v641
    %1417 = vmatpush.bf16.msra.mxu0 %v637
    %1418 = vmatpush.bf16.msra.mxu0 %v633
    %1419 = vmatpush.bf16.msra.mxu0 %v629
    %1420 = vmatmul.bf16.gmra.mxu0 %v1397
    %v1421 = vpop.f32.mrf.mxu0
    %v1422 = vadd.f32 0.0, %v1421
    %v1423 = vpop.f32.mrf.mxu0
    %1424 = vdwg.mxu0
    %1425 = vmatpush.bf16.msra.mxu0 %v658
    %1426 = vmatpush.bf16.msra.mxu0 %v654
    %1427 = vmatpush.bf16.msra.mxu0 %v650
    %1428 = vmatpush.bf16.msra.mxu0 %v646
    %1429 = vmatpush.bf16.msra.mxu0 %v642
    %1430 = vmatpush.bf16.msra.mxu0 %v638
    %1431 = vmatpush.bf16.msra.mxu0 %v634
    %1432 = vmatpush.bf16.msra.mxu0 %v630
    %1433 = vmatmul.bf16.gmra.mxu0 %v1397
    %v1434 = vpop.f32.mrf.mxu0
    %v1435 = vadd.f32 0.0, %v1434
    %v1436 = vpop.f32.mrf.mxu0
    %1437 = vdwg.mxu0
    %1438 = vmatpush.bf16.msra.mxu0 %v659
    %1439 = vmatpush.bf16.msra.mxu0 %v655
    %1440 = vmatpush.bf16.msra.mxu0 %v651
    %1441 = vmatpush.bf16.msra.mxu0 %v647
    %1442 = vmatpush.bf16.msra.mxu0 %v643
    %1443 = vmatpush.bf16.msra.mxu0 %v639
    %1444 = vmatpush.bf16.msra.mxu0 %v635
    %1445 = vmatpush.bf16.msra.mxu0 %v631
    %1446 = vmatmul.bf16.gmra.mxu0 %v1397
    %v1447 = vpop.f32.mrf.mxu0
    %v1448 = vadd.f32 0.0, %v1447
    %v1449 = vpop.f32.mrf.mxu0
    %1450 = vdwg.mxu0
    %v1455 = vrot.slane %v1409, 4
    %v1456 = vrot.slane %v1422, 4
    %v1457 = vrot.slane %v1435, 4
    %v1458 = vrot.slane %v1448, 4
    %v1463 = vadd.f32 %v1391, %v1455
    %v1464 = vadd.f32 %v1392, %v1456
    %v1465 = vadd.f32 %v1393, %v1457
    %v1466 = vadd.f32 %v1394, %v1458
    %v1467 = vld [vmem:[#allocation2 + $0x60] sm:$0xc]
    %v1468 = vld [vmem:[#allocation2 + $0x68] sm:$0xc]
    %v1469 = vld [vmem:[#allocation2 + $0x70] sm:$0xc]
    %v1470 = vld [vmem:[#allocation2 + $0x78] sm:$0xc]
    %v1471 = vpack.c.bf16 %v1388, %v1388
    %v1473 = vrot.slane %v1471, 2
    %1475 = vmatpush.bf16.msra.mxu0 %v876
    %1476 = vmatpush.bf16.msra.mxu0 %v872
    %1477 = vmatpush.bf16.msra.mxu0 %v868
    %1478 = vmatpush.bf16.msra.mxu0 %v864
    %1479 = vmatpush.bf16.msra.mxu0 %v860
    %1480 = vmatpush.bf16.msra.mxu0 %v856
    %1481 = vmatpush.bf16.msra.mxu0 %v852
    %1482 = vmatpush.bf16.msra.mxu0 %v848
    %1483 = vmatmul.bf16.gmra.mxu0 %v1473
    %v1484 = vpop.f32.mrf.mxu0
    %v1485 = vadd.f32 0.0, %v1484
    %v1486 = vpop.f32.mrf.mxu0
    %1487 = vdwg.mxu0
    %1488 = vmatpush.bf16.msra.mxu0 %v877
    %1489 = vmatpush.bf16.msra.mxu0 %v873
    %1490 = vmatpush.bf16.msra.mxu0 %v869
    %1491 = vmatpush.bf16.msra.mxu0 %v865
    %1492 = vmatpush.bf16.msra.mxu0 %v861
    %1493 = vmatpush.bf16.msra.mxu0 %v857
    %1494 = vmatpush.bf16.msra.mxu0 %v853
    %1495 = vmatpush.bf16.msra.mxu0 %v849
    %1496 = vmatmul.bf16.gmra.mxu0 %v1473
    %v1497 = vpop.f32.mrf.mxu0
    %v1498 = vadd.f32 0.0, %v1497
    %v1499 = vpop.f32.mrf.mxu0
    %1500 = vdwg.mxu0
    %1501 = vmatpush.bf16.msra.mxu0 %v878
    %1502 = vmatpush.bf16.msra.mxu0 %v874
    %1503 = vmatpush.bf16.msra.mxu0 %v870
    %1504 = vmatpush.bf16.msra.mxu0 %v866
    %1505 = vmatpush.bf16.msra.mxu0 %v862
    %1506 = vmatpush.bf16.msra.mxu0 %v858
    %1507 = vmatpush.bf16.msra.mxu0 %v854
    %1508 = vmatpush.bf16.msra.mxu0 %v850
    %1509 = vmatmul.bf16.gmra.mxu0 %v1473
    %v1510 = vpop.f32.mrf.mxu0
    %v1511 = vadd.f32 0.0, %v1510
    %v1512 = vpop.f32.mrf.mxu0
    %1513 = vdwg.mxu0
    %1514 = vmatpush.bf16.msra.mxu0 %v879
    %1515 = vmatpush.bf16.msra.mxu0 %v875
    %1516 = vmatpush.bf16.msra.mxu0 %v871
    %1517 = vmatpush.bf16.msra.mxu0 %v867
    %1518 = vmatpush.bf16.msra.mxu0 %v863
    %1519 = vmatpush.bf16.msra.mxu0 %v859
    %1520 = vmatpush.bf16.msra.mxu0 %v855
    %1521 = vmatpush.bf16.msra.mxu0 %v851
    %1522 = vmatmul.bf16.gmra.mxu0 %v1473
    %v1523 = vpop.f32.mrf.mxu0
    %v1524 = vadd.f32 0.0, %v1523
    %v1525 = vpop.f32.mrf.mxu0
    %1526 = vdwg.mxu0
    %v1531 = vrot.slane %v1485, 6
    %v1532 = vrot.slane %v1498, 6
    %v1533 = vrot.slane %v1511, 6
    %v1534 = vrot.slane %v1524, 6
    %v1539 = vadd.f32 %v1467, %v1531
    %v1540 = vadd.f32 %v1468, %v1532
    %v1541 = vadd.f32 %v1469, %v1533
    %v1542 = vadd.f32 %v1470, %v1534
    %v1543 = vxor.u32 %v1463, 2147483648
    %v1544 = vxor.u32 %v1464, 2147483648
    %v1545 = vxor.u32 %v1465, 2147483648
    %v1546 = vmul.f32 %v1543, 1.442695
    %v1547 = vpow.pop %v1546
    %v1548 = vmul.f32 %v1544, 1.442695
    %v1549 = vpow.pop %v1548
    %v1550 = vmul.f32 %v1545, 1.442695
    %v1551 = vpow.pop %v1550
    %v1552 = vadd.f32 %v1547, 1.0
    %v1553 = vadd.f32 %v1549, 1.0
    %v1554 = vadd.f32 %v1551, 1.0
    %v1555 = vrcp.pop %v1552
    %v1556 = vmul.f32 %v1552, %v1555
    %v1557 = vsub.f32 1.0, %v1556
    %v1558 = vmul.f32 %v1555, %v1557
    %v1559 = vadd.f32 %v1555, %v1558
    %vm1560 = vweird.f32 %v1552
    %vm1561 = vweird.f32 %v1555
    %vm1562 = vmor %vm1560, %vm1561
    %v1563 = vsel %vm1562, %v1555, %v1559
    %v1564 = vand.u32 2147483647, %v1552
    %vm1565 = vcmp.eq.f32.partialorder %v1564, 8.507059e+37
    %v1566 = vand.u32 %v1552, 2147483648
    %v1567 = vor.u32 1.1754944e-38, %v1566
    %v1568 = vsel %vm1565, %v1567, %v1563
    %v1569 = vmul.f32 1.0, %v1568
    %v1570 = vrcp.pop %v1553
    %v1571 = vmul.f32 %v1553, %v1570
    %v1572 = vsub.f32 1.0, %v1571
    %v1573 = vmul.f32 %v1570, %v1572
    %v1574 = vadd.f32 %v1570, %v1573
    %vm1575 = vweird.f32 %v1553
    %vm1576 = vweird.f32 %v1570
    %vm1577 = vmor %vm1575, %vm1576
    %v1578 = vsel %vm1577, %v1570, %v1574
    %v1579 = vand.u32 2147483647, %v1553
    %vm1580 = vcmp.eq.f32.partialorder %v1579, 8.507059e+37
    %v1581 = vand.u32 %v1553, 2147483648
    %v1582 = vor.u32 1.1754944e-38, %v1581
    %v1583 = vsel %vm1580, %v1582, %v1578
    %v1584 = vmul.f32 1.0, %v1583
    %v1585 = vrcp.pop %v1554
    %v1586 = vmul.f32 %v1554, %v1585
    %v1587 = vsub.f32 1.0, %v1586
    %v1588 = vmul.f32 %v1585, %v1587
    %v1589 = vadd.f32 %v1585, %v1588
    %vm1590 = vweird.f32 %v1554
    %vm1591 = vweird.f32 %v1585
    %vm1592 = vmor %vm1590, %vm1591
    %v1593 = vsel %vm1592, %v1585, %v1589
    %v1594 = vand.u32 2147483647, %v1554
    %vm1595 = vcmp.eq.f32.partialorder %v1594, 8.507059e+37
    %v1596 = vand.u32 %v1554, 2147483648
    %v1597 = vor.u32 1.1754944e-38, %v1596
    %v1598 = vsel %vm1595, %v1597, %v1593
    %v1599 = vmul.f32 1.0, %v1598
    %v1600 = vtanh.pop %v1466
    %v1602 = vrot.slane %v1320, 6
    %v1604 = vmul.f32 %v1584, %v1602
    %v1605 = vmul.f32 %v1569, %v1600
    %v1606 = vadd.f32 %v1604, %v1605
    %v1607 = vtanh.pop %v1606
    %v1608 = vmul.f32 %v1599, %v1607
    %v1609 = vxor.u32 %v1539, 2147483648
    %v1610 = vxor.u32 %v1540, 2147483648
    %v1611 = vxor.u32 %v1541, 2147483648
    %v1612 = vmul.f32 %v1609, 1.442695
    %v1613 = vpow.pop %v1612
    %v1614 = vmul.f32 %v1610, 1.442695
    %v1615 = vpow.pop %v1614
    %v1616 = vmul.f32 %v1611, 1.442695
    %v1617 = vpow.pop %v1616
    %v1618 = vadd.f32 %v1613, 1.0
    %v1619 = vadd.f32 %v1615, 1.0
    %v1620 = vadd.f32 %v1617, 1.0
    %v1621 = vrcp.pop %v1618
    %v1622 = vmul.f32 %v1618, %v1621
    %v1623 = vsub.f32 1.0, %v1622
    %v1624 = vmul.f32 %v1621, %v1623
    %v1625 = vadd.f32 %v1621, %v1624
    %vm1626 = vweird.f32 %v1618
    %vm1627 = vweird.f32 %v1621
    %vm1628 = vmor %vm1626, %vm1627
    %v1629 = vsel %vm1628, %v1621, %v1625
    %v1630 = vand.u32 2147483647, %v1618
    %vm1631 = vcmp.eq.f32.partialorder %v1630, 8.507059e+37
    %v1632 = vand.u32 %v1618, 2147483648
    %v1633 = vor.u32 1.1754944e-38, %v1632
    %v1634 = vsel %vm1631, %v1633, %v1629
    %v1635 = vmul.f32 1.0, %v1634
    %v1636 = vrcp.pop %v1619
    %v1637 = vmul.f32 %v1619, %v1636
    %v1638 = vsub.f32 1.0, %v1637
    %v1639 = vmul.f32 %v1636, %v1638
    %v1640 = vadd.f32 %v1636, %v1639
    %vm1641 = vweird.f32 %v1619
    %vm1642 = vweird.f32 %v1636
    %vm1643 = vmor %vm1641, %vm1642
    %v1644 = vsel %vm1643, %v1636, %v1640
    %v1645 = vand.u32 2147483647, %v1619
    %vm1646 = vcmp.eq.f32.partialorder %v1645, 8.507059e+37
    %v1647 = vand.u32 %v1619, 2147483648
    %v1648 = vor.u32 1.1754944e-38, %v1647
    %v1649 = vsel %vm1646, %v1648, %v1644
    %v1650 = vmul.f32 1.0, %v1649
    %v1651 = vrcp.pop %v1620
    %v1652 = vmul.f32 %v1620, %v1651
    %v1653 = vsub.f32 1.0, %v1652
    %v1654 = vmul.f32 %v1651, %v1653
    %v1655 = vadd.f32 %v1651, %v1654
    %vm1656 = vweird.f32 %v1620
    %vm1657 = vweird.f32 %v1651
    %vm1658 = vmor %vm1656, %vm1657
    %v1659 = vsel %vm1658, %v1651, %v1655
    %v1660 = vand.u32 2147483647, %v1620
    %vm1661 = vcmp.eq.f32.partialorder %v1660, 8.507059e+37
    %v1662 = vand.u32 %v1620, 2147483648
    %v1663 = vor.u32 1.1754944e-38, %v1662
    %v1664 = vsel %vm1661, %v1663, %v1659
    %v1665 = vmul.f32 1.0, %v1664
    %v1666 = vtanh.pop %v1542
    %v1668 = vrot.slane %v1386, 2
    %v1670 = vmul.f32 %v1650, %v1668
    %v1671 = vmul.f32 %v1635, %v1666
    %v1672 = vadd.f32 %v1670, %v1671
    %v1673 = vtanh.pop %v1672
    %v1674 = vmul.f32 %v1665, %v1673
    %1675 = vst [vmem:[#allocation3] sm:$0x30] %v1608
    %1676 = vst [vmem:[#allocation4 + $0x8] sm:$0xc] %v1674
    %v1677 = vld [vmem:[#allocation2] sm:$0xc0]
    %v1678 = vld [vmem:[#allocation2 + $0x8] sm:$0xc0]
    %v1679 = vld [vmem:[#allocation2 + $0x10] sm:$0xc0]
    %v1680 = vld [vmem:[#allocation2 + $0x18] sm:$0xc0]
    %v1681 = vpack.c.bf16 %v1608, %v1608
    %v1683 = vrot.slane %v1681, 2
    %1685 = vmatpush.bf16.msra.mxu0 %v656
    %1686 = vmatpush.bf16.msra.mxu0 %v652
    %1687 = vmatpush.bf16.msra.mxu0 %v648
    %1688 = vmatpush.bf16.msra.mxu0 %v644
    %1689 = vmatpush.bf16.msra.mxu0 %v640
    %1690 = vmatpush.bf16.msra.mxu0 %v636
    %1691 = vmatpush.bf16.msra.mxu0 %v632
    %1692 = vmatpush.bf16.msra.mxu0 %v628
    %1693 = vmatmul.bf16.gmra.mxu0 %v1683
    %v1694 = vpop.f32.mrf.mxu0
    %v1695 = vadd.f32 0.0, %v1694
    %v1696 = vpop.f32.mrf.mxu0
    %1697 = vdwg.mxu0
    %1698 = vmatpush.bf16.msra.mxu0 %v657
    %1699 = vmatpush.bf16.msra.mxu0 %v653
    %1700 = vmatpush.bf16.msra.mxu0 %v649
    %1701 = vmatpush.bf16.msra.mxu0 %v645
    %1702 = vmatpush.bf16.msra.mxu0 %v641
    %1703 = vmatpush.bf16.msra.mxu0 %v637
    %1704 = vmatpush.bf16.msra.mxu0 %v633
    %1705 = vmatpush.bf16.msra.mxu0 %v629
    %1706 = vmatmul.bf16.gmra.mxu0 %v1683
    %v1707 = vpop.f32.mrf.mxu0
    %v1708 = vadd.f32 0.0, %v1707
    %v1709 = vpop.f32.mrf.mxu0
    %1710 = vdwg.mxu0
    %1711 = vmatpush.bf16.msra.mxu0 %v658
    %1712 = vmatpush.bf16.msra.mxu0 %v654
    %1713 = vmatpush.bf16.msra.mxu0 %v650
    %1714 = vmatpush.bf16.msra.mxu0 %v646
    %1715 = vmatpush.bf16.msra.mxu0 %v642
    %1716 = vmatpush.bf16.msra.mxu0 %v638
    %1717 = vmatpush.bf16.msra.mxu0 %v634
    %1718 = vmatpush.bf16.msra.mxu0 %v630
    %1719 = vmatmul.bf16.gmra.mxu0 %v1683
    %v1720 = vpop.f32.mrf.mxu0
    %v1721 = vadd.f32 0.0, %v1720
    %v1722 = vpop.f32.mrf.mxu0
    %1723 = vdwg.mxu0
    %1724 = vmatpush.bf16.msra.mxu0 %v659
    %1725 = vmatpush.bf16.msra.mxu0 %v655
    %1726 = vmatpush.bf16.msra.mxu0 %v651
    %1727 = vmatpush.bf16.msra.mxu0 %v647
    %1728 = vmatpush.bf16.msra.mxu0 %v643
    %1729 = vmatpush.bf16.msra.mxu0 %v639
    %1730 = vmatpush.bf16.msra.mxu0 %v635
    %1731 = vmatpush.bf16.msra.mxu0 %v631
    %1732 = vmatmul.bf16.gmra.mxu0 %v1683
    %v1733 = vpop.f32.mrf.mxu0
    %v1734 = vadd.f32 0.0, %v1733
    %v1735 = vpop.f32.mrf.mxu0
    %1736 = vdwg.mxu0
    %v1741 = vrot.slane %v1695, 2
    %v1742 = vrot.slane %v1708, 2
    %v1743 = vrot.slane %v1721, 2
    %v1744 = vrot.slane %v1734, 2
    %v1749 = vadd.f32 %v1677, %v1741
    %v1750 = vadd.f32 %v1678, %v1742
    %v1751 = vadd.f32 %v1679, %v1743
    %v1752 = vadd.f32 %v1680, %v1744
    %v1753 = vld [vmem:[#allocation2 + $0x60] sm:$0x3]
    %v1754 = vld [vmem:[#allocation2 + $0x68] sm:$0x3]
    %v1755 = vld [vmem:[#allocation2 + $0x70] sm:$0x3]
    %v1756 = vld [vmem:[#allocation2 + $0x78] sm:$0x3]
    %v1757 = vpack.c.bf16 %v1674, %v1674
    %v1759 = vrot.slane %v1757, 1
    %1761 = vmatpush.bf16.msra.mxu0 %v876
    %1762 = vmatpush.bf16.msra.mxu0 %v872
    %1763 = vmatpush.bf16.msra.mxu0 %v868
    %1764 = vmatpush.bf16.msra.mxu0 %v864
    %1765 = vmatpush.bf16.msra.mxu0 %v860
    %1766 = vmatpush.bf16.msra.mxu0 %v856
    %1767 = vmatpush.bf16.msra.mxu0 %v852
    %1768 = vmatpush.bf16.msra.mxu0 %v848
    %1769 = vmatmul.bf16.gmra.mxu0 %v1759
    %v1770 = vpop.f32.mrf.mxu0
    %v1771 = vadd.f32 0.0, %v1770
    %v1772 = vpop.f32.mrf.mxu0
    %1773 = vdwg.mxu0
    %1774 = vmatpush.bf16.msra.mxu0 %v877
    %1775 = vmatpush.bf16.msra.mxu0 %v873
    %1776 = vmatpush.bf16.msra.mxu0 %v869
    %1777 = vmatpush.bf16.msra.mxu0 %v865
    %1778 = vmatpush.bf16.msra.mxu0 %v861
    %1779 = vmatpush.bf16.msra.mxu0 %v857
    %1780 = vmatpush.bf16.msra.mxu0 %v853
    %1781 = vmatpush.bf16.msra.mxu0 %v849
    %1782 = vmatmul.bf16.gmra.mxu0 %v1759
    %v1783 = vpop.f32.mrf.mxu0
    %v1784 = vadd.f32 0.0, %v1783
    %v1785 = vpop.f32.mrf.mxu0
    %1786 = vdwg.mxu0
    %1787 = vmatpush.bf16.msra.mxu0 %v878
    %1788 = vmatpush.bf16.msra.mxu0 %v874
    %1789 = vmatpush.bf16.msra.mxu0 %v870
    %1790 = vmatpush.bf16.msra.mxu0 %v866
    %1791 = vmatpush.bf16.msra.mxu0 %v862
    %1792 = vmatpush.bf16.msra.mxu0 %v858
    %1793 = vmatpush.bf16.msra.mxu0 %v854
    %1794 = vmatpush.bf16.msra.mxu0 %v850
    %1795 = vmatmul.bf16.gmra.mxu0 %v1759
    %v1796 = vpop.f32.mrf.mxu0
    %v1797 = vadd.f32 0.0, %v1796
    %v1798 = vpop.f32.mrf.mxu0
    %1799 = vdwg.mxu0
    %1800 = vmatpush.bf16.msra.mxu0 %v879
    %1801 = vmatpush.bf16.msra.mxu0 %v875
    %1802 = vmatpush.bf16.msra.mxu0 %v871
    %1803 = vmatpush.bf16.msra.mxu0 %v867
    %1804 = vmatpush.bf16.msra.mxu0 %v863
    %1805 = vmatpush.bf16.msra.mxu0 %v859
    %1806 = vmatpush.bf16.msra.mxu0 %v855
    %1807 = vmatpush.bf16.msra.mxu0 %v851
    %1808 = vmatmul.bf16.gmra.mxu0 %v1759
    %v1809 = vpop.f32.mrf.mxu0
    %v1810 = vadd.f32 0.0, %v1809
    %v1811 = vpop.f32.mrf.mxu0
    %1812 = vdwg.mxu0
    %v1813 = vadd.f32 %v1753, %v1771
    %v1814 = vadd.f32 %v1754, %v1784
    %v1815 = vadd.f32 %v1755, %v1797
    %v1816 = vadd.f32 %v1756, %v1810
    %v1817 = vxor.u32 %v1749, 2147483648
    %v1818 = vxor.u32 %v1750, 2147483648
    %v1819 = vxor.u32 %v1751, 2147483648
    %v1820 = vmul.f32 %v1817, 1.442695
    %v1821 = vpow.pop %v1820
    %v1822 = vmul.f32 %v1818, 1.442695
    %v1823 = vpow.pop %v1822
    %v1824 = vmul.f32 %v1819, 1.442695
    %v1825 = vpow.pop %v1824
    %v1826 = vadd.f32 %v1821, 1.0
    %v1827 = vadd.f32 %v1823, 1.0
    %v1828 = vadd.f32 %v1825, 1.0
    %v1829 = vrcp.pop %v1826
    %v1830 = vmul.f32 %v1826, %v1829
    %v1831 = vsub.f32 1.0, %v1830
    %v1832 = vmul.f32 %v1829, %v1831
    %v1833 = vadd.f32 %v1829, %v1832
    %vm1834 = vweird.f32 %v1826
    %vm1835 = vweird.f32 %v1829
    %vm1836 = vmor %vm1834, %vm1835
    %v1837 = vsel %vm1836, %v1829, %v1833
    %v1838 = vand.u32 2147483647, %v1826
    %vm1839 = vcmp.eq.f32.partialorder %v1838, 8.507059e+37
    %v1840 = vand.u32 %v1826, 2147483648
    %v1841 = vor.u32 1.1754944e-38, %v1840
    %v1842 = vsel %vm1839, %v1841, %v1837
    %v1843 = vmul.f32 1.0, %v1842
    %v1844 = vrcp.pop %v1827
    %v1845 = vmul.f32 %v1827, %v1844
    %v1846 = vsub.f32 1.0, %v1845
    %v1847 = vmul.f32 %v1844, %v1846
    %v1848 = vadd.f32 %v1844, %v1847
    %vm1849 = vweird.f32 %v1827
    %vm1850 = vweird.f32 %v1844
    %vm1851 = vmor %vm1849, %vm1850
    %v1852 = vsel %vm1851, %v1844, %v1848
    %v1853 = vand.u32 2147483647, %v1827
    %vm1854 = vcmp.eq.f32.partialorder %v1853, 8.507059e+37
    %v1855 = vand.u32 %v1827, 2147483648
    %v1856 = vor.u32 1.1754944e-38, %v1855
    %v1857 = vsel %vm1854, %v1856, %v1852
    %v1858 = vmul.f32 1.0, %v1857
    %v1859 = vrcp.pop %v1828
    %v1860 = vmul.f32 %v1828, %v1859
    %v1861 = vsub.f32 1.0, %v1860
    %v1862 = vmul.f32 %v1859, %v1861
    %v1863 = vadd.f32 %v1859, %v1862
    %vm1864 = vweird.f32 %v1828
    %vm1865 = vweird.f32 %v1859
    %vm1866 = vmor %vm1864, %vm1865
    %v1867 = vsel %vm1866, %v1859, %v1863
    %v1868 = vand.u32 2147483647, %v1828
    %vm1869 = vcmp.eq.f32.partialorder %v1868, 8.507059e+37
    %v1870 = vand.u32 %v1828, 2147483648
    %v1871 = vor.u32 1.1754944e-38, %v1870
    %v1872 = vsel %vm1869, %v1871, %v1867
    %v1873 = vmul.f32 1.0, %v1872
    %v1874 = vtanh.pop %v1752
    %v1876 = vrot.slane %v1606, 6
    %v1878 = vmul.f32 %v1858, %v1876
    %v1879 = vmul.f32 %v1843, %v1874
    %v1880 = vadd.f32 %v1878, %v1879
    %v1881 = vtanh.pop %v1880
    %v1882 = vmul.f32 %v1873, %v1881
    %v1883 = vxor.u32 %v1813, 2147483648
    %v1884 = vxor.u32 %v1814, 2147483648
    %v1885 = vxor.u32 %v1815, 2147483648
    %v1886 = vmul.f32 %v1883, 1.442695
    %v1887 = vpow.pop %v1886
    %v1888 = vmul.f32 %v1884, 1.442695
    %v1889 = vpow.pop %v1888
    %v1890 = vmul.f32 %v1885, 1.442695
    %v1891 = vpow.pop %v1890
    %v1892 = vadd.f32 %v1887, 1.0
    %v1893 = vadd.f32 %v1889, 1.0
    %v1894 = vadd.f32 %v1891, 1.0
    %v1895 = vrcp.pop %v1892
    %v1896 = vmul.f32 %v1892, %v1895
    %v1897 = vsub.f32 1.0, %v1896
    %v1898 = vmul.f32 %v1895, %v1897
    %v1899 = vadd.f32 %v1895, %v1898
    %vm1900 = vweird.f32 %v1892
    %vm1901 = vweird.f32 %v1895
    %vm1902 = vmor %vm1900, %vm1901
    %v1903 = vsel %vm1902, %v1895, %v1899
    %v1904 = vand.u32 2147483647, %v1892
    %vm1905 = vcmp.eq.f32.partialorder %v1904, 8.507059e+37
    %v1906 = vand.u32 %v1892, 2147483648
    %v1907 = vor.u32 1.1754944e-38, %v1906
    %v1908 = vsel %vm1905, %v1907, %v1903
    %v1909 = vmul.f32 1.0, %v1908
    %v1910 = vrcp.pop %v1893
    %v1911 = vmul.f32 %v1893, %v1910
    %v1912 = vsub.f32 1.0, %v1911
    %v1913 = vmul.f32 %v1910, %v1912
    %v1914 = vadd.f32 %v1910, %v1913
    %vm1915 = vweird.f32 %v1893
    %vm1916 = vweird.f32 %v1910
    %vm1917 = vmor %vm1915, %vm1916
    %v1918 = vsel %vm1917, %v1910, %v1914
    %v1919 = vand.u32 2147483647, %v1893
    %vm1920 = vcmp.eq.f32.partialorder %v1919, 8.507059e+37
    %v1921 = vand.u32 %v1893, 2147483648
    %v1922 = vor.u32 1.1754944e-38, %v1921
    %v1923 = vsel %vm1920, %v1922, %v1918
    %v1924 = vmul.f32 1.0, %v1923
    %v1925 = vrcp.pop %v1894
    %v1926 = vmul.f32 %v1894, %v1925
    %v1927 = vsub.f32 1.0, %v1926
    %v1928 = vmul.f32 %v1925, %v1927
    %v1929 = vadd.f32 %v1925, %v1928
    %vm1930 = vweird.f32 %v1894
    %vm1931 = vweird.f32 %v1925
    %vm1932 = vmor %vm1930, %vm1931
    %v1933 = vsel %vm1932, %v1925, %v1929
    %v1934 = vand.u32 2147483647, %v1894
    %vm1935 = vcmp.eq.f32.partialorder %v1934, 8.507059e+37
    %v1936 = vand.u32 %v1894, 2147483648
    %v1937 = vor.u32 1.1754944e-38, %v1936
    %v1938 = vsel %vm1935, %v1937, %v1933
    %v1939 = vmul.f32 1.0, %v1938
    %v1940 = vtanh.pop %v1816
    %v1942 = vrot.slane %v1672, 2
    %v1944 = vmul.f32 %v1924, %v1942
    %v1945 = vmul.f32 %v1909, %v1940
    %v1946 = vadd.f32 %v1944, %v1945
    %v1947 = vtanh.pop %v1946
    %v1948 = vmul.f32 %v1939, %v1947
    %1949 = vst [vmem:[#allocation3] sm:$0xc0] %v1882
    %1950 = vst [vmem:[#allocation4 + $0x8] sm:$0x3] %v1948
    %v1951 = vld [vmem:[#allocation2 + $0x40] sm:$0x3]
    %v1952 = vld [vmem:[#allocation2 + $0x48] sm:$0x3]
    %v1953 = vld [vmem:[#allocation2 + $0x50] sm:$0x3]
    %v1954 = vld [vmem:[#allocation2 + $0x58] sm:$0x3]
    %v1955 = vpack.c.bf16 %v1882, %v1882
    %v1957 = vrot.slane %v1955, 3
    %1959 = vmatpush.bf16.msra.mxu0 %v656
    %1960 = vmatpush.bf16.msra.mxu0 %v652
    %1961 = vmatpush.bf16.msra.mxu0 %v648
    %1962 = vmatpush.bf16.msra.mxu0 %v644
    %1963 = vmatpush.bf16.msra.mxu0 %v640
    %1964 = vmatpush.bf16.msra.mxu0 %v636
    %1965 = vmatpush.bf16.msra.mxu0 %v632
    %1966 = vmatpush.bf16.msra.mxu0 %v628
    %1967 = vmatmul.bf16.gmra.mxu0 %v1957
    %v1968 = vpop.f32.mrf.mxu0
    %v1969 = vadd.f32 0.0, %v1968
    %v1970 = vpop.f32.mrf.mxu0
    %1971 = vdwg.mxu0
    %1972 = vmatpush.bf16.msra.mxu0 %v657
    %1973 = vmatpush.bf16.msra.mxu0 %v653
    %1974 = vmatpush.bf16.msra.mxu0 %v649
    %1975 = vmatpush.bf16.msra.mxu0 %v645
    %1976 = vmatpush.bf16.msra.mxu0 %v641
    %1977 = vmatpush.bf16.msra.mxu0 %v637
    %1978 = vmatpush.bf16.msra.mxu0 %v633
    %1979 = vmatpush.bf16.msra.mxu0 %v629
    %1980 = vmatmul.bf16.gmra.mxu0 %v1957
    %v1981 = vpop.f32.mrf.mxu0
    %v1982 = vadd.f32 0.0, %v1981
    %v1983 = vpop.f32.mrf.mxu0
    %1984 = vdwg.mxu0
    %1985 = vmatpush.bf16.msra.mxu0 %v658
    %1986 = vmatpush.bf16.msra.mxu0 %v654
    %1987 = vmatpush.bf16.msra.mxu0 %v650
    %1988 = vmatpush.bf16.msra.mxu0 %v646
    %1989 = vmatpush.bf16.msra.mxu0 %v642
    %1990 = vmatpush.bf16.msra.mxu0 %v638
    %1991 = vmatpush.bf16.msra.mxu0 %v634
    %1992 = vmatpush.bf16.msra.mxu0 %v630
    %1993 = vmatmul.bf16.gmra.mxu0 %v1957
    %v1994 = vpop.f32.mrf.mxu0
    %v1995 = vadd.f32 0.0, %v1994
    %v1996 = vpop.f32.mrf.mxu0
    %1997 = vdwg.mxu0
    %1998 = vmatpush.bf16.msra.mxu0 %v659
    %1999 = vmatpush.bf16.msra.mxu0 %v655
    %2000 = vmatpush.bf16.msra.mxu0 %v651
    %2001 = vmatpush.bf16.msra.mxu0 %v647
    %2002 = vmatpush.bf16.msra.mxu0 %v643
    %2003 = vmatpush.bf16.msra.mxu0 %v639
    %2004 = vmatpush.bf16.msra.mxu0 %v635
    %2005 = vmatpush.bf16.msra.mxu0 %v631
    %2006 = vmatmul.bf16.gmra.mxu0 %v1957
    %v2007 = vpop.f32.mrf.mxu0
    %v2008 = vadd.f32 0.0, %v2007
    %v2009 = vpop.f32.mrf.mxu0
    %2010 = vdwg.mxu0
    %v2011 = vadd.f32 %v1951, %v1969
    %v2012 = vadd.f32 %v1952, %v1982
    %v2013 = vadd.f32 %v1953, %v1995
    %v2014 = vadd.f32 %v1954, %v2008
    %v2015 = vld [vmem:[#allocation2 + $0x20] sm:$0xc0]
    %v2016 = vld [vmem:[#allocation2 + $0x28] sm:$0xc0]
    %v2017 = vld [vmem:[#allocation2 + $0x30] sm:$0xc0]
    %v2018 = vld [vmem:[#allocation2 + $0x38] sm:$0xc0]
    %v2019 = vpack.c.bf16 %v1948, %v1948
    %2020 = vmatpush.bf16.msra.mxu0 %v876
    %2021 = vmatpush.bf16.msra.mxu0 %v872
    %2022 = vmatpush.bf16.msra.mxu0 %v868
    %2023 = vmatpush.bf16.msra.mxu0 %v864
    %2024 = vmatpush.bf16.msra.mxu0 %v860
    %2025 = vmatpush.bf16.msra.mxu0 %v856
    %2026 = vmatpush.bf16.msra.mxu0 %v852
    %2027 = vmatpush.bf16.msra.mxu0 %v848
    %2028 = vmatmul.bf16.gmra.mxu0 %v2019
    %v2029 = vpop.f32.mrf.mxu0
    %v2030 = vadd.f32 0.0, %v2029
    %v2031 = vpop.f32.mrf.mxu0
    %2032 = vdwg.mxu0
    %2033 = vmatpush.bf16.msra.mxu0 %v877
    %2034 = vmatpush.bf16.msra.mxu0 %v873
    %2035 = vmatpush.bf16.msra.mxu0 %v869
    %2036 = vmatpush.bf16.msra.mxu0 %v865
    %2037 = vmatpush.bf16.msra.mxu0 %v861
    %2038 = vmatpush.bf16.msra.mxu0 %v857
    %2039 = vmatpush.bf16.msra.mxu0 %v853
    %2040 = vmatpush.bf16.msra.mxu0 %v849
    %2041 = vmatmul.bf16.gmra.mxu0 %v2019
    %v2042 = vpop.f32.mrf.mxu0
    %v2043 = vadd.f32 0.0, %v2042
    %v2044 = vpop.f32.mrf.mxu0
    %2045 = vdwg.mxu0
    %2046 = vmatpush.bf16.msra.mxu0 %v878
    %2047 = vmatpush.bf16.msra.mxu0 %v874
    %2048 = vmatpush.bf16.msra.mxu0 %v870
    %2049 = vmatpush.bf16.msra.mxu0 %v866
    %2050 = vmatpush.bf16.msra.mxu0 %v862
    %2051 = vmatpush.bf16.msra.mxu0 %v858
    %2052 = vmatpush.bf16.msra.mxu0 %v854
    %2053 = vmatpush.bf16.msra.mxu0 %v850
    %2054 = vmatmul.bf16.gmra.mxu0 %v2019
    %v2055 = vpop.f32.mrf.mxu0
    %v2056 = vadd.f32 0.0, %v2055
    %v2057 = vpop.f32.mrf.mxu0
    %2058 = vdwg.mxu0
    %2059 = vmatpush.bf16.msra.mxu0 %v879
    %2060 = vmatpush.bf16.msra.mxu0 %v875
    %2061 = vmatpush.bf16.msra.mxu0 %v871
    %2062 = vmatpush.bf16.msra.mxu0 %v867
    %2063 = vmatpush.bf16.msra.mxu0 %v863
    %2064 = vmatpush.bf16.msra.mxu0 %v859
    %2065 = vmatpush.bf16.msra.mxu0 %v855
    %2066 = vmatpush.bf16.msra.mxu0 %v851
    %2067 = vmatmul.bf16.gmra.mxu0 %v2019
    %v2068 = vpop.f32.mrf.mxu0
    %v2069 = vadd.f32 0.0, %v2068
    %v2070 = vpop.f32.mrf.mxu0
    %2071 = vdwg.mxu0
    %v2076 = vrot.slane %v2030, 2
    %v2077 = vrot.slane %v2043, 2
    %v2078 = vrot.slane %v2056, 2
    %v2079 = vrot.slane %v2069, 2
    %v2084 = vadd.f32 %v2015, %v2076
    %v2085 = vadd.f32 %v2016, %v2077
    %v2086 = vadd.f32 %v2017, %v2078
    %v2087 = vadd.f32 %v2018, %v2079
    %v2088 = vxor.u32 %v2011, 2147483648
    %v2089 = vxor.u32 %v2012, 2147483648
    %v2090 = vxor.u32 %v2013, 2147483648
    %v2091 = vmul.f32 %v2088, 1.442695
    %v2092 = vpow.pop %v2091
    %v2093 = vmul.f32 %v2089, 1.442695
    %v2094 = vpow.pop %v2093
    %v2095 = vmul.f32 %v2090, 1.442695
    %v2096 = vpow.pop %v2095
    %v2097 = vadd.f32 %v2092, 1.0
    %v2098 = vadd.f32 %v2094, 1.0
    %v2099 = vadd.f32 %v2096, 1.0
    %v2100 = vrcp.pop %v2097
    %v2101 = vmul.f32 %v2097, %v2100
    %v2102 = vsub.f32 1.0, %v2101
    %v2103 = vmul.f32 %v2100, %v2102
    %v2104 = vadd.f32 %v2100, %v2103
    %vm2105 = vweird.f32 %v2097
    %vm2106 = vweird.f32 %v2100
    %vm2107 = vmor %vm2105, %vm2106
    %v2108 = vsel %vm2107, %v2100, %v2104
    %v2109 = vand.u32 2147483647, %v2097
    %vm2110 = vcmp.eq.f32.partialorder %v2109, 8.507059e+37
    %v2111 = vand.u32 %v2097, 2147483648
    %v2112 = vor.u32 1.1754944e-38, %v2111
    %v2113 = vsel %vm2110, %v2112, %v2108
    %v2114 = vmul.f32 1.0, %v2113
    %v2115 = vrcp.pop %v2098
    %v2116 = vmul.f32 %v2098, %v2115
    %v2117 = vsub.f32 1.0, %v2116
    %v2118 = vmul.f32 %v2115, %v2117
    %v2119 = vadd.f32 %v2115, %v2118
    %vm2120 = vweird.f32 %v2098
    %vm2121 = vweird.f32 %v2115
    %vm2122 = vmor %vm2120, %vm2121
    %v2123 = vsel %vm2122, %v2115, %v2119
    %v2124 = vand.u32 2147483647, %v2098
    %vm2125 = vcmp.eq.f32.partialorder %v2124, 8.507059e+37
    %v2126 = vand.u32 %v2098, 2147483648
    %v2127 = vor.u32 1.1754944e-38, %v2126
    %v2128 = vsel %vm2125, %v2127, %v2123
    %v2129 = vmul.f32 1.0, %v2128
    %v2130 = vrcp.pop %v2099
    %v2131 = vmul.f32 %v2099, %v2130
    %v2132 = vsub.f32 1.0, %v2131
    %v2133 = vmul.f32 %v2130, %v2132
    %v2134 = vadd.f32 %v2130, %v2133
    %vm2135 = vweird.f32 %v2099
    %vm2136 = vweird.f32 %v2130
    %vm2137 = vmor %vm2135, %vm2136
    %v2138 = vsel %vm2137, %v2130, %v2134
    %v2139 = vand.u32 2147483647, %v2099
    %vm2140 = vcmp.eq.f32.partialorder %v2139, 8.507059e+37
    %v2141 = vand.u32 %v2099, 2147483648
    %v2142 = vor.u32 1.1754944e-38, %v2141
    %v2143 = vsel %vm2140, %v2142, %v2138
    %v2144 = vmul.f32 1.0, %v2143
    %v2145 = vtanh.pop %v2014
    %v2147 = vrot.slane %v1880, 6
    %v2149 = vmul.f32 %v2129, %v2147
    %v2150 = vmul.f32 %v2114, %v2145
    %v2151 = vadd.f32 %v2149, %v2150
    %v2152 = vtanh.pop %v2151
    %v2153 = vmul.f32 %v2144, %v2152
    %v2154 = vxor.u32 %v2084, 2147483648
    %v2155 = vxor.u32 %v2085, 2147483648
    %v2156 = vxor.u32 %v2086, 2147483648
    %v2157 = vmul.f32 %v2154, 1.442695
    %v2158 = vpow.pop %v2157
    %v2159 = vmul.f32 %v2155, 1.442695
    %v2160 = vpow.pop %v2159
    %v2161 = vmul.f32 %v2156, 1.442695
    %v2162 = vpow.pop %v2161
    %v2163 = vadd.f32 %v2158, 1.0
    %v2164 = vadd.f32 %v2160, 1.0
    %v2165 = vadd.f32 %v2162, 1.0
    %v2166 = vrcp.pop %v2163
    %v2167 = vmul.f32 %v2163, %v2166
    %v2168 = vsub.f32 1.0, %v2167
    %v2169 = vmul.f32 %v2166, %v2168
    %v2170 = vadd.f32 %v2166, %v2169
    %vm2171 = vweird.f32 %v2163
    %vm2172 = vweird.f32 %v2166
    %vm2173 = vmor %vm2171, %vm2172
    %v2174 = vsel %vm2173, %v2166, %v2170
    %v2175 = vand.u32 2147483647, %v2163
    %vm2176 = vcmp.eq.f32.partialorder %v2175, 8.507059e+37
    %v2177 = vand.u32 %v2163, 2147483648
    %v2178 = vor.u32 1.1754944e-38, %v2177
    %v2179 = vsel %vm2176, %v2178, %v2174
    %v2180 = vmul.f32 1.0, %v2179
    %v2181 = vrcp.pop %v2164
    %v2182 = vmul.f32 %v2164, %v2181
    %v2183 = vsub.f32 1.0, %v2182
    %v2184 = vmul.f32 %v2181, %v2183
    %v2185 = vadd.f32 %v2181, %v2184
    %vm2186 = vweird.f32 %v2164
    %vm2187 = vweird.f32 %v2181
    %vm2188 = vmor %vm2186, %vm2187
    %v2189 = vsel %vm2188, %v2181, %v2185
    %v2190 = vand.u32 2147483647, %v2164
    %vm2191 = vcmp.eq.f32.partialorder %v2190, 8.507059e+37
    %v2192 = vand.u32 %v2164, 2147483648
    %v2193 = vor.u32 1.1754944e-38, %v2192
    %v2194 = vsel %vm2191, %v2193, %v2189
    %v2195 = vmul.f32 1.0, %v2194
    %v2196 = vrcp.pop %v2165
    %v2197 = vmul.f32 %v2165, %v2196
    %v2198 = vsub.f32 1.0, %v2197
    %v2199 = vmul.f32 %v2196, %v2198
    %v2200 = vadd.f32 %v2196, %v2199
    %vm2201 = vweird.f32 %v2165
    %vm2202 = vweird.f32 %v2196
    %vm2203 = vmor %vm2201, %vm2202
    %v2204 = vsel %vm2203, %v2196, %v2200
    %v2205 = vand.u32 2147483647, %v2165
    %vm2206 = vcmp.eq.f32.partialorder %v2205, 8.507059e+37
    %v2207 = vand.u32 %v2165, 2147483648
    %v2208 = vor.u32 1.1754944e-38, %v2207
    %v2209 = vsel %vm2206, %v2208, %v2204
    %v2210 = vmul.f32 1.0, %v2209
    %v2211 = vtanh.pop %v2087
    %v2213 = vrot.slane %v1946, 2
    %v2215 = vmul.f32 %v2195, %v2213
    %v2216 = vmul.f32 %v2180, %v2211
    %v2217 = vadd.f32 %v2215, %v2216
    %v2218 = vtanh.pop %v2217
    %v2219 = vmul.f32 %v2210, %v2218
    %2220 = vst [vmem:[#allocation3 + $0x8] sm:$0x3] %v2153
    %2221 = vst [vmem:[#allocation4] sm:$0xc0] %v2219
    %v2222 = vld [vmem:[#allocation2 + $0x40] sm:$0xc]
    %v2223 = vld [vmem:[#allocation2 + $0x48] sm:$0xc]
    %v2224 = vld [vmem:[#allocation2 + $0x50] sm:$0xc]
    %v2225 = vld [vmem:[#allocation2 + $0x58] sm:$0xc]
    %v2226 = vpack.c.bf16 %v2153, %v2153
    %2227 = vmatpush.bf16.msra.mxu0 %v656
    %2228 = vmatpush.bf16.msra.mxu0 %v652
    %2229 = vmatpush.bf16.msra.mxu0 %v648
    %2230 = vmatpush.bf16.msra.mxu0 %v644
    %2231 = vmatpush.bf16.msra.mxu0 %v640
    %2232 = vmatpush.bf16.msra.mxu0 %v636
    %2233 = vmatpush.bf16.msra.mxu0 %v632
    %2234 = vmatpush.bf16.msra.mxu0 %v628
    %2235 = vmatmul.bf16.gmra.mxu0 %v2226
    %v2236 = vpop.f32.mrf.mxu0
    %v2237 = vadd.f32 0.0, %v2236
    %v2238 = vpop.f32.mrf.mxu0
    %2239 = vdwg.mxu0
    %2240 = vmatpush.bf16.msra.mxu0 %v657
    %2241 = vmatpush.bf16.msra.mxu0 %v653
    %2242 = vmatpush.bf16.msra.mxu0 %v649
    %2243 = vmatpush.bf16.msra.mxu0 %v645
    %2244 = vmatpush.bf16.msra.mxu0 %v641
    %2245 = vmatpush.bf16.msra.mxu0 %v637
    %2246 = vmatpush.bf16.msra.mxu0 %v633
    %2247 = vmatpush.bf16.msra.mxu0 %v629
    %2248 = vmatmul.bf16.gmra.mxu0 %v2226
    %v2249 = vpop.f32.mrf.mxu0
    %v2250 = vadd.f32 0.0, %v2249
    %v2251 = vpop.f32.mrf.mxu0
    %2252 = vdwg.mxu0
    %2253 = vmatpush.bf16.msra.mxu0 %v658
    %2254 = vmatpush.bf16.msra.mxu0 %v654
    %2255 = vmatpush.bf16.msra.mxu0 %v650
    %2256 = vmatpush.bf16.msra.mxu0 %v646
    %2257 = vmatpush.bf16.msra.mxu0 %v642
    %2258 = vmatpush.bf16.msra.mxu0 %v638
    %2259 = vmatpush.bf16.msra.mxu0 %v634
    %2260 = vmatpush.bf16.msra.mxu0 %v630
    %2261 = vmatmul.bf16.gmra.mxu0 %v2226
    %v2262 = vpop.f32.mrf.mxu0
    %v2263 = vadd.f32 0.0, %v2262
    %v2264 = vpop.f32.mrf.mxu0
    %2265 = vdwg.mxu0
    %2266 = vmatpush.bf16.msra.mxu0 %v659
    %2267 = vmatpush.bf16.msra.mxu0 %v655
    %2268 = vmatpush.bf16.msra.mxu0 %v651
    %2269 = vmatpush.bf16.msra.mxu0 %v647
    %2270 = vmatpush.bf16.msra.mxu0 %v643
    %2271 = vmatpush.bf16.msra.mxu0 %v639
    %2272 = vmatpush.bf16.msra.mxu0 %v635
    %2273 = vmatpush.bf16.msra.mxu0 %v631
    %2274 = vmatmul.bf16.gmra.mxu0 %v2226
    %v2275 = vpop.f32.mrf.mxu0
    %v2276 = vadd.f32 0.0, %v2275
    %v2277 = vpop.f32.mrf.mxu0
    %2278 = vdwg.mxu0
    %v2283 = vrot.slane %v2237, 6
    %v2284 = vrot.slane %v2250, 6
    %v2285 = vrot.slane %v2263, 6
    %v2286 = vrot.slane %v2276, 6
    %v2291 = vadd.f32 %v2222, %v2283
    %v2292 = vadd.f32 %v2223, %v2284
    %v2293 = vadd.f32 %v2224, %v2285
    %v2294 = vadd.f32 %v2225, %v2286
    %v2295 = vld [vmem:[#allocation2 + $0x20] sm:$0x30]
    %v2296 = vld [vmem:[#allocation2 + $0x28] sm:$0x30]
    %v2297 = vld [vmem:[#allocation2 + $0x30] sm:$0x30]
    %v2298 = vld [vmem:[#allocation2 + $0x38] sm:$0x30]
    %v2299 = vpack.c.bf16 %v2219, %v2219
    %v2301 = vrot.slane %v2299, 3
    %2303 = vmatpush.bf16.msra.mxu0 %v876
    %2304 = vmatpush.bf16.msra.mxu0 %v872
    %2305 = vmatpush.bf16.msra.mxu0 %v868
    %2306 = vmatpush.bf16.msra.mxu0 %v864
    %2307 = vmatpush.bf16.msra.mxu0 %v860
    %2308 = vmatpush.bf16.msra.mxu0 %v856
    %2309 = vmatpush.bf16.msra.mxu0 %v852
    %2310 = vmatpush.bf16.msra.mxu0 %v848
    %2311 = vmatmul.bf16.gmra.mxu0 %v2301
    %v2312 = vpop.f32.mrf.mxu0
    %v2313 = vadd.f32 0.0, %v2312
    %v2314 = vpop.f32.mrf.mxu0
    %2315 = vdwg.mxu0
    %2316 = vmatpush.bf16.msra.mxu0 %v877
    %2317 = vmatpush.bf16.msra.mxu0 %v873
    %2318 = vmatpush.bf16.msra.mxu0 %v869
    %2319 = vmatpush.bf16.msra.mxu0 %v865
    %2320 = vmatpush.bf16.msra.mxu0 %v861
    %2321 = vmatpush.bf16.msra.mxu0 %v857
    %2322 = vmatpush.bf16.msra.mxu0 %v853
    %2323 = vmatpush.bf16.msra.mxu0 %v849
    %2324 = vmatmul.bf16.gmra.mxu0 %v2301
    %v2325 = vpop.f32.mrf.mxu0
    %v2326 = vadd.f32 0.0, %v2325
    %v2327 = vpop.f32.mrf.mxu0
    %2328 = vdwg.mxu0
    %2329 = vmatpush.bf16.msra.mxu0 %v878
    %2330 = vmatpush.bf16.msra.mxu0 %v874
    %2331 = vmatpush.bf16.msra.mxu0 %v870
    %2332 = vmatpush.bf16.msra.mxu0 %v866
    %2333 = vmatpush.bf16.msra.mxu0 %v862
    %2334 = vmatpush.bf16.msra.mxu0 %v858
    %2335 = vmatpush.bf16.msra.mxu0 %v854
    %2336 = vmatpush.bf16.msra.mxu0 %v850
    %2337 = vmatmul.bf16.gmra.mxu0 %v2301
    %v2338 = vpop.f32.mrf.mxu0
    %v2339 = vadd.f32 0.0, %v2338
    %v2340 = vpop.f32.mrf.mxu0
    %2341 = vdwg.mxu0
    %2342 = vmatpush.bf16.msra.mxu0 %v879
    %2343 = vmatpush.bf16.msra.mxu0 %v875
    %2344 = vmatpush.bf16.msra.mxu0 %v871
    %2345 = vmatpush.bf16.msra.mxu0 %v867
    %2346 = vmatpush.bf16.msra.mxu0 %v863
    %2347 = vmatpush.bf16.msra.mxu0 %v859
    %2348 = vmatpush.bf16.msra.mxu0 %v855
    %2349 = vmatpush.bf16.msra.mxu0 %v851
    %2350 = vmatmul.bf16.gmra.mxu0 %v2301
    %v2351 = vpop.f32.mrf.mxu0
    %v2352 = vadd.f32 0.0, %v2351
    %v2353 = vpop.f32.mrf.mxu0
    %2354 = vdwg.mxu0
    %v2359 = vrot.slane %v2313, 4
    %v2360 = vrot.slane %v2326, 4
    %v2361 = vrot.slane %v2339, 4
    %v2362 = vrot.slane %v2352, 4
    %v2367 = vadd.f32 %v2295, %v2359
    %v2368 = vadd.f32 %v2296, %v2360
    %v2369 = vadd.f32 %v2297, %v2361
    %v2370 = vadd.f32 %v2298, %v2362
    %v2371 = vxor.u32 %v2291, 2147483648
    %v2372 = vxor.u32 %v2292, 2147483648
    %v2373 = vxor.u32 %v2293, 2147483648
    %v2374 = vmul.f32 %v2371, 1.442695
    %v2375 = vpow.pop %v2374
    %v2376 = vmul.f32 %v2372, 1.442695
    %v2377 = vpow.pop %v2376
    %v2378 = vmul.f32 %v2373, 1.442695
    %v2379 = vpow.pop %v2378
    %v2380 = vadd.f32 %v2375, 1.0
    %v2381 = vadd.f32 %v2377, 1.0
    %v2382 = vadd.f32 %v2379, 1.0
    %v2383 = vrcp.pop %v2380
    %v2384 = vmul.f32 %v2380, %v2383
    %v2385 = vsub.f32 1.0, %v2384
    %v2386 = vmul.f32 %v2383, %v2385
    %v2387 = vadd.f32 %v2383, %v2386
    %vm2388 = vweird.f32 %v2380
    %vm2389 = vweird.f32 %v2383
    %vm2390 = vmor %vm2388, %vm2389
    %v2391 = vsel %vm2390, %v2383, %v2387
    %v2392 = vand.u32 2147483647, %v2380
    %vm2393 = vcmp.eq.f32.partialorder %v2392, 8.507059e+37
    %v2394 = vand.u32 %v2380, 2147483648
    %v2395 = vor.u32 1.1754944e-38, %v2394
    %v2396 = vsel %vm2393, %v2395, %v2391
    %v2397 = vmul.f32 1.0, %v2396
    %v2398 = vrcp.pop %v2381
    %v2399 = vmul.f32 %v2381, %v2398
    %v2400 = vsub.f32 1.0, %v2399
    %v2401 = vmul.f32 %v2398, %v2400
    %v2402 = vadd.f32 %v2398, %v2401
    %vm2403 = vweird.f32 %v2381
    %vm2404 = vweird.f32 %v2398
    %vm2405 = vmor %vm2403, %vm2404
    %v2406 = vsel %vm2405, %v2398, %v2402
    %v2407 = vand.u32 2147483647, %v2381
    %vm2408 = vcmp.eq.f32.partialorder %v2407, 8.507059e+37
    %v2409 = vand.u32 %v2381, 2147483648
    %v2410 = vor.u32 1.1754944e-38, %v2409
    %v2411 = vsel %vm2408, %v2410, %v2406
    %v2412 = vmul.f32 1.0, %v2411
    %v2413 = vrcp.pop %v2382
    %v2414 = vmul.f32 %v2382, %v2413
    %v2415 = vsub.f32 1.0, %v2414
    %v2416 = vmul.f32 %v2413, %v2415
    %v2417 = vadd.f32 %v2413, %v2416
    %vm2418 = vweird.f32 %v2382
    %vm2419 = vweird.f32 %v2413
    %vm2420 = vmor %vm2418, %vm2419
    %v2421 = vsel %vm2420, %v2413, %v2417
    %v2422 = vand.u32 2147483647, %v2382
    %vm2423 = vcmp.eq.f32.partialorder %v2422, 8.507059e+37
    %v2424 = vand.u32 %v2382, 2147483648
    %v2425 = vor.u32 1.1754944e-38, %v2424
    %v2426 = vsel %vm2423, %v2425, %v2421
    %v2427 = vmul.f32 1.0, %v2426
    %v2428 = vtanh.pop %v2294
    %v2430 = vrot.slane %v2151, 6
    %v2432 = vmul.f32 %v2412, %v2430
    %v2433 = vmul.f32 %v2397, %v2428
    %v2434 = vadd.f32 %v2432, %v2433
    %v2435 = vtanh.pop %v2434
    %v2436 = vmul.f32 %v2427, %v2435
    %v2437 = vxor.u32 %v2367, 2147483648
    %v2438 = vxor.u32 %v2368, 2147483648
    %v2439 = vxor.u32 %v2369, 2147483648
    %v2440 = vmul.f32 %v2437, 1.442695
    %v2441 = vpow.pop %v2440
    %v2442 = vmul.f32 %v2438, 1.442695
    %v2443 = vpow.pop %v2442
    %v2444 = vmul.f32 %v2439, 1.442695
    %v2445 = vpow.pop %v2444
    %v2446 = vadd.f32 %v2441, 1.0
    %v2447 = vadd.f32 %v2443, 1.0
    %v2448 = vadd.f32 %v2445, 1.0
    %v2449 = vrcp.pop %v2446
    %v2450 = vmul.f32 %v2446, %v2449
    %v2451 = vsub.f32 1.0, %v2450
    %v2452 = vmul.f32 %v2449, %v2451
    %v2453 = vadd.f32 %v2449, %v2452
    %vm2454 = vweird.f32 %v2446
    %vm2455 = vweird.f32 %v2449
    %vm2456 = vmor %vm2454, %vm2455
    %v2457 = vsel %vm2456, %v2449, %v2453
    %v2458 = vand.u32 2147483647, %v2446
    %vm2459 = vcmp.eq.f32.partialorder %v2458, 8.507059e+37
    %v2460 = vand.u32 %v2446, 2147483648
    %v2461 = vor.u32 1.1754944e-38, %v2460
    %v2462 = vsel %vm2459, %v2461, %v2457
    %v2463 = vmul.f32 1.0, %v2462
    %v2464 = vrcp.pop %v2447
    %v2465 = vmul.f32 %v2447, %v2464
    %v2466 = vsub.f32 1.0, %v2465
    %v2467 = vmul.f32 %v2464, %v2466
    %v2468 = vadd.f32 %v2464, %v2467
    %vm2469 = vweird.f32 %v2447
    %vm2470 = vweird.f32 %v2464
    %vm2471 = vmor %vm2469, %vm2470
    %v2472 = vsel %vm2471, %v2464, %v2468
    %v2473 = vand.u32 2147483647, %v2447
    %vm2474 = vcmp.eq.f32.partialorder %v2473, 8.507059e+37
    %v2475 = vand.u32 %v2447, 2147483648
    %v2476 = vor.u32 1.1754944e-38, %v2475
    %v2477 = vsel %vm2474, %v2476, %v2472
    %v2478 = vmul.f32 1.0, %v2477
    %v2479 = vrcp.pop %v2448
    %v2480 = vmul.f32 %v2448, %v2479
    %v2481 = vsub.f32 1.0, %v2480
    %v2482 = vmul.f32 %v2479, %v2481
    %v2483 = vadd.f32 %v2479, %v2482
    %vm2484 = vweird.f32 %v2448
    %vm2485 = vweird.f32 %v2479
    %vm2486 = vmor %vm2484, %vm2485
    %v2487 = vsel %vm2486, %v2479, %v2483
    %v2488 = vand.u32 2147483647, %v2448
    %vm2489 = vcmp.eq.f32.partialorder %v2488, 8.507059e+37
    %v2490 = vand.u32 %v2448, 2147483648
    %v2491 = vor.u32 1.1754944e-38, %v2490
    %v2492 = vsel %vm2489, %v2491, %v2487
    %v2493 = vmul.f32 1.0, %v2492
    %v2494 = vtanh.pop %v2370
    %v2496 = vrot.slane %v2217, 2
    %v2498 = vmul.f32 %v2478, %v2496
    %v2499 = vmul.f32 %v2463, %v2494
    %v2500 = vadd.f32 %v2498, %v2499
    %v2501 = vtanh.pop %v2500
    %v2502 = vmul.f32 %v2493, %v2501
    %2503 = vst [vmem:[#allocation3 + $0x8] sm:$0xc] %v2436
    %2504 = vst [vmem:[#allocation4] sm:$0x30] %v2502
    %v2505 = vld [vmem:[#allocation2 + $0x40] sm:$0x30]
    %v2506 = vld [vmem:[#allocation2 + $0x48] sm:$0x30]
    %v2507 = vld [vmem:[#allocation2 + $0x50] sm:$0x30]
    %v2508 = vld [vmem:[#allocation2 + $0x58] sm:$0x30]
    %v2509 = vpack.c.bf16 %v2436, %v2436
    %v2511 = vrot.slane %v2509, 1
    %2513 = vmatpush.bf16.msra.mxu0 %v656
    %2514 = vmatpush.bf16.msra.mxu0 %v652
    %2515 = vmatpush.bf16.msra.mxu0 %v648
    %2516 = vmatpush.bf16.msra.mxu0 %v644
    %2517 = vmatpush.bf16.msra.mxu0 %v640
    %2518 = vmatpush.bf16.msra.mxu0 %v636
    %2519 = vmatpush.bf16.msra.mxu0 %v632
    %2520 = vmatpush.bf16.msra.mxu0 %v628
    %2521 = vmatmul.bf16.gmra.mxu0 %v2511
    %v2522 = vpop.f32.mrf.mxu0
    %v2523 = vadd.f32 0.0, %v2522
    %v2524 = vpop.f32.mrf.mxu0
    %2525 = vdwg.mxu0
    %2526 = vmatpush.bf16.msra.mxu0 %v657
    %2527 = vmatpush.bf16.msra.mxu0 %v653
    %2528 = vmatpush.bf16.msra.mxu0 %v649
    %2529 = vmatpush.bf16.msra.mxu0 %v645
    %2530 = vmatpush.bf16.msra.mxu0 %v641
    %2531 = vmatpush.bf16.msra.mxu0 %v637
    %2532 = vmatpush.bf16.msra.mxu0 %v633
    %2533 = vmatpush.bf16.msra.mxu0 %v629
    %2534 = vmatmul.bf16.gmra.mxu0 %v2511
    %v2535 = vpop.f32.mrf.mxu0
    %v2536 = vadd.f32 0.0, %v2535
    %v2537 = vpop.f32.mrf.mxu0
    %2538 = vdwg.mxu0
    %2539 = vmatpush.bf16.msra.mxu0 %v658
    %2540 = vmatpush.bf16.msra.mxu0 %v654
    %2541 = vmatpush.bf16.msra.mxu0 %v650
    %2542 = vmatpush.bf16.msra.mxu0 %v646
    %2543 = vmatpush.bf16.msra.mxu0 %v642
    %2544 = vmatpush.bf16.msra.mxu0 %v638
    %2545 = vmatpush.bf16.msra.mxu0 %v634
    %2546 = vmatpush.bf16.msra.mxu0 %v630
    %2547 = vmatmul.bf16.gmra.mxu0 %v2511
    %v2548 = vpop.f32.mrf.mxu0
    %v2549 = vadd.f32 0.0, %v2548
    %v2550 = vpop.f32.mrf.mxu0
    %2551 = vdwg.mxu0
    %2552 = vmatpush.bf16.msra.mxu0 %v659
    %2553 = vmatpush.bf16.msra.mxu0 %v655
    %2554 = vmatpush.bf16.msra.mxu0 %v651
    %2555 = vmatpush.bf16.msra.mxu0 %v647
    %2556 = vmatpush.bf16.msra.mxu0 %v643
    %2557 = vmatpush.bf16.msra.mxu0 %v639
    %2558 = vmatpush.bf16.msra.mxu0 %v635
    %2559 = vmatpush.bf16.msra.mxu0 %v631
    %2560 = vmatmul.bf16.gmra.mxu0 %v2511
    %v2561 = vpop.f32.mrf.mxu0
    %v2562 = vadd.f32 0.0, %v2561
    %v2563 = vpop.f32.mrf.mxu0
    %2564 = vdwg.mxu0
    %v2569 = vrot.slane %v2523, 4
    %v2570 = vrot.slane %v2536, 4
    %v2571 = vrot.slane %v2549, 4
    %v2572 = vrot.slane %v2562, 4
    %v2577 = vadd.f32 %v2505, %v2569
    %v2578 = vadd.f32 %v2506, %v2570
    %v2579 = vadd.f32 %v2507, %v2571
    %v2580 = vadd.f32 %v2508, %v2572
    %v2581 = vld [vmem:[#allocation2 + $0x20] sm:$0xc]
    %v2582 = vld [vmem:[#allocation2 + $0x28] sm:$0xc]
    %v2583 = vld [vmem:[#allocation2 + $0x30] sm:$0xc]
    %v2584 = vld [vmem:[#allocation2 + $0x38] sm:$0xc]
    %v2585 = vpack.c.bf16 %v2502, %v2502
    %v2587 = vrot.slane %v2585, 2
    %2589 = vmatpush.bf16.msra.mxu0 %v876
    %2590 = vmatpush.bf16.msra.mxu0 %v872
    %2591 = vmatpush.bf16.msra.mxu0 %v868
    %2592 = vmatpush.bf16.msra.mxu0 %v864
    %2593 = vmatpush.bf16.msra.mxu0 %v860
    %2594 = vmatpush.bf16.msra.mxu0 %v856
    %2595 = vmatpush.bf16.msra.mxu0 %v852
    %2596 = vmatpush.bf16.msra.mxu0 %v848
    %2597 = vmatmul.bf16.gmra.mxu0 %v2587
    %v2598 = vpop.f32.mrf.mxu0
    %v2599 = vadd.f32 0.0, %v2598
    %v2600 = vpop.f32.mrf.mxu0
    %2601 = vdwg.mxu0
    %2602 = vmatpush.bf16.msra.mxu0 %v877
    %2603 = vmatpush.bf16.msra.mxu0 %v873
    %2604 = vmatpush.bf16.msra.mxu0 %v869
    %2605 = vmatpush.bf16.msra.mxu0 %v865
    %2606 = vmatpush.bf16.msra.mxu0 %v861
    %2607 = vmatpush.bf16.msra.mxu0 %v857
    %2608 = vmatpush.bf16.msra.mxu0 %v853
    %2609 = vmatpush.bf16.msra.mxu0 %v849
    %2610 = vmatmul.bf16.gmra.mxu0 %v2587
    %v2611 = vpop.f32.mrf.mxu0
    %v2612 = vadd.f32 0.0, %v2611
    %v2613 = vpop.f32.mrf.mxu0
    %2614 = vdwg.mxu0
    %2615 = vmatpush.bf16.msra.mxu0 %v878
    %2616 = vmatpush.bf16.msra.mxu0 %v874
    %2617 = vmatpush.bf16.msra.mxu0 %v870
    %2618 = vmatpush.bf16.msra.mxu0 %v866
    %2619 = vmatpush.bf16.msra.mxu0 %v862
    %2620 = vmatpush.bf16.msra.mxu0 %v858
    %2621 = vmatpush.bf16.msra.mxu0 %v854
    %2622 = vmatpush.bf16.msra.mxu0 %v850
    %2623 = vmatmul.bf16.gmra.mxu0 %v2587
    %v2624 = vpop.f32.mrf.mxu0
    %v2625 = vadd.f32 0.0, %v2624
    %v2626 = vpop.f32.mrf.mxu0
    %2627 = vdwg.mxu0
    %2628 = vmatpush.bf16.msra.mxu0 %v879
    %2629 = vmatpush.bf16.msra.mxu0 %v875
    %2630 = vmatpush.bf16.msra.mxu0 %v871
    %2631 = vmatpush.bf16.msra.mxu0 %v867
    %2632 = vmatpush.bf16.msra.mxu0 %v863
    %2633 = vmatpush.bf16.msra.mxu0 %v859
    %2634 = vmatpush.bf16.msra.mxu0 %v855
    %2635 = vmatpush.bf16.msra.mxu0 %v851
    %2636 = vmatmul.bf16.gmra.mxu0 %v2587
    %v2637 = vpop.f32.mrf.mxu0
    %v2638 = vadd.f32 0.0, %v2637
    %v2639 = vpop.f32.mrf.mxu0
    %2640 = vdwg.mxu0
    %v2645 = vrot.slane %v2599, 6
    %v2646 = vrot.slane %v2612, 6
    %v2647 = vrot.slane %v2625, 6
    %v2648 = vrot.slane %v2638, 6
    %v2653 = vadd.f32 %v2581, %v2645
    %v2654 = vadd.f32 %v2582, %v2646
    %v2655 = vadd.f32 %v2583, %v2647
    %v2656 = vadd.f32 %v2584, %v2648
    %v2657 = vxor.u32 %v2577, 2147483648
    %v2658 = vxor.u32 %v2578, 2147483648
    %v2659 = vxor.u32 %v2579, 2147483648
    %v2660 = vmul.f32 %v2657, 1.442695
    %v2661 = vpow.pop %v2660
    %v2662 = vmul.f32 %v2658, 1.442695
    %v2663 = vpow.pop %v2662
    %v2664 = vmul.f32 %v2659, 1.442695
    %v2665 = vpow.pop %v2664
    %v2666 = vadd.f32 %v2661, 1.0
    %v2667 = vadd.f32 %v2663, 1.0
    %v2668 = vadd.f32 %v2665, 1.0
    %v2669 = vrcp.pop %v2666
    %v2670 = vmul.f32 %v2666, %v2669
    %v2671 = vsub.f32 1.0, %v2670
    %v2672 = vmul.f32 %v2669, %v2671
    %v2673 = vadd.f32 %v2669, %v2672
    %vm2674 = vweird.f32 %v2666
    %vm2675 = vweird.f32 %v2669
    %vm2676 = vmor %vm2674, %vm2675
    %v2677 = vsel %vm2676, %v2669, %v2673
    %v2678 = vand.u32 2147483647, %v2666
    %vm2679 = vcmp.eq.f32.partialorder %v2678, 8.507059e+37
    %v2680 = vand.u32 %v2666, 2147483648
    %v2681 = vor.u32 1.1754944e-38, %v2680
    %v2682 = vsel %vm2679, %v2681, %v2677
    %v2683 = vmul.f32 1.0, %v2682
    %v2684 = vrcp.pop %v2667
    %v2685 = vmul.f32 %v2667, %v2684
    %v2686 = vsub.f32 1.0, %v2685
    %v2687 = vmul.f32 %v2684, %v2686
    %v2688 = vadd.f32 %v2684, %v2687
    %vm2689 = vweird.f32 %v2667
    %vm2690 = vweird.f32 %v2684
    %vm2691 = vmor %vm2689, %vm2690
    %v2692 = vsel %vm2691, %v2684, %v2688
    %v2693 = vand.u32 2147483647, %v2667
    %vm2694 = vcmp.eq.f32.partialorder %v2693, 8.507059e+37
    %v2695 = vand.u32 %v2667, 2147483648
    %v2696 = vor.u32 1.1754944e-38, %v2695
    %v2697 = vsel %vm2694, %v2696, %v2692
    %v2698 = vmul.f32 1.0, %v2697
    %v2699 = vrcp.pop %v2668
    %v2700 = vmul.f32 %v2668, %v2699
    %v2701 = vsub.f32 1.0, %v2700
    %v2702 = vmul.f32 %v2699, %v2701
    %v2703 = vadd.f32 %v2699, %v2702
    %vm2704 = vweird.f32 %v2668
    %vm2705 = vweird.f32 %v2699
    %vm2706 = vmor %vm2704, %vm2705
    %v2707 = vsel %vm2706, %v2699, %v2703
    %v2708 = vand.u32 2147483647, %v2668
    %vm2709 = vcmp.eq.f32.partialorder %v2708, 8.507059e+37
    %v2710 = vand.u32 %v2668, 2147483648
    %v2711 = vor.u32 1.1754944e-38, %v2710
    %v2712 = vsel %vm2709, %v2711, %v2707
    %v2713 = vmul.f32 1.0, %v2712
    %v2714 = vtanh.pop %v2580
    %v2716 = vrot.slane %v2434, 6
    %v2718 = vmul.f32 %v2698, %v2716
    %v2719 = vmul.f32 %v2683, %v2714
    %v2720 = vadd.f32 %v2718, %v2719
    %v2721 = vtanh.pop %v2720
    %v2722 = vmul.f32 %v2713, %v2721
    %v2723 = vxor.u32 %v2653, 2147483648
    %v2724 = vxor.u32 %v2654, 2147483648
    %v2725 = vxor.u32 %v2655, 2147483648
    %v2726 = vmul.f32 %v2723, 1.442695
    %v2727 = vpow.pop %v2726
    %v2728 = vmul.f32 %v2724, 1.442695
    %v2729 = vpow.pop %v2728
    %v2730 = vmul.f32 %v2725, 1.442695
    %v2731 = vpow.pop %v2730
    %v2732 = vadd.f32 %v2727, 1.0
    %v2733 = vadd.f32 %v2729, 1.0
    %v2734 = vadd.f32 %v2731, 1.0
    %v2735 = vrcp.pop %v2732
    %v2736 = vmul.f32 %v2732, %v2735
    %v2737 = vsub.f32 1.0, %v2736
    %v2738 = vmul.f32 %v2735, %v2737
    %v2739 = vadd.f32 %v2735, %v2738
    %vm2740 = vweird.f32 %v2732
    %vm2741 = vweird.f32 %v2735
    %vm2742 = vmor %vm2740, %vm2741
    %v2743 = vsel %vm2742, %v2735, %v2739
    %v2744 = vand.u32 2147483647, %v2732
    %vm2745 = vcmp.eq.f32.partialorder %v2744, 8.507059e+37
    %v2746 = vand.u32 %v2732, 2147483648
    %v2747 = vor.u32 1.1754944e-38, %v2746
    %v2748 = vsel %vm2745, %v2747, %v2743
    %v2749 = vmul.f32 1.0, %v2748
    %v2750 = vrcp.pop %v2733
    %v2751 = vmul.f32 %v2733, %v2750
    %v2752 = vsub.f32 1.0, %v2751
    %v2753 = vmul.f32 %v2750, %v2752
    %v2754 = vadd.f32 %v2750, %v2753
    %vm2755 = vweird.f32 %v2733
    %vm2756 = vweird.f32 %v2750
    %vm2757 = vmor %vm2755, %vm2756
    %v2758 = vsel %vm2757, %v2750, %v2754
    %v2759 = vand.u32 2147483647, %v2733
    %vm2760 = vcmp.eq.f32.partialorder %v2759, 8.507059e+37
    %v2761 = vand.u32 %v2733, 2147483648
    %v2762 = vor.u32 1.1754944e-38, %v2761
    %v2763 = vsel %vm2760, %v2762, %v2758
    %v2764 = vmul.f32 1.0, %v2763
    %v2765 = vrcp.pop %v2734
    %v2766 = vmul.f32 %v2734, %v2765
    %v2767 = vsub.f32 1.0, %v2766
    %v2768 = vmul.f32 %v2765, %v2767
    %v2769 = vadd.f32 %v2765, %v2768
    %vm2770 = vweird.f32 %v2734
    %vm2771 = vweird.f32 %v2765
    %vm2772 = vmor %vm2770, %vm2771
    %v2773 = vsel %vm2772, %v2765, %v2769
    %v2774 = vand.u32 2147483647, %v2734
    %vm2775 = vcmp.eq.f32.partialorder %v2774, 8.507059e+37
    %v2776 = vand.u32 %v2734, 2147483648
    %v2777 = vor.u32 1.1754944e-38, %v2776
    %v2778 = vsel %vm2775, %v2777, %v2773
    %v2779 = vmul.f32 1.0, %v2778
    %v2780 = vtanh.pop %v2656
    %v2782 = vrot.slane %v2500, 2
    %v2784 = vmul.f32 %v2764, %v2782
    %v2785 = vmul.f32 %v2749, %v2780
    %v2786 = vadd.f32 %v2784, %v2785
    %v2787 = vtanh.pop %v2786
    %v2788 = vmul.f32 %v2779, %v2787
    %2789 = vst [vmem:[#allocation3 + $0x8] sm:$0x30] %v2722
    %2790 = vst [vmem:[#allocation4] sm:$0xc] %v2788
    %v2791 = vld [vmem:[#allocation2 + $0x40] sm:$0xc0]
    %v2792 = vld [vmem:[#allocation2 + $0x48] sm:$0xc0]
    %v2793 = vld [vmem:[#allocation2 + $0x50] sm:$0xc0]
    %v2794 = vld [vmem:[#allocation2 + $0x58] sm:$0xc0]
    %v2795 = vpack.c.bf16 %v2722, %v2722
    %v2797 = vrot.slane %v2795, 2
    %2799 = vmatpush.bf16.msra.mxu0 %v656
    %2800 = vmatpush.bf16.msra.mxu0 %v652
    %2801 = vmatpush.bf16.msra.mxu0 %v648
    %2802 = vmatpush.bf16.msra.mxu0 %v644
    %2803 = vmatpush.bf16.msra.mxu0 %v640
    %2804 = vmatpush.bf16.msra.mxu0 %v636
    %2805 = vmatpush.bf16.msra.mxu0 %v632
    %2806 = vmatpush.bf16.msra.mxu0 %v628
    %2807 = vmatmul.bf16.gmra.mxu0 %v2797
    %v2808 = vpop.f32.mrf.mxu0
    %v2809 = vadd.f32 0.0, %v2808
    %v2810 = vpop.f32.mrf.mxu0
    %2811 = vdwg.mxu0
    %2812 = vmatpush.bf16.msra.mxu0 %v657
    %2813 = vmatpush.bf16.msra.mxu0 %v653
    %2814 = vmatpush.bf16.msra.mxu0 %v649
    %2815 = vmatpush.bf16.msra.mxu0 %v645
    %2816 = vmatpush.bf16.msra.mxu0 %v641
    %2817 = vmatpush.bf16.msra.mxu0 %v637
    %2818 = vmatpush.bf16.msra.mxu0 %v633
    %2819 = vmatpush.bf16.msra.mxu0 %v629
    %2820 = vmatmul.bf16.gmra.mxu0 %v2797
    %v2821 = vpop.f32.mrf.mxu0
    %v2822 = vadd.f32 0.0, %v2821
    %v2823 = vpop.f32.mrf.mxu0
    %2824 = vdwg.mxu0
    %2825 = vmatpush.bf16.msra.mxu0 %v658
    %2826 = vmatpush.bf16.msra.mxu0 %v654
    %2827 = vmatpush.bf16.msra.mxu0 %v650
    %2828 = vmatpush.bf16.msra.mxu0 %v646
    %2829 = vmatpush.bf16.msra.mxu0 %v642
    %2830 = vmatpush.bf16.msra.mxu0 %v638
    %2831 = vmatpush.bf16.msra.mxu0 %v634
    %2832 = vmatpush.bf16.msra.mxu0 %v630
    %2833 = vmatmul.bf16.gmra.mxu0 %v2797
    %v2834 = vpop.f32.mrf.mxu0
    %v2835 = vadd.f32 0.0, %v2834
    %v2836 = vpop.f32.mrf.mxu0
    %2837 = vdwg.mxu0
    %2838 = vmatpush.bf16.msra.mxu0 %v659
    %2839 = vmatpush.bf16.msra.mxu0 %v655
    %2840 = vmatpush.bf16.msra.mxu0 %v651
    %2841 = vmatpush.bf16.msra.mxu0 %v647
    %2842 = vmatpush.bf16.msra.mxu0 %v643
    %2843 = vmatpush.bf16.msra.mxu0 %v639
    %2844 = vmatpush.bf16.msra.mxu0 %v635
    %2845 = vmatpush.bf16.msra.mxu0 %v631
    %2846 = vmatmul.bf16.gmra.mxu0 %v2797
    %v2847 = vpop.f32.mrf.mxu0
    %v2848 = vadd.f32 0.0, %v2847
    %v2849 = vpop.f32.mrf.mxu0
    %2850 = vdwg.mxu0
    %v2855 = vrot.slane %v2809, 2
    %v2856 = vrot.slane %v2822, 2
    %v2857 = vrot.slane %v2835, 2
    %v2858 = vrot.slane %v2848, 2
    %v2863 = vadd.f32 %v2791, %v2855
    %v2864 = vadd.f32 %v2792, %v2856
    %v2865 = vadd.f32 %v2793, %v2857
    %v2866 = vadd.f32 %v2794, %v2858
    %v2867 = vld [vmem:[#allocation2 + $0x20] sm:$0x3]
    %v2868 = vld [vmem:[#allocation2 + $0x28] sm:$0x3]
    %v2869 = vld [vmem:[#allocation2 + $0x30] sm:$0x3]
    %v2870 = vld [vmem:[#allocation2 + $0x38] sm:$0x3]
    %v2871 = vpack.c.bf16 %v2788, %v2788
    %v2873 = vrot.slane %v2871, 1
    %2875 = vmatpush.bf16.msra.mxu0 %v876
    %2876 = vmatpush.bf16.msra.mxu0 %v872
    %2877 = vmatpush.bf16.msra.mxu0 %v868
    %2878 = vmatpush.bf16.msra.mxu0 %v864
    %2879 = vmatpush.bf16.msra.mxu0 %v860
    %2880 = vmatpush.bf16.msra.mxu0 %v856
    %2881 = vmatpush.bf16.msra.mxu0 %v852
    %2882 = vmatpush.bf16.msra.mxu0 %v848
    %2883 = vmatmul.bf16.gmra.mxu0 %v2873
    %v2884 = vpop.f32.mrf.mxu0
    %v2885 = vadd.f32 0.0, %v2884
    %v2886 = vpop.f32.mrf.mxu0
    %2887 = vdwg.mxu0
    %2888 = vmatpush.bf16.msra.mxu0 %v877
    %2889 = vmatpush.bf16.msra.mxu0 %v873
    %2890 = vmatpush.bf16.msra.mxu0 %v869
    %2891 = vmatpush.bf16.msra.mxu0 %v865
    %2892 = vmatpush.bf16.msra.mxu0 %v861
    %2893 = vmatpush.bf16.msra.mxu0 %v857
    %2894 = vmatpush.bf16.msra.mxu0 %v853
    %2895 = vmatpush.bf16.msra.mxu0 %v849
    %2896 = vmatmul.bf16.gmra.mxu0 %v2873
    %v2897 = vpop.f32.mrf.mxu0
    %v2898 = vadd.f32 0.0, %v2897
    %v2899 = vpop.f32.mrf.mxu0
    %2900 = vdwg.mxu0
    %2901 = vmatpush.bf16.msra.mxu0 %v878
    %2902 = vmatpush.bf16.msra.mxu0 %v874
    %2903 = vmatpush.bf16.msra.mxu0 %v870
    %2904 = vmatpush.bf16.msra.mxu0 %v866
    %2905 = vmatpush.bf16.msra.mxu0 %v862
    %2906 = vmatpush.bf16.msra.mxu0 %v858
    %2907 = vmatpush.bf16.msra.mxu0 %v854
    %2908 = vmatpush.bf16.msra.mxu0 %v850
    %2909 = vmatmul.bf16.gmra.mxu0 %v2873
    %v2910 = vpop.f32.mrf.mxu0
    %v2911 = vadd.f32 0.0, %v2910
    %v2912 = vpop.f32.mrf.mxu0
    %2913 = vdwg.mxu0
    %2914 = vmatpush.bf16.msra.mxu0 %v879
    %2915 = vmatpush.bf16.msra.mxu0 %v875
    %2916 = vmatpush.bf16.msra.mxu0 %v871
    %2917 = vmatpush.bf16.msra.mxu0 %v867
    %2918 = vmatpush.bf16.msra.mxu0 %v863
    %2919 = vmatpush.bf16.msra.mxu0 %v859
    %2920 = vmatpush.bf16.msra.mxu0 %v855
    %2921 = vmatpush.bf16.msra.mxu0 %v851
    %2922 = vmatmul.bf16.gmra.mxu0 %v2873
    %v2923 = vpop.f32.mrf.mxu0
    %v2924 = vadd.f32 0.0, %v2923
    %v2925 = vpop.f32.mrf.mxu0
    %2926 = vdwg.mxu0
    %v2927 = vadd.f32 %v2867, %v2885
    %v2928 = vadd.f32 %v2868, %v2898
    %v2929 = vadd.f32 %v2869, %v2911
    %v2930 = vadd.f32 %v2870, %v2924
    %v2931 = vxor.u32 %v2863, 2147483648
    %v2932 = vxor.u32 %v2864, 2147483648
    %v2933 = vxor.u32 %v2865, 2147483648
    %v2934 = vmul.f32 %v2931, 1.442695
    %v2935 = vpow.pop %v2934
    %v2936 = vmul.f32 %v2932, 1.442695
    %v2937 = vpow.pop %v2936
    %v2938 = vmul.f32 %v2933, 1.442695
    %v2939 = vpow.pop %v2938
    %v2940 = vadd.f32 %v2935, 1.0
    %v2941 = vadd.f32 %v2937, 1.0
    %v2942 = vadd.f32 %v2939, 1.0
    %v2943 = vrcp.pop %v2940
    %v2944 = vmul.f32 %v2940, %v2943
    %v2945 = vsub.f32 1.0, %v2944
    %v2946 = vmul.f32 %v2943, %v2945
    %v2947 = vadd.f32 %v2943, %v2946
    %vm2948 = vweird.f32 %v2940
    %vm2949 = vweird.f32 %v2943
    %vm2950 = vmor %vm2948, %vm2949
    %v2951 = vsel %vm2950, %v2943, %v2947
    %v2952 = vand.u32 2147483647, %v2940
    %vm2953 = vcmp.eq.f32.partialorder %v2952, 8.507059e+37
    %v2954 = vand.u32 %v2940, 2147483648
    %v2955 = vor.u32 1.1754944e-38, %v2954
    %v2956 = vsel %vm2953, %v2955, %v2951
    %v2957 = vmul.f32 1.0, %v2956
    %v2958 = vrcp.pop %v2941
    %v2959 = vmul.f32 %v2941, %v2958
    %v2960 = vsub.f32 1.0, %v2959
    %v2961 = vmul.f32 %v2958, %v2960
    %v2962 = vadd.f32 %v2958, %v2961
    %vm2963 = vweird.f32 %v2941
    %vm2964 = vweird.f32 %v2958
    %vm2965 = vmor %vm2963, %vm2964
    %v2966 = vsel %vm2965, %v2958, %v2962
    %v2967 = vand.u32 2147483647, %v2941
    %vm2968 = vcmp.eq.f32.partialorder %v2967, 8.507059e+37
    %v2969 = vand.u32 %v2941, 2147483648
    %v2970 = vor.u32 1.1754944e-38, %v2969
    %v2971 = vsel %vm2968, %v2970, %v2966
    %v2972 = vmul.f32 1.0, %v2971
    %v2973 = vrcp.pop %v2942
    %v2974 = vmul.f32 %v2942, %v2973
    %v2975 = vsub.f32 1.0, %v2974
    %v2976 = vmul.f32 %v2973, %v2975
    %v2977 = vadd.f32 %v2973, %v2976
    %vm2978 = vweird.f32 %v2942
    %vm2979 = vweird.f32 %v2973
    %vm2980 = vmor %vm2978, %vm2979
    %v2981 = vsel %vm2980, %v2973, %v2977
    %v2982 = vand.u32 2147483647, %v2942
    %vm2983 = vcmp.eq.f32.partialorder %v2982, 8.507059e+37
    %v2984 = vand.u32 %v2942, 2147483648
    %v2985 = vor.u32 1.1754944e-38, %v2984
    %v2986 = vsel %vm2983, %v2985, %v2981
    %v2987 = vmul.f32 1.0, %v2986
    %v2988 = vtanh.pop %v2866
    %v2990 = vrot.slane %v2720, 6
    %v2992 = vmul.f32 %v2972, %v2990
    %v2993 = vmul.f32 %v2957, %v2988
    %v2994 = vadd.f32 %v2992, %v2993
    %v2995 = vtanh.pop %v2994
    %v2996 = vmul.f32 %v2987, %v2995
    %v2997 = vxor.u32 %v2927, 2147483648
    %v2998 = vxor.u32 %v2928, 2147483648
    %v2999 = vxor.u32 %v2929, 2147483648
    %v3000 = vmul.f32 %v2997, 1.442695
    %v3001 = vpow.pop %v3000
    %v3002 = vmul.f32 %v2998, 1.442695
    %v3003 = vpow.pop %v3002
    %v3004 = vmul.f32 %v2999, 1.442695
    %v3005 = vpow.pop %v3004
    %v3006 = vadd.f32 %v3001, 1.0
    %v3007 = vadd.f32 %v3003, 1.0
    %v3008 = vadd.f32 %v3005, 1.0
    %v3009 = vrcp.pop %v3006
    %v3010 = vmul.f32 %v3006, %v3009
    %v3011 = vsub.f32 1.0, %v3010
    %v3012 = vmul.f32 %v3009, %v3011
    %v3013 = vadd.f32 %v3009, %v3012
    %vm3014 = vweird.f32 %v3006
    %vm3015 = vweird.f32 %v3009
    %vm3016 = vmor %vm3014, %vm3015
    %v3017 = vsel %vm3016, %v3009, %v3013
    %v3018 = vand.u32 2147483647, %v3006
    %vm3019 = vcmp.eq.f32.partialorder %v3018, 8.507059e+37
    %v3020 = vand.u32 %v3006, 2147483648
    %v3021 = vor.u32 1.1754944e-38, %v3020
    %v3022 = vsel %vm3019, %v3021, %v3017
    %v3023 = vmul.f32 1.0, %v3022
    %v3024 = vrcp.pop %v3007
    %v3025 = vmul.f32 %v3007, %v3024
    %v3026 = vsub.f32 1.0, %v3025
    %v3027 = vmul.f32 %v3024, %v3026
    %v3028 = vadd.f32 %v3024, %v3027
    %vm3029 = vweird.f32 %v3007
    %vm3030 = vweird.f32 %v3024
    %vm3031 = vmor %vm3029, %vm3030
    %v3032 = vsel %vm3031, %v3024, %v3028
    %v3033 = vand.u32 2147483647, %v3007
    %vm3034 = vcmp.eq.f32.partialorder %v3033, 8.507059e+37
    %v3035 = vand.u32 %v3007, 2147483648
    %v3036 = vor.u32 1.1754944e-38, %v3035
    %v3037 = vsel %vm3034, %v3036, %v3032
    %v3038 = vmul.f32 1.0, %v3037
    %v3039 = vrcp.pop %v3008
    %v3040 = vmul.f32 %v3008, %v3039
    %v3041 = vsub.f32 1.0, %v3040
    %v3042 = vmul.f32 %v3039, %v3041
    %v3043 = vadd.f32 %v3039, %v3042
    %vm3044 = vweird.f32 %v3008
    %vm3045 = vweird.f32 %v3039
    %vm3046 = vmor %vm3044, %vm3045
    %v3047 = vsel %vm3046, %v3039, %v3043
    %v3048 = vand.u32 2147483647, %v3008
    %vm3049 = vcmp.eq.f32.partialorder %v3048, 8.507059e+37
    %v3050 = vand.u32 %v3008, 2147483648
    %v3051 = vor.u32 1.1754944e-38, %v3050
    %v3052 = vsel %vm3049, %v3051, %v3047
    %v3053 = vmul.f32 1.0, %v3052
    %v3054 = vtanh.pop %v2930
    %v3056 = vrot.slane %v2786, 2
    %v3058 = vmul.f32 %v3038, %v3056
    %v3059 = vmul.f32 %v3023, %v3054
    %v3060 = vadd.f32 %v3058, %v3059
    %v3061 = vtanh.pop %v3060
    %v3062 = vmul.f32 %v3053, %v3061
    %3063 = vst [vmem:[#allocation3 + $0x8] sm:$0xc0] %v2996
    %3064 = vst [vmem:[#allocation4] sm:$0x3] %v3062
    %v3065 = vld [vmem:[#allocation3] sm:$0xff]
    %v3066 = vld [vmem:[#allocation3 + $0x8] sm:$0xff]
    %v3067 = vpack.c.bf16 %v3066, %v3065
    %v3068 = vld [vmem:[#allocation10] sm:$0xf]
    %v3069 = vld [vmem:[#allocation10 + $0x4] sm:$0xf]
    %v3070 = vld [vmem:[#allocation10 + $0x8] sm:$0xf]
    %v3071 = vld [vmem:[#allocation10 + $0xc] sm:$0xf]
    %v3072 = vld [vmem:[#allocation10 + $0x10] sm:$0xf]
    %v3073 = vld [vmem:[#allocation10 + $0x14] sm:$0xf]
    %v3074 = vld [vmem:[#allocation10 + $0x18] sm:$0xf]
    %v3075 = vld [vmem:[#allocation10 + $0x1c] sm:$0xf]
    %v3076 = vld [vmem:[#allocation10 + $0x20] sm:$0xf]
    %v3077 = vld [vmem:[#allocation10 + $0x24] sm:$0xf]
    %v3078 = vld [vmem:[#allocation10 + $0x28] sm:$0xf]
    %v3079 = vld [vmem:[#allocation10 + $0x2c] sm:$0xf]
    %v3080 = vld [vmem:[#allocation10 + $0x30] sm:$0xf]
    %v3081 = vld [vmem:[#allocation10 + $0x34] sm:$0xf]
    %v3082 = vld [vmem:[#allocation10 + $0x38] sm:$0xf]
    %v3083 = vld [vmem:[#allocation10 + $0x3c] sm:$0xf]
    %v3084 = vld [vmem:[#allocation4] sm:$0xff]
    %v3085 = vld [vmem:[#allocation4 + $0x8] sm:$0xff]
    %v3086 = vpack.c.bf16 %v3085, %v3084
    %v3087 = vld [vmem:[#allocation12] sm:$0xf]
    %v3088 = vld [vmem:[#allocation12 + $0x4] sm:$0xf]
    %v3089 = vld [vmem:[#allocation12 + $0x8] sm:$0xf]
    %v3090 = vld [vmem:[#allocation12 + $0xc] sm:$0xf]
    %v3091 = vld [vmem:[#allocation12 + $0x10] sm:$0xf]
    %v3092 = vld [vmem:[#allocation12 + $0x14] sm:$0xf]
    %v3093 = vld [vmem:[#allocation12 + $0x18] sm:$0xf]
    %v3094 = vld [vmem:[#allocation12 + $0x1c] sm:$0xf]
    %v3095 = vld [vmem:[#allocation12 + $0x20] sm:$0xf]
    %v3096 = vld [vmem:[#allocation12 + $0x24] sm:$0xf]
    %v3097 = vld [vmem:[#allocation12 + $0x28] sm:$0xf]
    %v3098 = vld [vmem:[#allocation12 + $0x2c] sm:$0xf]
    %v3099 = vld [vmem:[#allocation12 + $0x30] sm:$0xf]
    %v3100 = vld [vmem:[#allocation12 + $0x34] sm:$0xf]
    %v3101 = vld [vmem:[#allocation12 + $0x38] sm:$0xf]
    %v3102 = vld [vmem:[#allocation12 + $0x3c] sm:$0xf]
    %v3119 = vunpack.c.l.b16 %v3087
    %v3120 = vunpack.c.l.b16 %v3088
    %v3121 = vunpack.c.l.b16 %v3089
    %v3122 = vunpack.c.l.b16 %v3090
    %v3123 = vunpack.c.l.b16 %v3091
    %v3124 = vunpack.c.l.b16 %v3092
    %v3125 = vunpack.c.l.b16 %v3093
    %v3126 = vunpack.c.l.b16 %v3094
    %v3127 = vunpack.c.l.b16 %v3095
    %v3128 = vunpack.c.l.b16 %v3096
    %v3129 = vunpack.c.l.b16 %v3097
    %v3130 = vunpack.c.l.b16 %v3098
    %v3131 = vunpack.c.l.b16 %v3099
    %v3132 = vunpack.c.l.b16 %v3100
    %v3133 = vunpack.c.l.b16 %v3101
    %v3134 = vunpack.c.l.b16 %v3102
    %v3135 = vpack.c.b16 %v3120, %v3119
    %v3136 = vpack.c.b16 %v3122, %v3121
    %v3137 = vpack.c.b16 %v3124, %v3123
    %v3138 = vpack.c.b16 %v3126, %v3125
    %v3139 = vpack.c.b16 %v3128, %v3127
    %v3140 = vpack.c.b16 %v3130, %v3129
    %v3141 = vpack.c.b16 %v3132, %v3131
    %v3142 = vpack.c.b16 %v3134, %v3133
    %3151 = vmatpush.bf16.msra.mxu0 %v3142
    %3152 = vmatpush.bf16.msra.mxu0 %v3141
    %3153 = vmatpush.bf16.msra.mxu0 %v3140
    %3154 = vmatpush.bf16.msra.mxu0 %v3139
    %3155 = vmatpush.bf16.msra.mxu0 %v3138
    %3156 = vmatpush.bf16.msra.mxu0 %v3137
    %3157 = vmatpush.bf16.msra.mxu0 %v3136
    %3158 = vmatpush.bf16.msra.mxu0 %v3135
    %3159 = vmatmul.bf16.gmra.mxu0 %v3086
    %v3160 = vpop.f32.mrf.mxu0
    %v3161 = vadd.f32 0.0, %v3160
    %v3162 = vpop.f32.mrf.mxu0
    %v3163 = vadd.f32 0.0, %v3162
    %3164 = vdwg.mxu0
    %v3181 = vunpack.c.l.b16 %v3068
    %v3182 = vunpack.c.l.b16 %v3069
    %v3183 = vunpack.c.l.b16 %v3070
    %v3184 = vunpack.c.l.b16 %v3071
    %v3185 = vunpack.c.l.b16 %v3072
    %v3186 = vunpack.c.l.b16 %v3073
    %v3187 = vunpack.c.l.b16 %v3074
    %v3188 = vunpack.c.l.b16 %v3075
    %v3189 = vunpack.c.l.b16 %v3076
    %v3190 = vunpack.c.l.b16 %v3077
    %v3191 = vunpack.c.l.b16 %v3078
    %v3192 = vunpack.c.l.b16 %v3079
    %v3193 = vunpack.c.l.b16 %v3080
    %v3194 = vunpack.c.l.b16 %v3081
    %v3195 = vunpack.c.l.b16 %v3082
    %v3196 = vunpack.c.l.b16 %v3083
    %v3197 = vpack.c.b16 %v3182, %v3181
    %v3198 = vpack.c.b16 %v3184, %v3183
    %v3199 = vpack.c.b16 %v3186, %v3185
    %v3200 = vpack.c.b16 %v3188, %v3187
    %v3201 = vpack.c.b16 %v3190, %v3189
    %v3202 = vpack.c.b16 %v3192, %v3191
    %v3203 = vpack.c.b16 %v3194, %v3193
    %v3204 = vpack.c.b16 %v3196, %v3195
    %3213 = vmatpush.bf16.msra.mxu0 %v3204
    %3214 = vmatpush.bf16.msra.mxu0 %v3203
    %3215 = vmatpush.bf16.msra.mxu0 %v3202
    %3216 = vmatpush.bf16.msra.mxu0 %v3201
    %3217 = vmatpush.bf16.msra.mxu0 %v3200
    %3218 = vmatpush.bf16.msra.mxu0 %v3199
    %3219 = vmatpush.bf16.msra.mxu0 %v3198
    %3220 = vmatpush.bf16.msra.mxu0 %v3197
    %3221 = vmatmul.bf16.gmra.mxu0 %v3067
    %v3222 = vpop.f32.mrf.mxu0
    %v3223 = vadd.f32 %v3161, %v3222
    %v3224 = vpop.f32.mrf.mxu0
    %v3225 = vadd.f32 %v3163, %v3224
    %3226 = vdwg.mxu0
    %v3227 = vld [vmem:[%s7] sm:$0x1]
    %v3229 = vperm.slane %v3227, 0
    %v3231 = vadd.f32 %v3223, %v3229
    %v3232 = vadd.f32 %v3225, %v3229
    %v3233 = vmax.f32 %v3231, 0.0
    %v3234 = vmax.f32 %v3232, 0.0
    %v3235 = vpack.c.bf16 %v3234, %v3233
    %v3236 = vld [vmem:[%s8] sm:$0xf]
    %v3237 = vld [vmem:[%s8 + $0x4] sm:$0xf]
    %v3238 = vld [vmem:[%s8 + $0x8] sm:$0xf]
    %v3239 = vld [vmem:[%s8 + $0xc] sm:$0xf]
    %v3240 = vld [vmem:[%s9] sm:$0x1]
    %v3242 = vperm.slane %v3240, 0
    %v3248 = vunpack.c.l.b16 %v3236
    %v3249 = vunpack.c.l.b16 %v3237
    %v3250 = vunpack.c.l.b16 %v3238
    %v3251 = vunpack.c.l.b16 %v3239
    %v3252 = vpack.c.b16 %v3249, %v3248
    %v3253 = vpack.c.b16 %v3251, %v3250
    %vm3256 = vcmask 261120
    %v3258 = vsel %vm3256, %v3235, 0
    %3260 = vmatpush.bf16.msra.mxu0 0
    %3261 = vmatpush.bf16.msra.mxu0 0
    %3262 = vmatpush.bf16.msra.mxu0 0
    %3263 = vmatpush.bf16.msra.mxu0 0
    %3264 = vmatpush.bf16.msra.mxu0 0
    %3265 = vmatpush.bf16.msra.mxu0 0
    %3266 = vmatpush.bf16.msra.mxu0 %v3253
    %3267 = vmatpush.bf16.msra.mxu0 %v3252
    %3268 = vmatmul.bf16.gmra.mxu0 %v3258
    %v3269 = vpop.f32.mrf.mxu0
    %v3270 = vadd.f32 %v3242, %v3269
    %v3271 = vpop.f32.mrf.mxu0
    %v3272 = vadd.f32 %v3242, %v3271
    %3273 = vdwg.mxu0
    %v3276 = vrot.slane %v3270, 2
    %v3277 = vrot.slane %v3270, 4
    %v3278 = vrot.slane %v3270, 6
    %v3279 = vrot.slane %v3272, 2
    %v3280 = vrot.slane %v3272, 4
    %v3281 = vrot.slane %v3272, 6
    %vm3288 = vcmask 254976
    %v3289 = vsel %vm3288, %v3270, -inf
    %v3290 = vsel %vm3288, %v3276, -inf
    %v3291 = vsel %vm3288, %v3277, -inf
    %v3292 = vsel %vm3288, %v3278, -inf
    %v3293 = vsel %vm3288, %v3272, -inf
    %v3294 = vmax.f32 %v3289, %v3293
    %v3295 = vsel %vm3288, %v3279, -inf
    %v3296 = vmax.f32 %v3290, %v3295
    %v3297 = vsel %vm3288, %v3280, -inf
    %v3298 = vmax.f32 %v3291, %v3297
    %v3299 = vsel %vm3288, %v3281, -inf
    %v3300 = vmax.f32 %v3292, %v3299
    %v3301 = vmax.f32 %v3294, %v3296
    %v3302 = vmax.f32 %v3298, %v3300
    %v3303 = vmax.f32 %v3301, %v3302
    %v3304 = vsub.f32 %v3270, %v3303
    %v3305 = vsub.f32 %v3276, %v3303
    %v3306 = vsub.f32 %v3277, %v3303
    %v3307 = vsub.f32 %v3278, %v3303
    %v3308 = vsub.f32 %v3272, %v3303
    %v3309 = vsub.f32 %v3279, %v3303
    %v3310 = vsub.f32 %v3280, %v3303
    %v3311 = vsub.f32 %v3281, %v3303
    %v3312 = vmul.f32 %v3304, 1.442695
    %v3313 = vpow.pop %v3312
    %v3314 = vmul.f32 %v3305, 1.442695
    %v3315 = vpow.pop %v3314
    %v3316 = vmul.f32 %v3306, 1.442695
    %v3317 = vpow.pop %v3316
    %v3318 = vmul.f32 %v3307, 1.442695
    %v3319 = vpow.pop %v3318
    %v3320 = vmul.f32 %v3308, 1.442695
    %v3321 = vpow.pop %v3320
    %v3322 = vmul.f32 %v3309, 1.442695
    %v3323 = vpow.pop %v3322
    %v3324 = vmul.f32 %v3310, 1.442695
    %v3325 = vpow.pop %v3324
    %v3326 = vmul.f32 %v3311, 1.442695
    %v3327 = vpow.pop %v3326
    %v3328 = vsel %vm3288, %v3313, 0.0
    %v3329 = vsel %vm3288, %v3315, 0.0
    %v3330 = vadd.f32 %v3328, %v3329
    %v3331 = vsel %vm3288, %v3317, 0.0
    %v3332 = vadd.f32 %v3330, %v3331
    %v3333 = vsel %vm3288, %v3319, 0.0
    %v3334 = vadd.f32 %v3332, %v3333
    %v3335 = vsel %vm3288, %v3321, 0.0
    %v3336 = vadd.f32 %v3334, %v3335
    %v3337 = vsel %vm3288, %v3323, 0.0
    %v3338 = vadd.f32 %v3336, %v3337
    %v3339 = vsel %vm3288, %v3325, 0.0
    %v3340 = vadd.f32 %v3338, %v3339
    %v3341 = vsel %vm3288, %v3327, 0.0
    %v3342 = vadd.f32 %v3340, %v3341
    %v3343 = vrcp.pop %v3342
    %v3344 = vmul.f32 %v3342, %v3343
    %v3345 = vsub.f32 1.0, %v3344
    %v3346 = vmul.f32 %v3343, %v3345
    %v3347 = vadd.f32 %v3343, %v3346
    %vm3348 = vweird.f32 %v3342
    %vm3349 = vweird.f32 %v3343
    %vm3350 = vmor %vm3348, %vm3349
    %v3351 = vsel %vm3350, %v3343, %v3347
    %v3352 = vand.u32 2147483647, %v3342
    %vm3353 = vcmp.eq.f32.partialorder %v3352, 8.507059e+37
    %v3354 = vand.u32 %v3342, 2147483648
    %v3355 = vor.u32 1.1754944e-38, %v3354
    %v3356 = vsel %vm3353, %v3355, %v3351
    %v3357 = vmul.f32 %v3313, %v3356
    %v3358 = vmul.f32 %v3315, %v3356
    %v3359 = vmul.f32 %v3317, %v3356
    %v3360 = vmul.f32 %v3319, %v3356
    %v3361 = vmul.f32 %v3321, %v3356
    %v3362 = vmul.f32 %v3323, %v3356
    %v3363 = vmul.f32 %v3325, %v3356
    %v3364 = vmul.f32 %v3327, %v3356
    %3365 = vst.msk [vmem:[%s10] sm:$0x3] %vm3288, %v3357
    %3366 = vst.msk [vmem:[%s10 + $0x2] sm:$0x3] %vm3288, %v3358
    %3367 = vst.msk [vmem:[%s10 + $0x4] sm:$0x3] %vm3288, %v3359
    %3368 = vst.msk [vmem:[%s10 + $0x6] sm:$0x3] %vm3288, %v3360
    %3369 = vst.msk [vmem:[%s10 + $0x8] sm:$0x3] %vm3288, %v3361
    %3370 = vst.msk [vmem:[%s10 + $0xa] sm:$0x3] %vm3288, %v3362
    %3371 = vst.msk [vmem:[%s10 + $0xc] sm:$0x3] %vm3288, %v3363
    %3372 = vst.msk [vmem:[%s10 + $0xe] sm:$0x3] %vm3288, %v3364
    // Predicated region
    $region62: #{seq_model_forward.1} parent=1 // pred_check
      _
    $region63: #{seq_model_forward.1} parent=1 // pred_check_branch
      %3374 = sbr.rel (0) target = $region65
    $region64: #{seq_model_forward.1} parent=1 // pred_region
      _
    $region65: #{seq_model_forward.1} parent=1 // pred_fallthru
      _
    // Predicated region
    $region66: #{seq_model_forward.1} parent=1 // pred_check
      _
    $region67: #{seq_model_forward.1} parent=1 // pred_check_branch
      %3376 = sbr.rel (0) target = $region69
    $region68: #{seq_model_forward.1} parent=1 // pred_region
      _
    $region69: #{seq_model_forward.1} parent=1 // pred_fallthru
      _
    %3377 = vsyncpa [#allocation6], 1
    %3378 = vsyncpa [#allocation8], 1
    %3379 = vsyncpa [#allocation11], 1

</llo_original>
